<compile_context>
chip_gen: v6e
topology: v6e:2x2x1
jax: 0.10.0
libtpu: 0.0.40
codegen_flags: <defaults>
</compile_context>

<pallas_src>
import jax
import jax.numpy as jnp
from jax.experimental import pallas as pl
from jax.experimental.pallas import tpu as pltpu

# ---- module hyper-parameters (defaults of NeRFModel) ----
D = 8
W = 256
INPUT_CH = 3
INPUT_CH_VIEWS = 3
OUTPUT_CH = 4
SKIPS = (4,)
SKIP_LAYER = SKIPS[0] + 1      # the layer that consumes torch.cat([input_pts, h], -1)
OUT_PAD = 128                  # lane-dense output width (wrapper slices [:, :4])
# TODO(synk): use_view_dirs=True / show_endpoint=True branches (alpha/feature/rgb
#             heads) not emitted here; only the default config is implemented.


def _round_up(n, m):
    return ((n + m - 1) // m) * m


def _nerf_mlp_kernel(pts_ref, w0_ref, w5p_ref, ws_ref, bs_ref,
                     w_out_ref, b_out_ref, out_ref):
    """pts (TB,3) f32; w0/w5p (3,W) f32; ws (7,W,W) bf16; bs (8,W) f32;
    w_out (W,128) bf16; b_out (1,128) f32; out (TB,128) bf16."""
    pts = pts_ref[...]                       # (TB, 3) f32

    # Layer 0 (K=3): three VPU broadcast multiply-adds instead of a <3%-utilized
    # padded MXU pass.  All math in f32 (v5e VPU has no bf16).
    w0 = w0_ref[...]                         # (3, W) f32
    h = (pts[:, 0:1] * w0[0:1, :]
         + pts[:, 1:2] * w0[1:2, :]
         + pts[:, 2:3] * w0[2:3, :]
         + bs_ref[0:1, :])
    h = jnp.maximum(h, 0.0)

    # Layers 1..7: K=256 bf16 MXU matmuls, f32 accumulate / bias / ReLU epilogue.
    for i in range(1, D):
        acc = jnp.dot(h.astype(jnp.bfloat16), ws_ref[i - 1],
                      preferred_element_type=jnp.float32)
        acc = acc + bs_ref[i:i + 1, :]
        if i == SKIP_LAYER:
            # input_pts half of torch.cat([input_pts, h], -1): rows [0:3] of the
            # (259, W) skip-layer weight, computed on the VPU right where it is
            # consumed (keeps the (TB, W) buffer's live range short).
            w5p = w5p_ref[...]               # (3, W) f32
            acc = acc + (pts[:, 0:1] * w5p[0:1, :]
                         + pts[:, 1:2] * w5p[1:2, :]
                         + pts[:, 2:3] * w5p[2:3, :])
        h = jnp.maximum(acc, 0.0)

    # Output head, padded to 128 lanes for a lane-dense (unmasked) bf16 store.
    out = jnp.dot(h.astype(jnp.bfloat16), w_out_ref[...],
                  preferred_element_type=jnp.float32) + b_out_ref[...]
    out_ref[...] = out.astype(out_ref.dtype)


def init_params(key):
    """PyTorch-Linear-style init: U(-1/sqrt(fan_in), 1/sqrt(fan_in)).

    Weights returned as (fan_in, fan_out) f32; biases as (1, fan_out) f32.
    Layer 5 keeps the full (W + input_ch, W) = (259, 256) weight; the wrapper
    splits it rows [0:3] (input_pts) vs [3:259] (h), matching the concat order.
    """
    fan_ins = [INPUT_CH] + [W] * 4 + [W + INPUT_CH] + [W] * 2
    ws, bs = [], []
    for fi in fan_ins:
        key, kw, kb = jax.random.split(key, 3)
        bound = 1.0 / jnp.sqrt(float(fi))
        ws.append(jax.random.uniform(kw, (fi, W), jnp.float32, -bound, bound))
        bs.append(jax.random.uniform(kb, (1, W), jnp.float32, -bound, bound))
    key, kw, kb = jax.random.split(key, 3)
    bound = 1.0 / jnp.sqrt(float(W))
    w_out = jax.random.uniform(kw, (W, OUTPUT_CH), jnp.float32, -bound, bound)
    b_out = jax.random.uniform(kb, (1, OUTPUT_CH), jnp.float32, -bound, bound)
    return tuple(ws), tuple(bs), w_out, b_out


def _prep_params(params):
    """Split / cast / pack / pad the PyTorch-layout params into kernel form."""
    ws, bs, w_out, b_out = params
    w0 = ws[0].astype(jnp.float32)                               # (3, W)   VPU, f32
    w5_pts = ws[SKIP_LAYER][:INPUT_CH, :].astype(jnp.float32)    # (3, W)   VPU, f32
    mxu = [ws[i][INPUT_CH:, :] if i == SKIP_LAYER else ws[i] for i in range(1, D)]
    ws_packed = jnp.stack(mxu, axis=0).astype(jnp.bfloat16)      # (7, W, W) bf16
    bs_packed = jnp.concatenate(bs, axis=0).astype(jnp.float32)  # (8, W)    f32
    w_out_pad = jnp.zeros((W, OUT_PAD), jnp.float32).at[:, :OUTPUT_CH].set(w_out)
    w_out_pad = w_out_pad.astype(jnp.bfloat16)                   # (W, 128)  bf16
    b_out_pad = jnp.zeros((1, OUT_PAD), jnp.float32).at[:, :OUTPUT_CH].set(b_out)
    return w0, w5_pts, ws_packed, bs_packed, w_out_pad, b_out_pad


def _vmem_estimate_bytes(tb):
    """Conservative live-set estimate for one grid step (double-buffered I/O +
    resident weights + f32/bf16 activations)."""
    weights = (2 * 3 * W * 4            # w0 + w5p (f32)
               + (D - 1) * W * W * 2    # packed hidden weights (bf16)
               + D * W * 4              # packed biases (f32)
               + W * OUT_PAD * 2        # padded output weight (bf16)
               + OUT_PAD * 4)           # padded output bias (f32)
    io = tb * INPUT_CH * 4 + tb * OUT_PAD * 2
    act = tb * W * (4 + 4 + 2 + 4)      # h f32, acc f32, bf16 copy, skip f32
    return 2 * (weights + io) + act


def nerf_forward_pallas(x, params, *, tile_b=1024, min_grid_steps=2):
    w0, w5p, ws_packed, bs_packed, w_out_pad, b_out_pad = _prep_params(params)
    B, F_in = x.shape
    assert F_in == INPUT_CH + INPUT_CH_VIEWS

    # View dirs are unused in the use_view_dirs=False branch: only ship positions.
    pts = x[:, :INPUT_CH]

    # Keep >= min_grid_steps grid steps so v7x's two TensorCores both get work;
    # round the tile to 16 rows (bf16 sublane packing of the output block).
    tb = min(tile_b, max(16, _round_up(pl.cdiv(B, min_grid_steps), 16)))
    b_pad = _round_up(B, tb)
    if b_pad != B:
        pts = jnp.pad(pts, ((0, b_pad - B), (0, 0)))
    grid = (b_pad // tb,)

    def _rep2(shape):
        return pl.BlockSpec(shape, lambda i: (0, 0))       # grid-invariant, resident

    in_specs = [
        pl.BlockSpec((tb, INPUT_CH), lambda i: (i, 0)),
        _rep2(w0.shape),
        _rep2(w5p.shape),
        pl.BlockSpec(ws_packed.shape, lambda i: (0, 0, 0)),
        _rep2(bs_packed.shape),
        _rep2(w_out_pad.shape),
        _rep2(b_out_pad.shape),
    ]

    flops = 2 * b_pad * (INPUT_CH * W            # layer 0 (VPU)
                         + (D - 1) * W * W       # layers 1..7 (MXU)
                         + INPUT_CH * W          # skip term (VPU)
                         + W * OUT_PAD)          # padded output head
    bytes_accessed = (b_pad * INPUT_CH * 4
                      + w0.size * 4 + w5p.size * 4
                      + ws_packed.size * 2
                      + bs_packed.size * 4
                      + w_out_pad.size * 2 + b_out_pad.size * 4
                      + b_pad * OUT_PAD * 2)

    vmem_limit = int(min(48 << 20, max(32 << 20, 2 * _vmem_estimate_bytes(tb))))

    out = pl.pallas_call(
        _nerf_mlp_kernel,
        out_shape=jax.ShapeDtypeStruct((b_pad, OUT_PAD), jnp.bfloat16),
        grid=grid,
        in_specs=in_specs,
        out_specs=pl.BlockSpec((tb, OUT_PAD), lambda i: (i, 0)),
        compiler_params=pltpu.CompilerParams(
            dimension_semantics=("parallel",),
            vmem_limit_bytes=vmem_limit),
        cost_estimate=pl.CostEstimate(flops=flops, transcendentals=0,
                                      bytes_accessed=bytes_accessed),
    )(pts, w0, w5p, ws_packed, bs_packed, w_out_pad, b_out_pad)
    return out[:B, :OUTPUT_CH].astype(jnp.float32)


def nerf_forward_ref(x, params):
    """Pure-f32 JAX reference mirroring the PyTorch forward (use_view_dirs=False)."""
    ws, bs, w_out, b_out = params
    input_pts = x[:, :INPUT_CH]
    h = input_pts
    for i in range(D):
        h = jnp.maximum(h @ ws[i] + bs[i], 0.0)
        if i in SKIPS:
            h = jnp.concatenate([input_pts, h], axis=-1)
    return h @ w_out + b_out


def nerf_forward_ref_bf16(x, params):
    """Reference mirroring the kernel's bf16-operand matmuls (f32 accumulate).
    (Final bf16 store of the kernel adds at most ~0.4% relative rounding on top.)"""
    ws, bs, w_out, b_out = params
    pts = x[:, :INPUT_CH]
    h = jnp.maximum(pts @ ws[0] + bs[0], 0.0)
    skip = pts @ ws[SKIP_LAYER][:INPUT_CH, :]
    for i in range(1, D):
        w = ws[i][INPUT_CH:, :] if i == SKIP_LAYER else ws[i]
        acc = jnp.dot(h.astype(jnp.bfloat16), w.astype(jnp.bfloat16),
                      preferred_element_type=jnp.float32) + bs[i]
        if i == SKIP_LAYER:
            acc = acc + skip
        h = jnp.maximum(acc, 0.0)
    return jnp.dot(h.astype(jnp.bfloat16), w_out.astype(jnp.bfloat16),
                   preferred_element_type=jnp.float32) + b_out


if __name__ == "__main__":
    key = jax.random.PRNGKey(0)
    key, kx = jax.random.split(key)

    B = 512  # small batch of rays/samples; tile_b is capped so the grid keeps 2 steps
    x = jax.random.normal(kx, (B, INPUT_CH + INPUT_CH_VIEWS), jnp.float32)
    params = init_params(key)

    out = jax.block_until_ready(nerf_forward_pallas(x, params))
    assert out.shape == (B, OUTPUT_CH), out.shape

    # Tight check vs a reference that mirrors the kernel's bf16-operand math.
    ref_bf16 = nerf_forward_ref_bf16(x, params)
    assert jnp.allclose(out, ref_bf16, atol=1e-2, rtol=1e-2), (
        float(jnp.max(jnp.abs(out - ref_bf16))))

    # Loose semantics check vs the pure-f32 PyTorch-faithful reference.
    ref_f32 = nerf_forward_ref(x, params)
    assert jnp.allclose(out, ref_f32, atol=1e-1, rtol=1e-1), (
        float(jnp.max(jnp.abs(out - ref_f32))))

    print("KERNEL_OK")
</pallas_src>

<mosaic_0001>
module attributes {stable_mosaic.version = 11 : i64} {
  func.func @_nerf_mlp_kernel(%arg0: i32, %arg1: memref<256x3xf32, #tpu.memory_space<vmem>>, %arg2: memref<3x256xf32, #tpu.memory_space<vmem>>, %arg3: memref<3x256xf32, #tpu.memory_space<vmem>>, %arg4: memref<7x256x256xbf16, #tpu.memory_space<vmem>>, %arg5: memref<8x256xf32, #tpu.memory_space<vmem>>, %arg6: memref<256x128xbf16, #tpu.memory_space<vmem>>, %arg7: memref<1x128xf32, #tpu.memory_space<vmem>>, %arg8: memref<256x128xbf16, #tpu.memory_space<vmem>>) attributes {dimension_semantics = [#tpu.dimension_semantics<parallel>], iteration_bounds = array<i64: 2>, scalar_prefetch = 0 : i64, scratch_operands = 0 : i64, tpu.core_type = #tpu.core_type<tc>, window_params = [{transform_indices = @transform_0, window_bounds = array<i64: 256, 3>}, {pipeline_mode = #tpu.pipeline_mode<synchronous>, transform_indices = @transform_1, window_bounds = array<i64: 3, 256>}, {pipeline_mode = #tpu.pipeline_mode<synchronous>, transform_indices = @transform_2, window_bounds = array<i64: 3, 256>}, {pipeline_mode = #tpu.pipeline_mode<synchronous>, transform_indices = @transform_3, window_bounds = array<i64: 7, 256, 256>}, {pipeline_mode = #tpu.pipeline_mode<synchronous>, transform_indices = @transform_4, window_bounds = array<i64: 8, 256>}, {pipeline_mode = #tpu.pipeline_mode<synchronous>, transform_indices = @transform_5, window_bounds = array<i64: 256, 128>}, {pipeline_mode = #tpu.pipeline_mode<synchronous>, transform_indices = @transform_6, window_bounds = array<i64: 1, 128>}, {transform_indices = @transform_7, window_bounds = array<i64: 256, 128>}]} {
    %c0 = arith.constant 0 : index
    %c0_0 = arith.constant 0 : index
    %0 = vector.load %arg1[%c0, %c0_0] : memref<256x3xf32, #tpu.memory_space<vmem>>, vector<256x3xf32>
    %c0_1 = arith.constant 0 : index
    %c0_2 = arith.constant 0 : index
    %1 = vector.load %arg2[%c0_1, %c0_2] : memref<3x256xf32, #tpu.memory_space<vmem>>, vector<3x256xf32>
    %2 = vector.extract_strided_slice %0 {offsets = [0, 0], sizes = [256, 1], strides = [1, 1]} : vector<256x3xf32> to vector<256x1xf32>
    %3 = vector.extract_strided_slice %1 {offsets = [0, 0], sizes = [1, 256], strides = [1, 1]} : vector<3x256xf32> to vector<1x256xf32>
    %4 = vector.broadcast %2 : vector<256x1xf32> to vector<256x256xf32>
    %5 = vector.broadcast %3 : vector<1x256xf32> to vector<256x256xf32>
    %6 = arith.mulf %4, %5 : vector<256x256xf32>
    %7 = vector.extract_strided_slice %0 {offsets = [0, 1], sizes = [256, 1], strides = [1, 1]} : vector<256x3xf32> to vector<256x1xf32>
    %8 = vector.extract_strided_slice %1 {offsets = [1, 0], sizes = [1, 256], strides = [1, 1]} : vector<3x256xf32> to vector<1x256xf32>
    %9 = vector.broadcast %7 : vector<256x1xf32> to vector<256x256xf32>
    %10 = vector.broadcast %8 : vector<1x256xf32> to vector<256x256xf32>
    %11 = arith.mulf %9, %10 : vector<256x256xf32>
    %12 = arith.addf %6, %11 : vector<256x256xf32>
    %13 = vector.extract_strided_slice %0 {offsets = [0, 2], sizes = [256, 1], strides = [1, 1]} : vector<256x3xf32> to vector<256x1xf32>
    %14 = vector.extract_strided_slice %1 {offsets = [2, 0], sizes = [1, 256], strides = [1, 1]} : vector<3x256xf32> to vector<1x256xf32>
    %15 = vector.broadcast %13 : vector<256x1xf32> to vector<256x256xf32>
    %16 = vector.broadcast %14 : vector<1x256xf32> to vector<256x256xf32>
    %17 = arith.mulf %15, %16 : vector<256x256xf32>
    %18 = arith.addf %12, %17 : vector<256x256xf32>
    %c0_3 = arith.constant 0 : index
    %c0_4 = arith.constant 0 : index
    %19 = vector.load %arg5[%c0_3, %c0_4] : memref<8x256xf32, #tpu.memory_space<vmem>>, vector<1x256xf32>
    %20 = vector.broadcast %19 : vector<1x256xf32> to vector<256x256xf32>
    %21 = arith.addf %18, %20 : vector<256x256xf32>
    %cst = arith.constant 0.000000e+00 : f32
    %22 = vector.broadcast %cst : f32 to vector<256x256xf32>
    %23 = arith.maximumf %21, %22 : vector<256x256xf32>
    %24 = arith.truncf %23 : vector<256x256xf32> to vector<256x256xbf16>
    %c0_5 = arith.constant 0 : index
    %c0_6 = arith.constant 0 : index
    %c0_7 = arith.constant 0 : index
    %25 = vector.load %arg4[%c0_5, %c0_6, %c0_7] : memref<7x256x256xbf16, #tpu.memory_space<vmem>>, vector<1x256x256xbf16>
    %26 = vector.shape_cast %25 : vector<1x256x256xbf16> to vector<256x256xbf16>
    %cst_8 = arith.constant dense<0.000000e+00> : vector<256x256xf32>
    %27 = tpu.matmul %24, %26, %cst_8 {dimension_numbers = #tpu.dot_dimension_numbers<[1], [0], [0], [1], [0, 0, 1, 1], [], []>} : vector<256x256xbf16>, vector<256x256xbf16>, vector<256x256xf32> -> vector<256x256xf32>
    %c1 = arith.constant 1 : index
    %c0_9 = arith.constant 0 : index
    %28 = vector.load %arg5[%c1, %c0_9] : memref<8x256xf32, #tpu.memory_space<vmem>>, vector<1x256xf32>
    %29 = vector.broadcast %28 : vector<1x256xf32> to vector<256x256xf32>
    %30 = arith.addf %27, %29 : vector<256x256xf32>
    %cst_10 = arith.constant 0.000000e+00 : f32
    %31 = vector.broadcast %cst_10 : f32 to vector<256x256xf32>
    %32 = arith.maximumf %30, %31 : vector<256x256xf32>
    %33 = arith.truncf %32 : vector<256x256xf32> to vector<256x256xbf16>
    %c1_11 = arith.constant 1 : index
    %c0_12 = arith.constant 0 : index
    %c0_13 = arith.constant 0 : index
    %34 = vector.load %arg4[%c1_11, %c0_12, %c0_13] : memref<7x256x256xbf16, #tpu.memory_space<vmem>>, vector<1x256x256xbf16>
    %35 = vector.shape_cast %34 : vector<1x256x256xbf16> to vector<256x256xbf16>
    %cst_14 = arith.constant dense<0.000000e+00> : vector<256x256xf32>
    %36 = tpu.matmul %33, %35, %cst_14 {dimension_numbers = #tpu.dot_dimension_numbers<[1], [0], [0], [1], [0, 0, 1, 1], [], []>} : vector<256x256xbf16>, vector<256x256xbf16>, vector<256x256xf32> -> vector<256x256xf32>
    %c2 = arith.constant 2 : index
    %c0_15 = arith.constant 0 : index
    %37 = vector.load %arg5[%c2, %c0_15] : memref<8x256xf32, #tpu.memory_space<vmem>>, vector<1x256xf32>
    %38 = vector.broadcast %37 : vector<1x256xf32> to vector<256x256xf32>
    %39 = arith.addf %36, %38 : vector<256x256xf32>
    %cst_16 = arith.constant 0.000000e+00 : f32
    %40 = vector.broadcast %cst_16 : f32 to vector<256x256xf32>
    %41 = arith.maximumf %39, %40 : vector<256x256xf32>
    %42 = arith.truncf %41 : vector<256x256xf32> to vector<256x256xbf16>
    %c2_17 = arith.constant 2 : index
    %c0_18 = arith.constant 0 : index
    %c0_19 = arith.constant 0 : index
    %43 = vector.load %arg4[%c2_17, %c0_18, %c0_19] : memref<7x256x256xbf16, #tpu.memory_space<vmem>>, vector<1x256x256xbf16>
    %44 = vector.shape_cast %43 : vector<1x256x256xbf16> to vector<256x256xbf16>
    %cst_20 = arith.constant dense<0.000000e+00> : vector<256x256xf32>
    %45 = tpu.matmul %42, %44, %cst_20 {dimension_numbers = #tpu.dot_dimension_numbers<[1], [0], [0], [1], [0, 0, 1, 1], [], []>} : vector<256x256xbf16>, vector<256x256xbf16>, vector<256x256xf32> -> vector<256x256xf32>
    %c3 = arith.constant 3 : index
    %c0_21 = arith.constant 0 : index
    %46 = vector.load %arg5[%c3, %c0_21] : memref<8x256xf32, #tpu.memory_space<vmem>>, vector<1x256xf32>
    %47 = vector.broadcast %46 : vector<1x256xf32> to vector<256x256xf32>
    %48 = arith.addf %45, %47 : vector<256x256xf32>
    %cst_22 = arith.constant 0.000000e+00 : f32
    %49 = vector.broadcast %cst_22 : f32 to vector<256x256xf32>
    %50 = arith.maximumf %48, %49 : vector<256x256xf32>
    %51 = arith.truncf %50 : vector<256x256xf32> to vector<256x256xbf16>
    %c3_23 = arith.constant 3 : index
    %c0_24 = arith.constant 0 : index
    %c0_25 = arith.constant 0 : index
    %52 = vector.load %arg4[%c3_23, %c0_24, %c0_25] : memref<7x256x256xbf16, #tpu.memory_space<vmem>>, vector<1x256x256xbf16>
    %53 = vector.shape_cast %52 : vector<1x256x256xbf16> to vector<256x256xbf16>
    %cst_26 = arith.constant dense<0.000000e+00> : vector<256x256xf32>
    %54 = tpu.matmul %51, %53, %cst_26 {dimension_numbers = #tpu.dot_dimension_numbers<[1], [0], [0], [1], [0, 0, 1, 1], [], []>} : vector<256x256xbf16>, vector<256x256xbf16>, vector<256x256xf32> -> vector<256x256xf32>
    %c4 = arith.constant 4 : index
    %c0_27 = arith.constant 0 : index
    %55 = vector.load %arg5[%c4, %c0_27] : memref<8x256xf32, #tpu.memory_space<vmem>>, vector<1x256xf32>
    %56 = vector.broadcast %55 : vector<1x256xf32> to vector<256x256xf32>
    %57 = arith.addf %54, %56 : vector<256x256xf32>
    %cst_28 = arith.constant 0.000000e+00 : f32
    %58 = vector.broadcast %cst_28 : f32 to vector<256x256xf32>
    %59 = arith.maximumf %57, %58 : vector<256x256xf32>
    %60 = arith.truncf %59 : vector<256x256xf32> to vector<256x256xbf16>
    %c4_29 = arith.constant 4 : index
    %c0_30 = arith.constant 0 : index
    %c0_31 = arith.constant 0 : index
    %61 = vector.load %arg4[%c4_29, %c0_30, %c0_31] : memref<7x256x256xbf16, #tpu.memory_space<vmem>>, vector<1x256x256xbf16>
    %62 = vector.shape_cast %61 : vector<1x256x256xbf16> to vector<256x256xbf16>
    %cst_32 = arith.constant dense<0.000000e+00> : vector<256x256xf32>
    %63 = tpu.matmul %60, %62, %cst_32 {dimension_numbers = #tpu.dot_dimension_numbers<[1], [0], [0], [1], [0, 0, 1, 1], [], []>} : vector<256x256xbf16>, vector<256x256xbf16>, vector<256x256xf32> -> vector<256x256xf32>
    %c5 = arith.constant 5 : index
    %c0_33 = arith.constant 0 : index
    %64 = vector.load %arg5[%c5, %c0_33] : memref<8x256xf32, #tpu.memory_space<vmem>>, vector<1x256xf32>
    %65 = vector.broadcast %64 : vector<1x256xf32> to vector<256x256xf32>
    %66 = arith.addf %63, %65 : vector<256x256xf32>
    %c0_34 = arith.constant 0 : index
    %c0_35 = arith.constant 0 : index
    %67 = vector.load %arg3[%c0_34, %c0_35] : memref<3x256xf32, #tpu.memory_space<vmem>>, vector<3x256xf32>
    %68 = vector.extract_strided_slice %0 {offsets = [0, 0], sizes = [256, 1], strides = [1, 1]} : vector<256x3xf32> to vector<256x1xf32>
    %69 = vector.extract_strided_slice %67 {offsets = [0, 0], sizes = [1, 256], strides = [1, 1]} : vector<3x256xf32> to vector<1x256xf32>
    %70 = vector.broadcast %68 : vector<256x1xf32> to vector<256x256xf32>
    %71 = vector.broadcast %69 : vector<1x256xf32> to vector<256x256xf32>
    %72 = arith.mulf %70, %71 : vector<256x256xf32>
    %73 = vector.extract_strided_slice %0 {offsets = [0, 1], sizes = [256, 1], strides = [1, 1]} : vector<256x3xf32> to vector<256x1xf32>
    %74 = vector.extract_strided_slice %67 {offsets = [1, 0], sizes = [1, 256], strides = [1, 1]} : vector<3x256xf32> to vector<1x256xf32>
    %75 = vector.broadcast %73 : vector<256x1xf32> to vector<256x256xf32>
    %76 = vector.broadcast %74 : vector<1x256xf32> to vector<256x256xf32>
    %77 = arith.mulf %75, %76 : vector<256x256xf32>
    %78 = arith.addf %72, %77 : vector<256x256xf32>
    %79 = vector.extract_strided_slice %0 {offsets = [0, 2], sizes = [256, 1], strides = [1, 1]} : vector<256x3xf32> to vector<256x1xf32>
    %80 = vector.extract_strided_slice %67 {offsets = [2, 0], sizes = [1, 256], strides = [1, 1]} : vector<3x256xf32> to vector<1x256xf32>
    %81 = vector.broadcast %79 : vector<256x1xf32> to vector<256x256xf32>
    %82 = vector.broadcast %80 : vector<1x256xf32> to vector<256x256xf32>
    %83 = arith.mulf %81, %82 : vector<256x256xf32>
    %84 = arith.addf %78, %83 : vector<256x256xf32>
    %85 = arith.addf %66, %84 : vector<256x256xf32>
    %cst_36 = arith.constant 0.000000e+00 : f32
    %86 = vector.broadcast %cst_36 : f32 to vector<256x256xf32>
    %87 = arith.maximumf %85, %86 : vector<256x256xf32>
    %88 = arith.truncf %87 : vector<256x256xf32> to vector<256x256xbf16>
    %c5_37 = arith.constant 5 : index
    %c0_38 = arith.constant 0 : index
    %c0_39 = arith.constant 0 : index
    %89 = vector.load %arg4[%c5_37, %c0_38, %c0_39] : memref<7x256x256xbf16, #tpu.memory_space<vmem>>, vector<1x256x256xbf16>
    %90 = vector.shape_cast %89 : vector<1x256x256xbf16> to vector<256x256xbf16>
    %cst_40 = arith.constant dense<0.000000e+00> : vector<256x256xf32>
    %91 = tpu.matmul %88, %90, %cst_40 {dimension_numbers = #tpu.dot_dimension_numbers<[1], [0], [0], [1], [0, 0, 1, 1], [], []>} : vector<256x256xbf16>, vector<256x256xbf16>, vector<256x256xf32> -> vector<256x256xf32>
    %c6 = arith.constant 6 : index
    %c0_41 = arith.constant 0 : index
    %92 = vector.load %arg5[%c6, %c0_41] : memref<8x256xf32, #tpu.memory_space<vmem>>, vector<1x256xf32>
    %93 = vector.broadcast %92 : vector<1x256xf32> to vector<256x256xf32>
    %94 = arith.addf %91, %93 : vector<256x256xf32>
    %cst_42 = arith.constant 0.000000e+00 : f32
    %95 = vector.broadcast %cst_42 : f32 to vector<256x256xf32>
    %96 = arith.maximumf %94, %95 : vector<256x256xf32>
    %97 = arith.truncf %96 : vector<256x256xf32> to vector<256x256xbf16>
    %c6_43 = arith.constant 6 : index
    %c0_44 = arith.constant 0 : index
    %c0_45 = arith.constant 0 : index
    %98 = vector.load %arg4[%c6_43, %c0_44, %c0_45] : memref<7x256x256xbf16, #tpu.memory_space<vmem>>, vector<1x256x256xbf16>
    %99 = vector.shape_cast %98 : vector<1x256x256xbf16> to vector<256x256xbf16>
    %cst_46 = arith.constant dense<0.000000e+00> : vector<256x256xf32>
    %100 = tpu.matmul %97, %99, %cst_46 {dimension_numbers = #tpu.dot_dimension_numbers<[1], [0], [0], [1], [0, 0, 1, 1], [], []>} : vector<256x256xbf16>, vector<256x256xbf16>, vector<256x256xf32> -> vector<256x256xf32>
    %c7 = arith.constant 7 : index
    %c0_47 = arith.constant 0 : index
    %101 = vector.load %arg5[%c7, %c0_47] : memref<8x256xf32, #tpu.memory_space<vmem>>, vector<1x256xf32>
    %102 = vector.broadcast %101 : vector<1x256xf32> to vector<256x256xf32>
    %103 = arith.addf %100, %102 : vector<256x256xf32>
    %cst_48 = arith.constant 0.000000e+00 : f32
    %104 = vector.broadcast %cst_48 : f32 to vector<256x256xf32>
    %105 = arith.maximumf %103, %104 : vector<256x256xf32>
    %106 = arith.truncf %105 : vector<256x256xf32> to vector<256x256xbf16>
    %c0_49 = arith.constant 0 : index
    %c0_50 = arith.constant 0 : index
    %107 = vector.load %arg6[%c0_49, %c0_50] : memref<256x128xbf16, #tpu.memory_space<vmem>>, vector<256x128xbf16>
    %cst_51 = arith.constant dense<0.000000e+00> : vector<256x128xf32>
    %108 = tpu.matmul %106, %107, %cst_51 {dimension_numbers = #tpu.dot_dimension_numbers<[1], [0], [0], [1], [0, 0, 1, 1], [], []>} : vector<256x256xbf16>, vector<256x128xbf16>, vector<256x128xf32> -> vector<256x128xf32>
    %c0_52 = arith.constant 0 : index
    %c0_53 = arith.constant 0 : index
    %109 = vector.load %arg7[%c0_52, %c0_53] : memref<1x128xf32, #tpu.memory_space<vmem>>, vector<1x128xf32>
    %110 = vector.broadcast %109 : vector<1x128xf32> to vector<256x128xf32>
    %111 = arith.addf %108, %110 : vector<256x128xf32>
    %112 = arith.truncf %111 : vector<256x128xf32> to vector<256x128xbf16>
    %c0_54 = arith.constant 0 : index
    %c0_55 = arith.constant 0 : index
    %113 = vector.load %arg8[%c0_54, %c0_55] : memref<256x128xbf16, #tpu.memory_space<vmem>>, vector<256x128xbf16>
    tpu.vector_store %arg8[%c0_54, %c0_55], %112 {strides = array<i32>} : memref<256x128xbf16, #tpu.memory_space<vmem>>, vector<256x128xbf16>,
    return
  }
  func.func @transform_0(%arg0: i32) -> (i32, i32) {
    %c0_i32 = arith.constant 0 : i32
    %c0_i32_0 = arith.constant 0 : i32
    return %arg0, %c0_i32 : i32, i32
  }
  func.func @transform_1(%arg0: i32) -> (i32, i32) {
    %c0_i32 = arith.constant 0 : i32
    %c0_i32_0 = arith.constant 0 : i32
    %c0_i32_1 = arith.constant 0 : i32
    return %c0_i32, %c0_i32_0 : i32, i32
  }
  func.func @transform_2(%arg0: i32) -> (i32, i32) {
    %c0_i32 = arith.constant 0 : i32
    %c0_i32_0 = arith.constant 0 : i32
    %c0_i32_1 = arith.constant 0 : i32
    return %c0_i32, %c0_i32_0 : i32, i32
  }
  func.func @transform_3(%arg0: i32) -> (i32, i32, i32) {
    %c0_i32 = arith.constant 0 : i32
    %c0_i32_0 = arith.constant 0 : i32
    %c0_i32_1 = arith.constant 0 : i32
    %c0_i32_2 = arith.constant 0 : i32
    return %c0_i32, %c0_i32_0, %c0_i32_1 : i32, i32, i32
  }
  func.func @transform_4(%arg0: i32) -> (i32, i32) {
    %c0_i32 = arith.constant 0 : i32
    %c0_i32_0 = arith.constant 0 : i32
    %c0_i32_1 = arith.constant 0 : i32
    return %c0_i32, %c0_i32_0 : i32, i32
  }
  func.func @transform_5(%arg0: i32) -> (i32, i32) {
    %c0_i32 = arith.constant 0 : i32
    %c0_i32_0 = arith.constant 0 : i32
    %c0_i32_1 = arith.constant 0 : i32
    return %c0_i32, %c0_i32_0 : i32, i32
  }
  func.func @transform_6(%arg0: i32) -> (i32, i32) {
    %c0_i32 = arith.constant 0 : i32
    %c0_i32_0 = arith.constant 0 : i32
    %c0_i32_1 = arith.constant 0 : i32
    return %c0_i32, %c0_i32_0 : i32, i32
  }
  func.func @transform_7(%arg0: i32) -> (i32, i32) {
    %c0_i32 = arith.constant 0 : i32
    %c0_i32_0 = arith.constant 0 : i32
    return %arg0, %c0_i32 : i32, i32
  }
}

</mosaic_0001>

<llo_original>
// kernel: tpu_custom_call.1
$region0: #{tpu_custom_call.1}
  #allocation0 [shape = 'u32[]', space=smem, size = 0x4, offset = 0x4, fixed_abs, tag = 'smem constant byte address 0x4 - core index']
  #allocation1 [shape = 'u32[144,128]{1,0:T(1,128)}', space=vmem, size = 0x12000, scoped, tag = 'internal scratch']
  %s0 = inlined_call_operand.vmem [shape: f32[512,3], index: 0, kind: input, shape index: {}]
  %s1 = inlined_call_operand.vmem [shape: f32[3,256], index: 1, kind: input, shape index: {}]
  %s2 = inlined_call_operand.vmem [shape: f32[3,256], index: 2, kind: input, shape index: {}]
  %s3 = inlined_call_operand.hbm [shape: bf16[7,256,256], index: 3, kind: input, shape index: {}]
  %s4 = inlined_call_operand.vmem [shape: f32[8,256], index: 4, kind: input, shape index: {}]
  %s5 = inlined_call_operand.vmem [shape: bf16[256,128], index: 5, kind: input, shape index: {}]
  %s6 = inlined_call_operand.vmem [shape: f32[1,128], index: 6, kind: input, shape index: {}]
  %s7 = inlined_call_operand.hbm [shape: bf16[512,128], index: 7, kind: output, shape index: {}]
  %s8 = sld [smem:[#allocation0]]
  $region65: #{tpu_custom_call.1} parent=0
    _
  %s10 = ssub.s32 1, %s8
  %s11 = scalar_select 0, %s10, %s8
  $region1: #{tpu_custom_call.1} parent=0
    #allocation2 [shape = 'u8[917504]{0}', space=vmem, size = 0xe0000, scoped, tag = 'input window, operand 3, single buffered']
    #allocation3 [shape = 's32[2]{0}', space=sflag, size = 0x8, scoped, tag = 'scoped memory for tpu_custom_call.1']
    #allocation4 [shape = 's32[2]{0}', space=sflag, size = 0x8, scoped, tag = 'scoped memory for tpu_custom_call.1']
    #allocation5 [shape = 'u8[131072]{0}', space=vmem, size = 0x20000, scoped, tag = 'output window, operand 0']
    %12 = vsyncpa [#allocation3], 0
    %13 = vsyncpa [#allocation4], 0
    %s14 = scalar_lea.sflag [#allocation4], 1
    %15 = vsyncpa %s14, 0
    loop: start=0, step=1, limit=4
    $region2: #{tpu_custom_call.1} parent=1 // loop_pre_header
      _
    $region3: #{tpu_custom_call.1} parent=1 // loop_header
      %s17 = sphi 0, %s21
      %p18 = scmp.ge.s32.totalorder %s17, 4
      %s27 = sphi 0, %s29
      %s30 = sphi 0, %s27
      %s31 = sphi 0, %s30
      %s47 = sphi 0, %s31
      %s51 = sphi 0, %s51
      %s53 = sphi 0, %s51
      %s54 = sphi 0, %s53
      %s68 = sphi 0, %s54
      %s72 = sphi 0, %s72
      %s74 = sphi 0, %s72
      %s75 = sphi 0, %s74
      %s89 = sphi 0, %s75
      %s93 = sphi 0, %s93
      %s95 = sphi 0, %s93
      %s96 = sphi 0, %s95
      %s110 = sphi 0, %s96
      %s114 = sphi 0, %s114
      %s116 = sphi 0, %s114
      %s117 = sphi 0, %s116
      %s131 = sphi 0, %s117
      %s135 = sphi 0, %s135
      %s137 = sphi 0, %s135
      %s138 = sphi 0, %s137
      %s152 = sphi 0, %s138
      %s156 = sphi 0, %s156
      %s158 = sphi 0, %s156
      %s159 = sphi 0, %s158
      %s173 = sphi 0, %s159
      %s179 = sphi 0, %s181
      %s182 = sphi 0, %s179
      %s183 = sphi 0, %s182
      %s199 = sphi 0, %s183
    $region4: #{tpu_custom_call.1} parent=1 // loop_header_branch
      %20 = sbr.rel (%p18) target = $region8
    $region5: #{tpu_custom_call.1} parent=1 // loop_body
      %s22 = ssub.s32 %s17, 1
      %s23 = ssub.s32 %s17, 2
      %s24 = sadd.s32 %s17, 1
      %s25 = ssub.s32 %s17, %s24
      %p26 = scmp.eq.s32.totalorder %s25, 0
      %s28 = sadd.s32 %s27, 1
      %s29 = scalar_select %p26, %s27, %s28
      %p32 = pneg %p26
      %p33 = scmp.eq.s32.totalorder %s17, 1
      %p34 = por %p32, %p33
      %p35 = scmp.ne.s32.totalorder %s27, %s30
      %p36 = scmp.eq.s32.totalorder %s17, 0
      %p37 = por %p35, %p36
      %p38 = scmp.ne.s32.totalorder %s27, %s30
      %p39 = scmp.eq.s32.totalorder %s22, 1
      %p40 = por %p38, %p39
      %p41 = scmp.ne.s32.totalorder %s30, %s31
      %p42 = scmp.eq.s32.totalorder %s22, 0
      %p43 = por %p41, %p42
      %p44 = scmp.ne.s32.totalorder %s30, %s31
      %p45 = scmp.eq.s32.totalorder %s23, 1
      %p46 = por %p44, %p45
      %p48 = scmp.ne.s32.totalorder %s31, %s47
      %p49 = scmp.eq.s32.totalorder %s23, 0
      %p50 = por %p48, %p49
      %s52 = sadd.s32 %s51, 1
      %p55 = scmp.eq.s32.totalorder %s17, 1
      %p56 = scmp.ne.s32.totalorder %s51, %s53
      %p57 = scmp.eq.s32.totalorder %s17, 0
      %p58 = por %p56, %p57
      %p59 = scmp.ne.s32.totalorder %s51, %s53
      %p60 = scmp.eq.s32.totalorder %s22, 1
      %p61 = por %p59, %p60
      %p62 = scmp.ne.s32.totalorder %s53, %s54
      %p63 = scmp.eq.s32.totalorder %s22, 0
      %p64 = por %p62, %p63
      %p65 = scmp.ne.s32.totalorder %s53, %s54
      %p66 = scmp.eq.s32.totalorder %s23, 1
      %p67 = por %p65, %p66
      %p69 = scmp.ne.s32.totalorder %s54, %s68
      %p70 = scmp.eq.s32.totalorder %s23, 0
      %p71 = por %p69, %p70
      %s73 = sadd.s32 %s72, 1
      %p76 = scmp.eq.s32.totalorder %s17, 1
      %p77 = scmp.ne.s32.totalorder %s72, %s74
      %p78 = scmp.eq.s32.totalorder %s17, 0
      %p79 = por %p77, %p78
      %p80 = scmp.ne.s32.totalorder %s72, %s74
      %p81 = scmp.eq.s32.totalorder %s22, 1
      %p82 = por %p80, %p81
      %p83 = scmp.ne.s32.totalorder %s74, %s75
      %p84 = scmp.eq.s32.totalorder %s22, 0
      %p85 = por %p83, %p84
      %p86 = scmp.ne.s32.totalorder %s74, %s75
      %p87 = scmp.eq.s32.totalorder %s23, 1
      %p88 = por %p86, %p87
      %p90 = scmp.ne.s32.totalorder %s75, %s89
      %p91 = scmp.eq.s32.totalorder %s23, 0
      %p92 = por %p90, %p91
      %s94 = sadd.s32 %s93, 1
      %p97 = scmp.eq.s32.totalorder %s17, 1
      %p98 = scmp.ne.s32.totalorder %s93, %s95
      %p99 = scmp.eq.s32.totalorder %s17, 0
      %p100 = por %p98, %p99
      %p101 = scmp.ne.s32.totalorder %s93, %s95
      %p102 = scmp.eq.s32.totalorder %s22, 1
      %p103 = por %p101, %p102
      %p104 = scmp.ne.s32.totalorder %s95, %s96
      %p105 = scmp.eq.s32.totalorder %s22, 0
      %p106 = por %p104, %p105
      %p107 = scmp.ne.s32.totalorder %s95, %s96
      %p108 = scmp.eq.s32.totalorder %s23, 1
      %p109 = por %p107, %p108
      %p111 = scmp.ne.s32.totalorder %s96, %s110
      %p112 = scmp.eq.s32.totalorder %s23, 0
      %p113 = por %p111, %p112
      %s115 = sadd.s32 %s114, 1
      %p118 = scmp.eq.s32.totalorder %s17, 1
      %p119 = scmp.ne.s32.totalorder %s114, %s116
      %p120 = scmp.eq.s32.totalorder %s17, 0
      %p121 = por %p119, %p120
      %p122 = scmp.ne.s32.totalorder %s114, %s116
      %p123 = scmp.eq.s32.totalorder %s22, 1
      %p124 = por %p122, %p123
      %p125 = scmp.ne.s32.totalorder %s116, %s117
      %p126 = scmp.eq.s32.totalorder %s22, 0
      %p127 = por %p125, %p126
      %p128 = scmp.ne.s32.totalorder %s116, %s117
      %p129 = scmp.eq.s32.totalorder %s23, 1
      %p130 = por %p128, %p129
      %p132 = scmp.ne.s32.totalorder %s117, %s131
      %p133 = scmp.eq.s32.totalorder %s23, 0
      %p134 = por %p132, %p133
      %s136 = sadd.s32 %s135, 1
      %p139 = scmp.eq.s32.totalorder %s17, 1
      %p140 = scmp.ne.s32.totalorder %s135, %s137
      %p141 = scmp.eq.s32.totalorder %s17, 0
      %p142 = por %p140, %p141
      %p143 = scmp.ne.s32.totalorder %s135, %s137
      %p144 = scmp.eq.s32.totalorder %s22, 1
      %p145 = por %p143, %p144
      %p146 = scmp.ne.s32.totalorder %s137, %s138
      %p147 = scmp.eq.s32.totalorder %s22, 0
      %p148 = por %p146, %p147
      %p149 = scmp.ne.s32.totalorder %s137, %s138
      %p150 = scmp.eq.s32.totalorder %s23, 1
      %p151 = por %p149, %p150
      %p153 = scmp.ne.s32.totalorder %s138, %s152
      %p154 = scmp.eq.s32.totalorder %s23, 0
      %p155 = por %p153, %p154
      %s157 = sadd.s32 %s156, 1
      %p160 = scmp.eq.s32.totalorder %s17, 1
      %p161 = scmp.ne.s32.totalorder %s156, %s158
      %p162 = scmp.eq.s32.totalorder %s17, 0
      %p163 = por %p161, %p162
      %p164 = scmp.ne.s32.totalorder %s156, %s158
      %p165 = scmp.eq.s32.totalorder %s22, 1
      %p166 = por %p164, %p165
      %p167 = scmp.ne.s32.totalorder %s158, %s159
      %p168 = scmp.eq.s32.totalorder %s22, 0
      %p169 = por %p167, %p168
      %p170 = scmp.ne.s32.totalorder %s158, %s159
      %p171 = scmp.eq.s32.totalorder %s23, 1
      %p172 = por %p170, %p171
      %p174 = scmp.ne.s32.totalorder %s159, %s173
      %p175 = scmp.eq.s32.totalorder %s23, 0
      %p176 = por %p174, %p175
      %s177 = ssub.s32 %s17, %s24
      %p178 = scmp.eq.s32.totalorder %s177, 0
      %s180 = sadd.s32 %s179, 1
      %s181 = scalar_select %p178, %s179, %s180
      %p184 = pneg %p178
      %p185 = scmp.eq.s32.totalorder %s17, 1
      %p186 = por %p184, %p185
      %p187 = scmp.ne.s32.totalorder %s179, %s182
      %p188 = scmp.eq.s32.totalorder %s17, 0
      %p189 = por %p187, %p188
      %p190 = scmp.ne.s32.totalorder %s179, %s182
      %p191 = scmp.eq.s32.totalorder %s22, 1
      %p192 = por %p190, %p191
      %p193 = scmp.ne.s32.totalorder %s182, %s183
      %p194 = scmp.eq.s32.totalorder %s22, 0
      %p195 = por %p193, %p194
      %p196 = scmp.ne.s32.totalorder %s182, %s183
      %p197 = scmp.eq.s32.totalorder %s23, 1
      %p198 = por %p196, %p197
      %p200 = scmp.ne.s32.totalorder %s183, %s199
      %p201 = scmp.eq.s32.totalorder %s23, 0
      %p202 = por %p200, %p201
      %p203 = scmp.le.s32.totalorder 1, %s17
      %p204 = scmp.lt.s32.totalorder %s17, 3
      %p205 = pnand %p203, %p204
      %p206 = pneg %p205
      // Predicated region
      $region9: #{tpu_custom_call.1} parent=5 // pred_check
        _
      $region10: #{tpu_custom_call.1} parent=5 // pred_check_branch
        %208 = sbr.rel (%p205) target = $region12
      $region11: #{tpu_custom_call.1} parent=5 // pred_region
        %s209 = ssub.s32 %s17, 1
        // Predicated region
        $region13: #{tpu_custom_call.1} parent=11 // pred_check
          %p210 = pneg %p64
        $region14: #{tpu_custom_call.1} parent=11 // pred_check_branch
          %212 = sbr.rel (%p210) target = $region16
        $region15: #{tpu_custom_call.1} parent=11 // pred_region
          _
        $region16: #{tpu_custom_call.1} parent=11 // pred_fallthru
          _
        // Predicated region
        $region17: #{tpu_custom_call.1} parent=11 // pred_check
          %p213 = pneg %p85
        $region18: #{tpu_custom_call.1} parent=11 // pred_check_branch
          %215 = sbr.rel (%p213) target = $region20
        $region19: #{tpu_custom_call.1} parent=11 // pred_region
          _
        $region20: #{tpu_custom_call.1} parent=11 // pred_fallthru
          _
        // Predicated region
        $region21: #{tpu_custom_call.1} parent=11 // pred_check
          %p216 = pneg %p106
        $region22: #{tpu_custom_call.1} parent=11 // pred_check_branch
          %218 = sbr.rel (%p216) target = $region24
        $region23: #{tpu_custom_call.1} parent=11 // pred_region
          %s220 = ssub.s32 28672, 28672
          %221 = vsyncadd [#allocation3], %s220
          %s222 = sshll.u32 [#allocation2], 4
          %s223 = int_to_ptr.vmem [resolvable:$true] %s222
          %228 = dma.hbm_to_vmem [thread:$0]  %s3, 28672, %s223, [#allocation3], 128, 128, 8
        $region24: #{tpu_custom_call.1} parent=11 // pred_fallthru
          _
        // Predicated region
        $region25: #{tpu_custom_call.1} parent=11 // pred_check
          %p229 = pneg %p127
        $region26: #{tpu_custom_call.1} parent=11 // pred_check_branch
          %231 = sbr.rel (%p229) target = $region28
        $region27: #{tpu_custom_call.1} parent=11 // pred_region
          _
        $region28: #{tpu_custom_call.1} parent=11 // pred_fallthru
          _
        // Predicated region
        $region29: #{tpu_custom_call.1} parent=11 // pred_check
          %p232 = pneg %p148
        $region30: #{tpu_custom_call.1} parent=11 // pred_check_branch
          %234 = sbr.rel (%p232) target = $region32
        $region31: #{tpu_custom_call.1} parent=11 // pred_region
          _
        $region32: #{tpu_custom_call.1} parent=11 // pred_fallthru
          _
        // Predicated region
        $region33: #{tpu_custom_call.1} parent=11 // pred_check
          %p235 = pneg %p169
        $region34: #{tpu_custom_call.1} parent=11 // pred_check_branch
          %237 = sbr.rel (%p235) target = $region36
        $region35: #{tpu_custom_call.1} parent=11 // pred_region
          _
        $region36: #{tpu_custom_call.1} parent=11 // pred_fallthru
          _
      $region12: #{tpu_custom_call.1} parent=5 // pred_fallthru
        _
      %p238 = scmp.lt.s32.totalorder %s17, 2
      // Predicated region
      $region37: #{tpu_custom_call.1} parent=5 // pred_check
        %p239 = pneg %p238
      $region38: #{tpu_custom_call.1} parent=5 // pred_check_branch
        %241 = sbr.rel (%p239) target = $region40
      $region39: #{tpu_custom_call.1} parent=5 // pred_region
        // Predicated region
        $region41: #{tpu_custom_call.1} parent=39 // pred_check
          %p242 = pneg %p37
        $region42: #{tpu_custom_call.1} parent=39 // pred_check_branch
          %244 = sbr.rel (%p242) target = $region44
        $region43: #{tpu_custom_call.1} parent=39 // pred_region
          %s245 = smul.u32 32, %s17
          %p246 = scmp.lt.s32.totalorder %s245, 63
          %s247 = scalar_select %p246, %s245, 63
          %s248 = smul.addr %s247, 8
          %s249 = scalar_lea.vmem %s0, %s248
          %s250 = smul.u32 32, %s17
        $region44: #{tpu_custom_call.1} parent=39 // pred_fallthru
          _
      $region40: #{tpu_custom_call.1} parent=5 // pred_fallthru
        _
      %p251 = scmp.le.s32.totalorder 1, %s17
      %p252 = scmp.lt.s32.totalorder %s17, 3
      %p253 = pnand %p251, %p252
      %p254 = pneg %p253
      // Predicated region
      $region45: #{tpu_custom_call.1} parent=5 // pred_check
        _
      $region46: #{tpu_custom_call.1} parent=5 // pred_check_branch
        %256 = sbr.rel (%p253) target = $region48
      $region47: #{tpu_custom_call.1} parent=5 // pred_region
        %s257 = ssub.s32 %s17, 1
        // Predicated region
        $region49: #{tpu_custom_call.1} parent=47 // pred_check
          %p258 = pneg %p106
        $region50: #{tpu_custom_call.1} parent=47 // pred_check_branch
          %260 = sbr.rel (%p258) target = $region52
        $region51: #{tpu_custom_call.1} parent=47 // pred_region
          %261 = dma.done [#allocation3], 28672
        $region52: #{tpu_custom_call.1} parent=47 // pred_fallthru
          _
        %s262 = smul.u32 32, %s22
        %p263 = scmp.lt.s32.totalorder %s262, 63
        %s264 = scalar_select %p263, %s262, 63
        %s265 = smul.addr %s264, 8
        %s266 = scalar_lea.vmem %s0, %s265
        %p267 = pneg %p43
        %p268 = pneg %p40
        %p269 = pneg %p64
        %p270 = pneg %p61
        %p271 = pneg %p85
        %p272 = pneg %p82
        %p273 = pneg %p106
        %p274 = pneg %p103
        %p275 = pneg %p127
        %p276 = pneg %p124
        %p277 = pneg %p148
        %p278 = pneg %p145
        %p279 = pneg %p169
        %p280 = pneg %p166
        %p281 = pneg %p195
        %p282 = pneg %p192
        %s283 = sand.u32 %s182, 1
        %s284 = scalar_lea.sflag [#allocation4], %s283
        %s285 = sand.u32 %s182, 1
        %s286 = smul.addr %s285, 128
        %s287 = scalar_lea.vmem [#allocation5], %s286
        %s288 = smul.u32 32, %s22
        %p289 = scmp.lt.s32.totalorder %s288, 63
        %s290 = scalar_select %p289, %s288, 63
        %s291 = smul.addr %s290, 8
        %s292 = scalar_lea.vmem %s0, %s291
        %s293 = smul.u32 32, %s22
        %s294 = smul.u32 32, %s22
        %v296 = vld [vmem:[%s292] sm:$0xff]
        %v297 = vld [vmem:[%s292 + $0x8] sm:$0xff]
        %v298 = vld [vmem:[%s292 + $0x10] sm:$0xff]
        %v299 = vld [vmem:[%s292 + $0x18] sm:$0xff]
        %v300 = vld [vmem:[%s292 + $0x20] sm:$0xff]
        %v301 = vld [vmem:[%s292 + $0x28] sm:$0xff]
        %v302 = vld [vmem:[%s292 + $0x30] sm:$0xff]
        %v303 = vld [vmem:[%s292 + $0x38] sm:$0xff]
        %v304 = vld [vmem:[%s292 + $0x40] sm:$0xff]
        %v305 = vld [vmem:[%s292 + $0x48] sm:$0xff]
        %v306 = vld [vmem:[%s292 + $0x50] sm:$0xff]
        %v307 = vld [vmem:[%s292 + $0x58] sm:$0xff]
        %v308 = vld [vmem:[%s292 + $0x60] sm:$0xff]
        %v309 = vld [vmem:[%s292 + $0x68] sm:$0xff]
        %v310 = vld [vmem:[%s292 + $0x70] sm:$0xff]
        %v311 = vld [vmem:[%s292 + $0x78] sm:$0xff]
        %v312 = vld [vmem:[%s292 + $0x80] sm:$0xff]
        %v313 = vld [vmem:[%s292 + $0x88] sm:$0xff]
        %v314 = vld [vmem:[%s292 + $0x90] sm:$0xff]
        %v315 = vld [vmem:[%s292 + $0x98] sm:$0xff]
        %v316 = vld [vmem:[%s292 + $0xa0] sm:$0xff]
        %v317 = vld [vmem:[%s292 + $0xa8] sm:$0xff]
        %v318 = vld [vmem:[%s292 + $0xb0] sm:$0xff]
        %v319 = vld [vmem:[%s292 + $0xb8] sm:$0xff]
        %v320 = vld [vmem:[%s292 + $0xc0] sm:$0xff]
        %v321 = vld [vmem:[%s292 + $0xc8] sm:$0xff]
        %v322 = vld [vmem:[%s292 + $0xd0] sm:$0xff]
        %v323 = vld [vmem:[%s292 + $0xd8] sm:$0xff]
        %v324 = vld [vmem:[%s292 + $0xe0] sm:$0xff]
        %v325 = vld [vmem:[%s292 + $0xe8] sm:$0xff]
        %v326 = vld [vmem:[%s292 + $0xf0] sm:$0xff]
        %v327 = vld [vmem:[%s292 + $0xf8] sm:$0xff]
        %v328 = vld [vmem:[%s1] sm:$0x77]
        %330 = vset.pattern.permute.xlu0 0
        %331 = vperm.xlu0 %330, %v296
        %v332 = vpop.permute.xlu0 %331
        %335 = vset.pattern.permute.xlu0 0
        %336 = vperm.xlu0 %335, %v297
        %v337 = vpop.permute.xlu0 %336
        %340 = vset.pattern.permute.xlu0 0
        %341 = vperm.xlu0 %340, %v298
        %v342 = vpop.permute.xlu0 %341
        %345 = vset.pattern.permute.xlu0 0
        %346 = vperm.xlu0 %345, %v299
        %v347 = vpop.permute.xlu0 %346
        %350 = vset.pattern.permute.xlu0 0
        %351 = vperm.xlu0 %350, %v300
        %v352 = vpop.permute.xlu0 %351
        %355 = vset.pattern.permute.xlu0 0
        %356 = vperm.xlu0 %355, %v301
        %v357 = vpop.permute.xlu0 %356
        %360 = vset.pattern.permute.xlu0 0
        %361 = vperm.xlu0 %360, %v302
        %v362 = vpop.permute.xlu0 %361
        %365 = vset.pattern.permute.xlu0 0
        %366 = vperm.xlu0 %365, %v303
        %v367 = vpop.permute.xlu0 %366
        %370 = vset.pattern.permute.xlu0 0
        %371 = vperm.xlu0 %370, %v304
        %v372 = vpop.permute.xlu0 %371
        %375 = vset.pattern.permute.xlu0 0
        %376 = vperm.xlu0 %375, %v305
        %v377 = vpop.permute.xlu0 %376
        %380 = vset.pattern.permute.xlu0 0
        %381 = vperm.xlu0 %380, %v306
        %v382 = vpop.permute.xlu0 %381
        %385 = vset.pattern.permute.xlu0 0
        %386 = vperm.xlu0 %385, %v307
        %v387 = vpop.permute.xlu0 %386
        %390 = vset.pattern.permute.xlu0 0
        %391 = vperm.xlu0 %390, %v308
        %v392 = vpop.permute.xlu0 %391
        %395 = vset.pattern.permute.xlu0 0
        %396 = vperm.xlu0 %395, %v309
        %v397 = vpop.permute.xlu0 %396
        %400 = vset.pattern.permute.xlu0 0
        %401 = vperm.xlu0 %400, %v310
        %v402 = vpop.permute.xlu0 %401
        %405 = vset.pattern.permute.xlu0 0
        %406 = vperm.xlu0 %405, %v311
        %v407 = vpop.permute.xlu0 %406
        %410 = vset.pattern.permute.xlu0 0
        %411 = vperm.xlu0 %410, %v312
        %v412 = vpop.permute.xlu0 %411
        %415 = vset.pattern.permute.xlu0 0
        %416 = vperm.xlu0 %415, %v313
        %v417 = vpop.permute.xlu0 %416
        %420 = vset.pattern.permute.xlu0 0
        %421 = vperm.xlu0 %420, %v314
        %v422 = vpop.permute.xlu0 %421
        %425 = vset.pattern.permute.xlu0 0
        %426 = vperm.xlu0 %425, %v315
        %v427 = vpop.permute.xlu0 %426
        %430 = vset.pattern.permute.xlu0 0
        %431 = vperm.xlu0 %430, %v316
        %v432 = vpop.permute.xlu0 %431
        %435 = vset.pattern.permute.xlu0 0
        %436 = vperm.xlu0 %435, %v317
        %v437 = vpop.permute.xlu0 %436
        %440 = vset.pattern.permute.xlu0 0
        %441 = vperm.xlu0 %440, %v318
        %v442 = vpop.permute.xlu0 %441
        %445 = vset.pattern.permute.xlu0 0
        %446 = vperm.xlu0 %445, %v319
        %v447 = vpop.permute.xlu0 %446
        %450 = vset.pattern.permute.xlu0 0
        %451 = vperm.xlu0 %450, %v320
        %v452 = vpop.permute.xlu0 %451
        %455 = vset.pattern.permute.xlu0 0
        %456 = vperm.xlu0 %455, %v321
        %v457 = vpop.permute.xlu0 %456
        %460 = vset.pattern.permute.xlu0 0
        %461 = vperm.xlu0 %460, %v322
        %v462 = vpop.permute.xlu0 %461
        %465 = vset.pattern.permute.xlu0 0
        %466 = vperm.xlu0 %465, %v323
        %v467 = vpop.permute.xlu0 %466
        %470 = vset.pattern.permute.xlu0 0
        %471 = vperm.xlu0 %470, %v324
        %v472 = vpop.permute.xlu0 %471
        %475 = vset.pattern.permute.xlu0 0
        %476 = vperm.xlu0 %475, %v325
        %v477 = vpop.permute.xlu0 %476
        %480 = vset.pattern.permute.xlu0 0
        %481 = vperm.xlu0 %480, %v326
        %v482 = vpop.permute.xlu0 %481
        %485 = vset.pattern.permute.xlu0 0
        %486 = vperm.xlu0 %485, %v327
        %v487 = vpop.permute.xlu0 %486
        %v490 = vlaneseq
        %v491 = vshrl.u32 %v490, 7
        %v492 = vsub.s32 0, %v491
        %v493 = vrot.slane %v328, %v492
        %v494 = vlaneseq
        %v495 = vshrl.u32 %v494, 7
        %v496 = vsub.s32 4, %v495
        %v497 = vrot.slane %v328, %v496
        %v500 = vlaneseq
        %v501 = vshrl.u32 %v500, 7
        %v502 = vsub.s32 0, %v501
        %v503 = vrot.slane %v493, %v502
        %v504 = vlaneseq
        %v505 = vshrl.u32 %v504, 7
        %v506 = vsub.s32 0, %v505
        %v507 = vrot.slane %v497, %v506
        %v508 = vmul.f32 %v332, %v503
        %v509 = vmul.f32 %v332, %v507
        %v510 = vmul.f32 %v337, %v503
        %v511 = vmul.f32 %v337, %v507
        %v512 = vmul.f32 %v342, %v503
        %v513 = vmul.f32 %v342, %v507
        %v514 = vmul.f32 %v347, %v503
        %v515 = vmul.f32 %v347, %v507
        %v516 = vmul.f32 %v352, %v503
        %v517 = vmul.f32 %v352, %v507
        %v518 = vmul.f32 %v357, %v503
        %v519 = vmul.f32 %v357, %v507
        %v520 = vmul.f32 %v362, %v503
        %v521 = vmul.f32 %v362, %v507
        %v522 = vmul.f32 %v367, %v503
        %v523 = vmul.f32 %v367, %v507
        %v524 = vmul.f32 %v372, %v503
        %v525 = vmul.f32 %v372, %v507
        %v526 = vmul.f32 %v377, %v503
        %v527 = vmul.f32 %v377, %v507
        %v528 = vmul.f32 %v382, %v503
        %v529 = vmul.f32 %v382, %v507
        %v530 = vmul.f32 %v387, %v503
        %v531 = vmul.f32 %v387, %v507
        %v532 = vmul.f32 %v392, %v503
        %v533 = vmul.f32 %v392, %v507
        %v534 = vmul.f32 %v397, %v503
        %v535 = vmul.f32 %v397, %v507
        %v536 = vmul.f32 %v402, %v503
        %v537 = vmul.f32 %v402, %v507
        %v538 = vmul.f32 %v407, %v503
        %v539 = vmul.f32 %v407, %v507
        %v540 = vmul.f32 %v412, %v503
        %v541 = vmul.f32 %v412, %v507
        %v542 = vmul.f32 %v417, %v503
        %v543 = vmul.f32 %v417, %v507
        %v544 = vmul.f32 %v422, %v503
        %v545 = vmul.f32 %v422, %v507
        %v546 = vmul.f32 %v427, %v503
        %v547 = vmul.f32 %v427, %v507
        %v548 = vmul.f32 %v432, %v503
        %v549 = vmul.f32 %v432, %v507
        %v550 = vmul.f32 %v437, %v503
        %v551 = vmul.f32 %v437, %v507
        %v552 = vmul.f32 %v442, %v503
        %v553 = vmul.f32 %v442, %v507
        %v554 = vmul.f32 %v447, %v503
        %v555 = vmul.f32 %v447, %v507
        %v556 = vmul.f32 %v452, %v503
        %v557 = vmul.f32 %v452, %v507
        %v558 = vmul.f32 %v457, %v503
        %v559 = vmul.f32 %v457, %v507
        %v560 = vmul.f32 %v462, %v503
        %v561 = vmul.f32 %v462, %v507
        %v562 = vmul.f32 %v467, %v503
        %v563 = vmul.f32 %v467, %v507
        %v564 = vmul.f32 %v472, %v503
        %v565 = vmul.f32 %v472, %v507
        %v566 = vmul.f32 %v477, %v503
        %v567 = vmul.f32 %v477, %v507
        %v568 = vmul.f32 %v482, %v503
        %v569 = vmul.f32 %v482, %v507
        %v570 = vmul.f32 %v487, %v503
        %v571 = vmul.f32 %v487, %v507
        %572 = vset.pattern.permute.xlu0 1
        %573 = vperm.xlu0 %572, %v296
        %v574 = vpop.permute.xlu0 %573
        %576 = vset.pattern.permute.xlu0 1
        %577 = vperm.xlu0 %576, %v297
        %v578 = vpop.permute.xlu0 %577
        %580 = vset.pattern.permute.xlu0 1
        %581 = vperm.xlu0 %580, %v298
        %v582 = vpop.permute.xlu0 %581
        %584 = vset.pattern.permute.xlu0 1
        %585 = vperm.xlu0 %584, %v299
        %v586 = vpop.permute.xlu0 %585
        %588 = vset.pattern.permute.xlu0 1
        %589 = vperm.xlu0 %588, %v300
        %v590 = vpop.permute.xlu0 %589
        %592 = vset.pattern.permute.xlu0 1
        %593 = vperm.xlu0 %592, %v301
        %v594 = vpop.permute.xlu0 %593
        %596 = vset.pattern.permute.xlu0 1
        %597 = vperm.xlu0 %596, %v302
        %v598 = vpop.permute.xlu0 %597
        %600 = vset.pattern.permute.xlu0 1
        %601 = vperm.xlu0 %600, %v303
        %v602 = vpop.permute.xlu0 %601
        %604 = vset.pattern.permute.xlu0 1
        %605 = vperm.xlu0 %604, %v304
        %v606 = vpop.permute.xlu0 %605
        %608 = vset.pattern.permute.xlu0 1
        %609 = vperm.xlu0 %608, %v305
        %v610 = vpop.permute.xlu0 %609
        %612 = vset.pattern.permute.xlu0 1
        %613 = vperm.xlu0 %612, %v306
        %v614 = vpop.permute.xlu0 %613
        %616 = vset.pattern.permute.xlu0 1
        %617 = vperm.xlu0 %616, %v307
        %v618 = vpop.permute.xlu0 %617
        %620 = vset.pattern.permute.xlu0 1
        %621 = vperm.xlu0 %620, %v308
        %v622 = vpop.permute.xlu0 %621
        %624 = vset.pattern.permute.xlu0 1
        %625 = vperm.xlu0 %624, %v309
        %v626 = vpop.permute.xlu0 %625
        %628 = vset.pattern.permute.xlu0 1
        %629 = vperm.xlu0 %628, %v310
        %v630 = vpop.permute.xlu0 %629
        %632 = vset.pattern.permute.xlu0 1
        %633 = vperm.xlu0 %632, %v311
        %v634 = vpop.permute.xlu0 %633
        %636 = vset.pattern.permute.xlu0 1
        %637 = vperm.xlu0 %636, %v312
        %v638 = vpop.permute.xlu0 %637
        %640 = vset.pattern.permute.xlu0 1
        %641 = vperm.xlu0 %640, %v313
        %v642 = vpop.permute.xlu0 %641
        %644 = vset.pattern.permute.xlu0 1
        %645 = vperm.xlu0 %644, %v314
        %v646 = vpop.permute.xlu0 %645
        %648 = vset.pattern.permute.xlu0 1
        %649 = vperm.xlu0 %648, %v315
        %v650 = vpop.permute.xlu0 %649
        %652 = vset.pattern.permute.xlu0 1
        %653 = vperm.xlu0 %652, %v316
        %v654 = vpop.permute.xlu0 %653
        %656 = vset.pattern.permute.xlu0 1
        %657 = vperm.xlu0 %656, %v317
        %v658 = vpop.permute.xlu0 %657
        %660 = vset.pattern.permute.xlu0 1
        %661 = vperm.xlu0 %660, %v318
        %v662 = vpop.permute.xlu0 %661
        %664 = vset.pattern.permute.xlu0 1
        %665 = vperm.xlu0 %664, %v319
        %v666 = vpop.permute.xlu0 %665
        %668 = vset.pattern.permute.xlu0 1
        %669 = vperm.xlu0 %668, %v320
        %v670 = vpop.permute.xlu0 %669
        %672 = vset.pattern.permute.xlu0 1
        %673 = vperm.xlu0 %672, %v321
        %v674 = vpop.permute.xlu0 %673
        %676 = vset.pattern.permute.xlu0 1
        %677 = vperm.xlu0 %676, %v322
        %v678 = vpop.permute.xlu0 %677
        %680 = vset.pattern.permute.xlu0 1
        %681 = vperm.xlu0 %680, %v323
        %v682 = vpop.permute.xlu0 %681
        %684 = vset.pattern.permute.xlu0 1
        %685 = vperm.xlu0 %684, %v324
        %v686 = vpop.permute.xlu0 %685
        %688 = vset.pattern.permute.xlu0 1
        %689 = vperm.xlu0 %688, %v325
        %v690 = vpop.permute.xlu0 %689
        %692 = vset.pattern.permute.xlu0 1
        %693 = vperm.xlu0 %692, %v326
        %v694 = vpop.permute.xlu0 %693
        %696 = vset.pattern.permute.xlu0 1
        %697 = vperm.xlu0 %696, %v327
        %v698 = vpop.permute.xlu0 %697
        %v700 = vlaneseq
        %v701 = vshrl.u32 %v700, 7
        %v702 = vsub.s32 1, %v701
        %v703 = vrot.slane %v328, %v702
        %v704 = vlaneseq
        %v705 = vshrl.u32 %v704, 7
        %v706 = vsub.s32 5, %v705
        %v707 = vrot.slane %v328, %v706
        %v710 = vlaneseq
        %v711 = vshrl.u32 %v710, 7
        %v712 = vsub.s32 1, %v711
        %v713 = vrot.slane %v703, %v712
        %v714 = vlaneseq
        %v715 = vshrl.u32 %v714, 7
        %v716 = vsub.s32 1, %v715
        %v717 = vrot.slane %v707, %v716
        %v718 = vmul.f32 %v574, %v713
        %v719 = vmul.f32 %v574, %v717
        %v720 = vmul.f32 %v578, %v713
        %v721 = vmul.f32 %v578, %v717
        %v722 = vmul.f32 %v582, %v713
        %v723 = vmul.f32 %v582, %v717
        %v724 = vmul.f32 %v586, %v713
        %v725 = vmul.f32 %v586, %v717
        %v726 = vmul.f32 %v590, %v713
        %v727 = vmul.f32 %v590, %v717
        %v728 = vmul.f32 %v594, %v713
        %v729 = vmul.f32 %v594, %v717
        %v730 = vmul.f32 %v598, %v713
        %v731 = vmul.f32 %v598, %v717
        %v732 = vmul.f32 %v602, %v713
        %v733 = vmul.f32 %v602, %v717
        %v734 = vmul.f32 %v606, %v713
        %v735 = vmul.f32 %v606, %v717
        %v736 = vmul.f32 %v610, %v713
        %v737 = vmul.f32 %v610, %v717
        %v738 = vmul.f32 %v614, %v713
        %v739 = vmul.f32 %v614, %v717
        %v740 = vmul.f32 %v618, %v713
        %v741 = vmul.f32 %v618, %v717
        %v742 = vmul.f32 %v622, %v713
        %v743 = vmul.f32 %v622, %v717
        %v744 = vmul.f32 %v626, %v713
        %v745 = vmul.f32 %v626, %v717
        %v746 = vmul.f32 %v630, %v713
        %v747 = vmul.f32 %v630, %v717
        %v748 = vmul.f32 %v634, %v713
        %v749 = vmul.f32 %v634, %v717
        %v750 = vmul.f32 %v638, %v713
        %v751 = vmul.f32 %v638, %v717
        %v752 = vmul.f32 %v642, %v713
        %v753 = vmul.f32 %v642, %v717
        %v754 = vmul.f32 %v646, %v713
        %v755 = vmul.f32 %v646, %v717
        %v756 = vmul.f32 %v650, %v713
        %v757 = vmul.f32 %v650, %v717
        %v758 = vmul.f32 %v654, %v713
        %v759 = vmul.f32 %v654, %v717
        %v760 = vmul.f32 %v658, %v713
        %v761 = vmul.f32 %v658, %v717
        %v762 = vmul.f32 %v662, %v713
        %v763 = vmul.f32 %v662, %v717
        %v764 = vmul.f32 %v666, %v713
        %v765 = vmul.f32 %v666, %v717
        %v766 = vmul.f32 %v670, %v713
        %v767 = vmul.f32 %v670, %v717
        %v768 = vmul.f32 %v674, %v713
        %v769 = vmul.f32 %v674, %v717
        %v770 = vmul.f32 %v678, %v713
        %v771 = vmul.f32 %v678, %v717
        %v772 = vmul.f32 %v682, %v713
        %v773 = vmul.f32 %v682, %v717
        %v774 = vmul.f32 %v686, %v713
        %v775 = vmul.f32 %v686, %v717
        %v776 = vmul.f32 %v690, %v713
        %v777 = vmul.f32 %v690, %v717
        %v778 = vmul.f32 %v694, %v713
        %v779 = vmul.f32 %v694, %v717
        %v780 = vmul.f32 %v698, %v713
        %v781 = vmul.f32 %v698, %v717
        %v782 = vadd.f32 %v508, %v718
        %v783 = vadd.f32 %v509, %v719
        %v784 = vadd.f32 %v510, %v720
        %v785 = vadd.f32 %v511, %v721
        %v786 = vadd.f32 %v512, %v722
        %v787 = vadd.f32 %v513, %v723
        %v788 = vadd.f32 %v514, %v724
        %v789 = vadd.f32 %v515, %v725
        %v790 = vadd.f32 %v516, %v726
        %v791 = vadd.f32 %v517, %v727
        %v792 = vadd.f32 %v518, %v728
        %v793 = vadd.f32 %v519, %v729
        %v794 = vadd.f32 %v520, %v730
        %v795 = vadd.f32 %v521, %v731
        %v796 = vadd.f32 %v522, %v732
        %v797 = vadd.f32 %v523, %v733
        %v798 = vadd.f32 %v524, %v734
        %v799 = vadd.f32 %v525, %v735
        %v800 = vadd.f32 %v526, %v736
        %v801 = vadd.f32 %v527, %v737
        %v802 = vadd.f32 %v528, %v738
        %v803 = vadd.f32 %v529, %v739
        %v804 = vadd.f32 %v530, %v740
        %v805 = vadd.f32 %v531, %v741
        %v806 = vadd.f32 %v532, %v742
        %v807 = vadd.f32 %v533, %v743
        %v808 = vadd.f32 %v534, %v744
        %v809 = vadd.f32 %v535, %v745
        %v810 = vadd.f32 %v536, %v746
        %v811 = vadd.f32 %v537, %v747
        %v812 = vadd.f32 %v538, %v748
        %v813 = vadd.f32 %v539, %v749
        %v814 = vadd.f32 %v540, %v750
        %v815 = vadd.f32 %v541, %v751
        %v816 = vadd.f32 %v542, %v752
        %v817 = vadd.f32 %v543, %v753
        %v818 = vadd.f32 %v544, %v754
        %v819 = vadd.f32 %v545, %v755
        %v820 = vadd.f32 %v546, %v756
        %v821 = vadd.f32 %v547, %v757
        %v822 = vadd.f32 %v548, %v758
        %v823 = vadd.f32 %v549, %v759
        %v824 = vadd.f32 %v550, %v760
        %v825 = vadd.f32 %v551, %v761
        %v826 = vadd.f32 %v552, %v762
        %v827 = vadd.f32 %v553, %v763
        %v828 = vadd.f32 %v554, %v764
        %v829 = vadd.f32 %v555, %v765
        %v830 = vadd.f32 %v556, %v766
        %v831 = vadd.f32 %v557, %v767
        %v832 = vadd.f32 %v558, %v768
        %v833 = vadd.f32 %v559, %v769
        %v834 = vadd.f32 %v560, %v770
        %v835 = vadd.f32 %v561, %v771
        %v836 = vadd.f32 %v562, %v772
        %v837 = vadd.f32 %v563, %v773
        %v838 = vadd.f32 %v564, %v774
        %v839 = vadd.f32 %v565, %v775
        %v840 = vadd.f32 %v566, %v776
        %v841 = vadd.f32 %v567, %v777
        %v842 = vadd.f32 %v568, %v778
        %v843 = vadd.f32 %v569, %v779
        %v844 = vadd.f32 %v570, %v780
        %v845 = vadd.f32 %v571, %v781
        %846 = vset.pattern.permute.xlu0 2
        %847 = vperm.xlu0 %846, %v296
        %v848 = vpop.permute.xlu0 %847
        %850 = vset.pattern.permute.xlu0 2
        %851 = vperm.xlu0 %850, %v297
        %v852 = vpop.permute.xlu0 %851
        %854 = vset.pattern.permute.xlu0 2
        %855 = vperm.xlu0 %854, %v298
        %v856 = vpop.permute.xlu0 %855
        %858 = vset.pattern.permute.xlu0 2
        %859 = vperm.xlu0 %858, %v299
        %v860 = vpop.permute.xlu0 %859
        %862 = vset.pattern.permute.xlu0 2
        %863 = vperm.xlu0 %862, %v300
        %v864 = vpop.permute.xlu0 %863
        %866 = vset.pattern.permute.xlu0 2
        %867 = vperm.xlu0 %866, %v301
        %v868 = vpop.permute.xlu0 %867
        %870 = vset.pattern.permute.xlu0 2
        %871 = vperm.xlu0 %870, %v302
        %v872 = vpop.permute.xlu0 %871
        %874 = vset.pattern.permute.xlu0 2
        %875 = vperm.xlu0 %874, %v303
        %v876 = vpop.permute.xlu0 %875
        %878 = vset.pattern.permute.xlu0 2
        %879 = vperm.xlu0 %878, %v304
        %v880 = vpop.permute.xlu0 %879
        %882 = vset.pattern.permute.xlu0 2
        %883 = vperm.xlu0 %882, %v305
        %v884 = vpop.permute.xlu0 %883
        %886 = vset.pattern.permute.xlu0 2
        %887 = vperm.xlu0 %886, %v306
        %v888 = vpop.permute.xlu0 %887
        %890 = vset.pattern.permute.xlu0 2
        %891 = vperm.xlu0 %890, %v307
        %v892 = vpop.permute.xlu0 %891
        %894 = vset.pattern.permute.xlu0 2
        %895 = vperm.xlu0 %894, %v308
        %v896 = vpop.permute.xlu0 %895
        %898 = vset.pattern.permute.xlu0 2
        %899 = vperm.xlu0 %898, %v309
        %v900 = vpop.permute.xlu0 %899
        %902 = vset.pattern.permute.xlu0 2
        %903 = vperm.xlu0 %902, %v310
        %v904 = vpop.permute.xlu0 %903
        %906 = vset.pattern.permute.xlu0 2
        %907 = vperm.xlu0 %906, %v311
        %v908 = vpop.permute.xlu0 %907
        %910 = vset.pattern.permute.xlu0 2
        %911 = vperm.xlu0 %910, %v312
        %v912 = vpop.permute.xlu0 %911
        %914 = vset.pattern.permute.xlu0 2
        %915 = vperm.xlu0 %914, %v313
        %v916 = vpop.permute.xlu0 %915
        %918 = vset.pattern.permute.xlu0 2
        %919 = vperm.xlu0 %918, %v314
        %v920 = vpop.permute.xlu0 %919
        %922 = vset.pattern.permute.xlu0 2
        %923 = vperm.xlu0 %922, %v315
        %v924 = vpop.permute.xlu0 %923
        %926 = vset.pattern.permute.xlu0 2
        %927 = vperm.xlu0 %926, %v316
        %v928 = vpop.permute.xlu0 %927
        %930 = vset.pattern.permute.xlu0 2
        %931 = vperm.xlu0 %930, %v317
        %v932 = vpop.permute.xlu0 %931
        %934 = vset.pattern.permute.xlu0 2
        %935 = vperm.xlu0 %934, %v318
        %v936 = vpop.permute.xlu0 %935
        %938 = vset.pattern.permute.xlu0 2
        %939 = vperm.xlu0 %938, %v319
        %v940 = vpop.permute.xlu0 %939
        %942 = vset.pattern.permute.xlu0 2
        %943 = vperm.xlu0 %942, %v320
        %v944 = vpop.permute.xlu0 %943
        %946 = vset.pattern.permute.xlu0 2
        %947 = vperm.xlu0 %946, %v321
        %v948 = vpop.permute.xlu0 %947
        %950 = vset.pattern.permute.xlu0 2
        %951 = vperm.xlu0 %950, %v322
        %v952 = vpop.permute.xlu0 %951
        %954 = vset.pattern.permute.xlu0 2
        %955 = vperm.xlu0 %954, %v323
        %v956 = vpop.permute.xlu0 %955
        %958 = vset.pattern.permute.xlu0 2
        %959 = vperm.xlu0 %958, %v324
        %v960 = vpop.permute.xlu0 %959
        %962 = vset.pattern.permute.xlu0 2
        %963 = vperm.xlu0 %962, %v325
        %v964 = vpop.permute.xlu0 %963
        %966 = vset.pattern.permute.xlu0 2
        %967 = vperm.xlu0 %966, %v326
        %v968 = vpop.permute.xlu0 %967
        %970 = vset.pattern.permute.xlu0 2
        %971 = vperm.xlu0 %970, %v327
        %v972 = vpop.permute.xlu0 %971
        %v974 = vlaneseq
        %v975 = vshrl.u32 %v974, 7
        %v976 = vsub.s32 2, %v975
        %v977 = vrot.slane %v328, %v976
        %v978 = vlaneseq
        %v979 = vshrl.u32 %v978, 7
        %v980 = vsub.s32 6, %v979
        %v981 = vrot.slane %v328, %v980
        %v984 = vlaneseq
        %v985 = vshrl.u32 %v984, 7
        %v986 = vsub.s32 2, %v985
        %v987 = vrot.slane %v977, %v986
        %v988 = vlaneseq
        %v989 = vshrl.u32 %v988, 7
        %v990 = vsub.s32 2, %v989
        %v991 = vrot.slane %v981, %v990
        %v992 = vmul.f32 %v848, %v987
        %v993 = vmul.f32 %v848, %v991
        %v994 = vmul.f32 %v852, %v987
        %v995 = vmul.f32 %v852, %v991
        %v996 = vmul.f32 %v856, %v987
        %v997 = vmul.f32 %v856, %v991
        %v998 = vmul.f32 %v860, %v987
        %v999 = vmul.f32 %v860, %v991
        %v1000 = vmul.f32 %v864, %v987
        %v1001 = vmul.f32 %v864, %v991
        %v1002 = vmul.f32 %v868, %v987
        %v1003 = vmul.f32 %v868, %v991
        %v1004 = vmul.f32 %v872, %v987
        %v1005 = vmul.f32 %v872, %v991
        %v1006 = vmul.f32 %v876, %v987
        %v1007 = vmul.f32 %v876, %v991
        %v1008 = vmul.f32 %v880, %v987
        %v1009 = vmul.f32 %v880, %v991
        %v1010 = vmul.f32 %v884, %v987
        %v1011 = vmul.f32 %v884, %v991
        %v1012 = vmul.f32 %v888, %v987
        %v1013 = vmul.f32 %v888, %v991
        %v1014 = vmul.f32 %v892, %v987
        %v1015 = vmul.f32 %v892, %v991
        %v1016 = vmul.f32 %v896, %v987
        %v1017 = vmul.f32 %v896, %v991
        %v1018 = vmul.f32 %v900, %v987
        %v1019 = vmul.f32 %v900, %v991
        %v1020 = vmul.f32 %v904, %v987
        %v1021 = vmul.f32 %v904, %v991
        %v1022 = vmul.f32 %v908, %v987
        %v1023 = vmul.f32 %v908, %v991
        %v1024 = vmul.f32 %v912, %v987
        %v1025 = vmul.f32 %v912, %v991
        %v1026 = vmul.f32 %v916, %v987
        %v1027 = vmul.f32 %v916, %v991
        %v1028 = vmul.f32 %v920, %v987
        %v1029 = vmul.f32 %v920, %v991
        %v1030 = vmul.f32 %v924, %v987
        %v1031 = vmul.f32 %v924, %v991
        %v1032 = vmul.f32 %v928, %v987
        %v1033 = vmul.f32 %v928, %v991
        %v1034 = vmul.f32 %v932, %v987
        %v1035 = vmul.f32 %v932, %v991
        %v1036 = vmul.f32 %v936, %v987
        %v1037 = vmul.f32 %v936, %v991
        %v1038 = vmul.f32 %v940, %v987
        %v1039 = vmul.f32 %v940, %v991
        %v1040 = vmul.f32 %v944, %v987
        %v1041 = vmul.f32 %v944, %v991
        %v1042 = vmul.f32 %v948, %v987
        %v1043 = vmul.f32 %v948, %v991
        %v1044 = vmul.f32 %v952, %v987
        %v1045 = vmul.f32 %v952, %v991
        %v1046 = vmul.f32 %v956, %v987
        %v1047 = vmul.f32 %v956, %v991
        %v1048 = vmul.f32 %v960, %v987
        %v1049 = vmul.f32 %v960, %v991
        %v1050 = vmul.f32 %v964, %v987
        %v1051 = vmul.f32 %v964, %v991
        %v1052 = vmul.f32 %v968, %v987
        %v1053 = vmul.f32 %v968, %v991
        %v1054 = vmul.f32 %v972, %v987
        %v1055 = vmul.f32 %v972, %v991
        %v1056 = vadd.f32 %v782, %v992
        %v1057 = vadd.f32 %v783, %v993
        %v1058 = vadd.f32 %v784, %v994
        %v1059 = vadd.f32 %v785, %v995
        %v1060 = vadd.f32 %v786, %v996
        %v1061 = vadd.f32 %v787, %v997
        %v1062 = vadd.f32 %v788, %v998
        %v1063 = vadd.f32 %v789, %v999
        %v1064 = vadd.f32 %v790, %v1000
        %v1065 = vadd.f32 %v791, %v1001
        %v1066 = vadd.f32 %v792, %v1002
        %v1067 = vadd.f32 %v793, %v1003
        %v1068 = vadd.f32 %v794, %v1004
        %v1069 = vadd.f32 %v795, %v1005
        %v1070 = vadd.f32 %v796, %v1006
        %v1071 = vadd.f32 %v797, %v1007
        %v1072 = vadd.f32 %v798, %v1008
        %v1073 = vadd.f32 %v799, %v1009
        %v1074 = vadd.f32 %v800, %v1010
        %v1075 = vadd.f32 %v801, %v1011
        %v1076 = vadd.f32 %v802, %v1012
        %v1077 = vadd.f32 %v803, %v1013
        %v1078 = vadd.f32 %v804, %v1014
        %v1079 = vadd.f32 %v805, %v1015
        %v1080 = vadd.f32 %v806, %v1016
        %v1081 = vadd.f32 %v807, %v1017
        %v1082 = vadd.f32 %v808, %v1018
        %v1083 = vadd.f32 %v809, %v1019
        %v1084 = vadd.f32 %v810, %v1020
        %v1085 = vadd.f32 %v811, %v1021
        %v1086 = vadd.f32 %v812, %v1022
        %v1087 = vadd.f32 %v813, %v1023
        %v1088 = vadd.f32 %v814, %v1024
        %v1089 = vadd.f32 %v815, %v1025
        %v1090 = vadd.f32 %v816, %v1026
        %v1091 = vadd.f32 %v817, %v1027
        %v1092 = vadd.f32 %v818, %v1028
        %v1093 = vadd.f32 %v819, %v1029
        %v1094 = vadd.f32 %v820, %v1030
        %v1095 = vadd.f32 %v821, %v1031
        %v1096 = vadd.f32 %v822, %v1032
        %v1097 = vadd.f32 %v823, %v1033
        %v1098 = vadd.f32 %v824, %v1034
        %v1099 = vadd.f32 %v825, %v1035
        %v1100 = vadd.f32 %v826, %v1036
        %v1101 = vadd.f32 %v827, %v1037
        %v1102 = vadd.f32 %v828, %v1038
        %v1103 = vadd.f32 %v829, %v1039
        %v1104 = vadd.f32 %v830, %v1040
        %v1105 = vadd.f32 %v831, %v1041
        %v1106 = vadd.f32 %v832, %v1042
        %v1107 = vadd.f32 %v833, %v1043
        %v1108 = vadd.f32 %v834, %v1044
        %v1109 = vadd.f32 %v835, %v1045
        %v1110 = vadd.f32 %v836, %v1046
        %v1111 = vadd.f32 %v837, %v1047
        %v1112 = vadd.f32 %v838, %v1048
        %v1113 = vadd.f32 %v839, %v1049
        %v1114 = vadd.f32 %v840, %v1050
        %v1115 = vadd.f32 %v841, %v1051
        %v1116 = vadd.f32 %v842, %v1052
        %v1117 = vadd.f32 %v843, %v1053
        %v1118 = vadd.f32 %v844, %v1054
        %v1119 = vadd.f32 %v845, %v1055
        %v1120 = vld [vmem:[%s4] ss:$8 sm:$0x3]
        %v1122 = vlaneseq
        %v1123 = vshrl.u32 %v1122, 7
        %v1124 = vsub.s32 0, %v1123
        %v1125 = vrot.slane %v1120, %v1124
        %v1126 = vlaneseq
        %v1127 = vshrl.u32 %v1126, 7
        %v1128 = vsub.s32 1, %v1127
        %v1129 = vrot.slane %v1120, %v1128
        %v1132 = vadd.f32 %v1056, %v1125
        %v1133 = vadd.f32 %v1057, %v1129
        %v1134 = vadd.f32 %v1058, %v1125
        %v1135 = vadd.f32 %v1059, %v1129
        %v1136 = vadd.f32 %v1060, %v1125
        %v1137 = vadd.f32 %v1061, %v1129
        %v1138 = vadd.f32 %v1062, %v1125
        %v1139 = vadd.f32 %v1063, %v1129
        %v1140 = vadd.f32 %v1064, %v1125
        %v1141 = vadd.f32 %v1065, %v1129
        %v1142 = vadd.f32 %v1066, %v1125
        %v1143 = vadd.f32 %v1067, %v1129
        %v1144 = vadd.f32 %v1068, %v1125
        %v1145 = vadd.f32 %v1069, %v1129
        %v1146 = vadd.f32 %v1070, %v1125
        %v1147 = vadd.f32 %v1071, %v1129
        %v1148 = vadd.f32 %v1072, %v1125
        %v1149 = vadd.f32 %v1073, %v1129
        %v1150 = vadd.f32 %v1074, %v1125
        %v1151 = vadd.f32 %v1075, %v1129
        %v1152 = vadd.f32 %v1076, %v1125
        %v1153 = vadd.f32 %v1077, %v1129
        %v1154 = vadd.f32 %v1078, %v1125
        %v1155 = vadd.f32 %v1079, %v1129
        %v1156 = vadd.f32 %v1080, %v1125
        %v1157 = vadd.f32 %v1081, %v1129
        %v1158 = vadd.f32 %v1082, %v1125
        %v1159 = vadd.f32 %v1083, %v1129
        %v1160 = vadd.f32 %v1084, %v1125
        %v1161 = vadd.f32 %v1085, %v1129
        %v1162 = vadd.f32 %v1086, %v1125
        %v1163 = vadd.f32 %v1087, %v1129
        %v1164 = vadd.f32 %v1088, %v1125
        %v1165 = vadd.f32 %v1089, %v1129
        %v1166 = vadd.f32 %v1090, %v1125
        %v1167 = vadd.f32 %v1091, %v1129
        %v1168 = vadd.f32 %v1092, %v1125
        %v1169 = vadd.f32 %v1093, %v1129
        %v1170 = vadd.f32 %v1094, %v1125
        %v1171 = vadd.f32 %v1095, %v1129
        %v1172 = vadd.f32 %v1096, %v1125
        %v1173 = vadd.f32 %v1097, %v1129
        %v1174 = vadd.f32 %v1098, %v1125
        %v1175 = vadd.f32 %v1099, %v1129
        %v1176 = vadd.f32 %v1100, %v1125
        %v1177 = vadd.f32 %v1101, %v1129
        %v1178 = vadd.f32 %v1102, %v1125
        %v1179 = vadd.f32 %v1103, %v1129
        %v1180 = vadd.f32 %v1104, %v1125
        %v1181 = vadd.f32 %v1105, %v1129
        %v1182 = vadd.f32 %v1106, %v1125
        %v1183 = vadd.f32 %v1107, %v1129
        %v1184 = vadd.f32 %v1108, %v1125
        %v1185 = vadd.f32 %v1109, %v1129
        %v1186 = vadd.f32 %v1110, %v1125
        %v1187 = vadd.f32 %v1111, %v1129
        %v1188 = vadd.f32 %v1112, %v1125
        %v1189 = vadd.f32 %v1113, %v1129
        %v1190 = vadd.f32 %v1114, %v1125
        %v1191 = vadd.f32 %v1115, %v1129
        %v1192 = vadd.f32 %v1116, %v1125
        %v1193 = vadd.f32 %v1117, %v1129
        %v1194 = vadd.f32 %v1118, %v1125
        %v1195 = vadd.f32 %v1119, %v1129
        %v1196 = vmax.f32 %v1132, 0.0
        %v1197 = vmax.f32 %v1133, 0.0
        %v1198 = vmax.f32 %v1134, 0.0
        %v1199 = vmax.f32 %v1135, 0.0
        %v1200 = vmax.f32 %v1136, 0.0
        %v1201 = vmax.f32 %v1137, 0.0
        %v1202 = vmax.f32 %v1138, 0.0
        %v1203 = vmax.f32 %v1139, 0.0
        %v1204 = vmax.f32 %v1140, 0.0
        %v1205 = vmax.f32 %v1141, 0.0
        %v1206 = vmax.f32 %v1142, 0.0
        %v1207 = vmax.f32 %v1143, 0.0
        %v1208 = vmax.f32 %v1144, 0.0
        %v1209 = vmax.f32 %v1145, 0.0
        %v1210 = vmax.f32 %v1146, 0.0
        %v1211 = vmax.f32 %v1147, 0.0
        %v1212 = vmax.f32 %v1148, 0.0
        %v1213 = vmax.f32 %v1149, 0.0
        %v1214 = vmax.f32 %v1150, 0.0
        %v1215 = vmax.f32 %v1151, 0.0
        %v1216 = vmax.f32 %v1152, 0.0
        %v1217 = vmax.f32 %v1153, 0.0
        %v1218 = vmax.f32 %v1154, 0.0
        %v1219 = vmax.f32 %v1155, 0.0
        %v1220 = vmax.f32 %v1156, 0.0
        %v1221 = vmax.f32 %v1157, 0.0
        %v1222 = vmax.f32 %v1158, 0.0
        %v1223 = vmax.f32 %v1159, 0.0
        %v1224 = vmax.f32 %v1160, 0.0
        %v1225 = vmax.f32 %v1161, 0.0
        %v1226 = vmax.f32 %v1162, 0.0
        %v1227 = vmax.f32 %v1163, 0.0
        %v1228 = vmax.f32 %v1164, 0.0
        %v1229 = vmax.f32 %v1165, 0.0
        %v1230 = vmax.f32 %v1166, 0.0
        %v1231 = vmax.f32 %v1167, 0.0
        %v1232 = vmax.f32 %v1168, 0.0
        %v1233 = vmax.f32 %v1169, 0.0
        %v1234 = vmax.f32 %v1170, 0.0
        %v1235 = vmax.f32 %v1171, 0.0
        %v1236 = vmax.f32 %v1172, 0.0
        %v1237 = vmax.f32 %v1173, 0.0
        %v1238 = vmax.f32 %v1174, 0.0
        %v1239 = vmax.f32 %v1175, 0.0
        %v1240 = vmax.f32 %v1176, 0.0
        %v1241 = vmax.f32 %v1177, 0.0
        %v1242 = vmax.f32 %v1178, 0.0
        %v1243 = vmax.f32 %v1179, 0.0
        %v1244 = vmax.f32 %v1180, 0.0
        %v1245 = vmax.f32 %v1181, 0.0
        %v1246 = vmax.f32 %v1182, 0.0
        %v1247 = vmax.f32 %v1183, 0.0
        %v1248 = vmax.f32 %v1184, 0.0
        %v1249 = vmax.f32 %v1185, 0.0
        %v1250 = vmax.f32 %v1186, 0.0
        %v1251 = vmax.f32 %v1187, 0.0
        %v1252 = vmax.f32 %v1188, 0.0
        %v1253 = vmax.f32 %v1189, 0.0
        %v1254 = vmax.f32 %v1190, 0.0
        %v1255 = vmax.f32 %v1191, 0.0
        %v1256 = vmax.f32 %v1192, 0.0
        %v1257 = vmax.f32 %v1193, 0.0
        %v1258 = vmax.f32 %v1194, 0.0
        %v1259 = vmax.f32 %v1195, 0.0
        %v1260 = vpack.c.bf16 %v1198, %v1196
        %v1261 = vpack.c.bf16 %v1199, %v1197
        %v1262 = vpack.c.bf16 %v1202, %v1200
        %v1263 = vpack.c.bf16 %v1203, %v1201
        %v1264 = vpack.c.bf16 %v1206, %v1204
        %v1265 = vpack.c.bf16 %v1207, %v1205
        %v1266 = vpack.c.bf16 %v1210, %v1208
        %v1267 = vpack.c.bf16 %v1211, %v1209
        %v1268 = vpack.c.bf16 %v1214, %v1212
        %v1269 = vpack.c.bf16 %v1215, %v1213
        %v1270 = vpack.c.bf16 %v1218, %v1216
        %v1271 = vpack.c.bf16 %v1219, %v1217
        %v1272 = vpack.c.bf16 %v1222, %v1220
        %v1273 = vpack.c.bf16 %v1223, %v1221
        %v1274 = vpack.c.bf16 %v1226, %v1224
        %v1275 = vpack.c.bf16 %v1227, %v1225
        %v1276 = vpack.c.bf16 %v1230, %v1228
        %v1277 = vpack.c.bf16 %v1231, %v1229
        %v1278 = vpack.c.bf16 %v1234, %v1232
        %v1279 = vpack.c.bf16 %v1235, %v1233
        %v1280 = vpack.c.bf16 %v1238, %v1236
        %v1281 = vpack.c.bf16 %v1239, %v1237
        %v1282 = vpack.c.bf16 %v1242, %v1240
        %v1283 = vpack.c.bf16 %v1243, %v1241
        %v1284 = vpack.c.bf16 %v1246, %v1244
        %v1285 = vpack.c.bf16 %v1247, %v1245
        %v1286 = vpack.c.bf16 %v1250, %v1248
        %v1287 = vpack.c.bf16 %v1251, %v1249
        %v1288 = vpack.c.bf16 %v1254, %v1252
        %v1289 = vpack.c.bf16 %v1255, %v1253
        %v1290 = vpack.c.bf16 %v1258, %v1256
        %v1291 = vpack.c.bf16 %v1259, %v1257
        %v1292 = vld [vmem:[#allocation2] sm:$0xff]
        %v1293 = vld [vmem:[#allocation2 + $0x8] sm:$0xff]
        %v1294 = vld [vmem:[#allocation2 + $0x10] sm:$0xff]
        %v1295 = vld [vmem:[#allocation2 + $0x18] sm:$0xff]
        %v1296 = vld [vmem:[#allocation2 + $0x20] sm:$0xff]
        %v1297 = vld [vmem:[#allocation2 + $0x28] sm:$0xff]
        %v1298 = vld [vmem:[#allocation2 + $0x30] sm:$0xff]
        %v1299 = vld [vmem:[#allocation2 + $0x38] sm:$0xff]
        %v1300 = vld [vmem:[#allocation2 + $0x40] sm:$0xff]
        %v1301 = vld [vmem:[#allocation2 + $0x48] sm:$0xff]
        %v1302 = vld [vmem:[#allocation2 + $0x50] sm:$0xff]
        %v1303 = vld [vmem:[#allocation2 + $0x58] sm:$0xff]
        %v1304 = vld [vmem:[#allocation2 + $0x60] sm:$0xff]
        %v1305 = vld [vmem:[#allocation2 + $0x68] sm:$0xff]
        %v1306 = vld [vmem:[#allocation2 + $0x70] sm:$0xff]
        %v1307 = vld [vmem:[#allocation2 + $0x78] sm:$0xff]
        %v1308 = vld [vmem:[#allocation2 + $0x80] sm:$0xff]
        %v1309 = vld [vmem:[#allocation2 + $0x88] sm:$0xff]
        %v1310 = vld [vmem:[#allocation2 + $0x90] sm:$0xff]
        %v1311 = vld [vmem:[#allocation2 + $0x98] sm:$0xff]
        %v1312 = vld [vmem:[#allocation2 + $0xa0] sm:$0xff]
        %v1313 = vld [vmem:[#allocation2 + $0xa8] sm:$0xff]
        %v1314 = vld [vmem:[#allocation2 + $0xb0] sm:$0xff]
        %v1315 = vld [vmem:[#allocation2 + $0xb8] sm:$0xff]
        %v1316 = vld [vmem:[#allocation2 + $0xc0] sm:$0xff]
        %v1317 = vld [vmem:[#allocation2 + $0xc8] sm:$0xff]
        %v1318 = vld [vmem:[#allocation2 + $0xd0] sm:$0xff]
        %v1319 = vld [vmem:[#allocation2 + $0xd8] sm:$0xff]
        %v1320 = vld [vmem:[#allocation2 + $0xe0] sm:$0xff]
        %v1321 = vld [vmem:[#allocation2 + $0xe8] sm:$0xff]
        %v1322 = vld [vmem:[#allocation2 + $0xf0] sm:$0xff]
        %v1323 = vld [vmem:[#allocation2 + $0xf8] sm:$0xff]
        %s1324 = scalar_lea.vmem %s4, 1
        %v1325 = vld [vmem:[%s1324] ss:$8 sm:$0x3]
        %v1327 = vlaneseq
        %v1328 = vshrl.u32 %v1327, 7
        %v1329 = vsub.s32 0, %v1328
        %v1330 = vrot.slane %v1325, %v1329
        %v1331 = vlaneseq
        %v1332 = vshrl.u32 %v1331, 7
        %v1333 = vsub.s32 1, %v1332
        %v1334 = vrot.slane %v1325, %v1333
        %v1369 = vunpack.c.l.b16 %v1292
        %v1370 = vunpack.c.h.b16 %v1292
        %v1371 = vunpack.c.l.b16 %v1293
        %v1372 = vunpack.c.h.b16 %v1293
        %v1373 = vunpack.c.l.b16 %v1294
        %v1374 = vunpack.c.h.b16 %v1294
        %v1375 = vunpack.c.l.b16 %v1295
        %v1376 = vunpack.c.h.b16 %v1295
        %v1377 = vunpack.c.l.b16 %v1296
        %v1378 = vunpack.c.h.b16 %v1296
        %v1379 = vunpack.c.l.b16 %v1297
        %v1380 = vunpack.c.h.b16 %v1297
        %v1381 = vunpack.c.l.b16 %v1298
        %v1382 = vunpack.c.h.b16 %v1298
        %v1383 = vunpack.c.l.b16 %v1299
        %v1384 = vunpack.c.h.b16 %v1299
        %v1385 = vunpack.c.l.b16 %v1300
        %v1386 = vunpack.c.h.b16 %v1300
        %v1387 = vunpack.c.l.b16 %v1301
        %v1388 = vunpack.c.h.b16 %v1301
        %v1389 = vunpack.c.l.b16 %v1302
        %v1390 = vunpack.c.h.b16 %v1302
        %v1391 = vunpack.c.l.b16 %v1303
        %v1392 = vunpack.c.h.b16 %v1303
        %v1393 = vunpack.c.l.b16 %v1304
        %v1394 = vunpack.c.h.b16 %v1304
        %v1395 = vunpack.c.l.b16 %v1305
        %v1396 = vunpack.c.h.b16 %v1305
        %v1397 = vunpack.c.l.b16 %v1306
        %v1398 = vunpack.c.h.b16 %v1306
        %v1399 = vunpack.c.l.b16 %v1307
        %v1400 = vunpack.c.h.b16 %v1307
        %v1401 = vunpack.c.l.b16 %v1308
        %v1402 = vunpack.c.h.b16 %v1308
        %v1403 = vunpack.c.l.b16 %v1309
        %v1404 = vunpack.c.h.b16 %v1309
        %v1405 = vunpack.c.l.b16 %v1310
        %v1406 = vunpack.c.h.b16 %v1310
        %v1407 = vunpack.c.l.b16 %v1311
        %v1408 = vunpack.c.h.b16 %v1311
        %v1409 = vunpack.c.l.b16 %v1312
        %v1410 = vunpack.c.h.b16 %v1312
        %v1411 = vunpack.c.l.b16 %v1313
        %v1412 = vunpack.c.h.b16 %v1313
        %v1413 = vunpack.c.l.b16 %v1314
        %v1414 = vunpack.c.h.b16 %v1314
        %v1415 = vunpack.c.l.b16 %v1315
        %v1416 = vunpack.c.h.b16 %v1315
        %v1417 = vunpack.c.l.b16 %v1316
        %v1418 = vunpack.c.h.b16 %v1316
        %v1419 = vunpack.c.l.b16 %v1317
        %v1420 = vunpack.c.h.b16 %v1317
        %v1421 = vunpack.c.l.b16 %v1318
        %v1422 = vunpack.c.h.b16 %v1318
        %v1423 = vunpack.c.l.b16 %v1319
        %v1424 = vunpack.c.h.b16 %v1319
        %v1425 = vunpack.c.l.b16 %v1320
        %v1426 = vunpack.c.h.b16 %v1320
        %v1427 = vunpack.c.l.b16 %v1321
        %v1428 = vunpack.c.h.b16 %v1321
        %v1429 = vunpack.c.l.b16 %v1322
        %v1430 = vunpack.c.h.b16 %v1322
        %v1431 = vunpack.c.l.b16 %v1323
        %v1432 = vunpack.c.h.b16 %v1323
        %v1433 = vpack.c.b16 %v1371, %v1369
        %v1434 = vpack.c.b16 %v1372, %v1370
        %v1435 = vpack.c.b16 %v1375, %v1373
        %v1436 = vpack.c.b16 %v1376, %v1374
        %v1437 = vpack.c.b16 %v1379, %v1377
        %v1438 = vpack.c.b16 %v1380, %v1378
        %v1439 = vpack.c.b16 %v1383, %v1381
        %v1440 = vpack.c.b16 %v1384, %v1382
        %v1441 = vpack.c.b16 %v1387, %v1385
        %v1442 = vpack.c.b16 %v1388, %v1386
        %v1443 = vpack.c.b16 %v1391, %v1389
        %v1444 = vpack.c.b16 %v1392, %v1390
        %v1445 = vpack.c.b16 %v1395, %v1393
        %v1446 = vpack.c.b16 %v1396, %v1394
        %v1447 = vpack.c.b16 %v1399, %v1397
        %v1448 = vpack.c.b16 %v1400, %v1398
        %v1449 = vpack.c.b16 %v1403, %v1401
        %v1450 = vpack.c.b16 %v1404, %v1402
        %v1451 = vpack.c.b16 %v1407, %v1405
        %v1452 = vpack.c.b16 %v1408, %v1406
        %v1453 = vpack.c.b16 %v1411, %v1409
        %v1454 = vpack.c.b16 %v1412, %v1410
        %v1455 = vpack.c.b16 %v1415, %v1413
        %v1456 = vpack.c.b16 %v1416, %v1414
        %v1457 = vpack.c.b16 %v1419, %v1417
        %v1458 = vpack.c.b16 %v1420, %v1418
        %v1459 = vpack.c.b16 %v1423, %v1421
        %v1460 = vpack.c.b16 %v1424, %v1422
        %v1461 = vpack.c.b16 %v1427, %v1425
        %v1462 = vpack.c.b16 %v1428, %v1426
        %v1463 = vpack.c.b16 %v1431, %v1429
        %v1464 = vpack.c.b16 %v1432, %v1430
        %1497 = vmatprep.subr.bf16.mxu0 %v1448
        %1498 = vmatpush1.bf16.msra.mxu0 %v1447
        %1499 = vmatprep.subr.bf16.mxu0 %v1446
        %1500 = vmatpush1.bf16.msra.mxu0 %v1445
        %1501 = vmatprep.subr.bf16.mxu0 %v1444
        %1502 = vmatpush1.bf16.msra.mxu0 %v1443
        %1503 = vmatprep.subr.bf16.mxu0 %v1442
        %1504 = vmatpush1.bf16.msra.mxu0 %v1441
        %1505 = vmatprep.subr.bf16.mxu0 %v1440
        %1506 = vmatpush1.bf16.msra.mxu0 %v1439
        %1507 = vmatprep.subr.bf16.mxu0 %v1438
        %1508 = vmatpush1.bf16.msra.mxu0 %v1437
        %1509 = vmatprep.subr.bf16.mxu0 %v1436
        %1510 = vmatpush1.bf16.msra.mxu0 %v1435
        %1511 = vmatprep.subr.bf16.mxu0 %v1434
        %1512 = vmatpush1.bf16.msra.mxu0 %v1433
        %1513 = vmatprep.subr.bf16.mxu0 %v1464
        %1514 = vmatpush2.bf16.msra.mxu0 %v1463
        %1515 = vmatprep.subr.bf16.mxu0 %v1462
        %1516 = vmatpush2.bf16.msra.mxu0 %v1461
        %1517 = vmatprep.subr.bf16.mxu0 %v1460
        %1518 = vmatpush2.bf16.msra.mxu0 %v1459
        %1519 = vmatprep.subr.bf16.mxu0 %v1458
        %1520 = vmatpush2.bf16.msra.mxu0 %v1457
        %1521 = vmatprep.subr.bf16.mxu0 %v1456
        %1522 = vmatpush2.bf16.msra.mxu0 %v1455
        %1523 = vmatprep.subr.bf16.mxu0 %v1454
        %1524 = vmatpush2.bf16.msra.mxu0 %v1453
        %1525 = vmatprep.subr.bf16.mxu0 %v1452
        %1526 = vmatpush2.bf16.msra.mxu0 %v1451
        %1527 = vmatprep.subr.bf16.mxu0 %v1450
        %1528 = vmatpush2.bf16.msra.mxu0 %v1449
        %1529 = vmatprep.mubr.bf16.mxu0 %v1261
        %1530 = vmatmul.mubr.bf16.gmra.mxu0 %v1260
        %v1531 = vpop.f32.mrf.mxu0
        %v1532 = vadd.f32 %v1330, %v1531
        %v1533 = vpop.f32.mrf.mxu0
        %v1534 = vadd.f32 %v1334, %v1533
        %v1535 = vpop.f32.mrf.mxu0
        %v1536 = vadd.f32 %v1330, %v1535
        %v1537 = vpop.f32.mrf.mxu0
        %v1538 = vadd.f32 %v1334, %v1537
        %1539 = vmatprep.mubr.bf16.mxu0 %v1263
        %1540 = vmatmul.mubr.bf16.gmra.mxu0 %v1262
        %v1541 = vpop.f32.mrf.mxu0
        %v1542 = vadd.f32 %v1330, %v1541
        %v1543 = vpop.f32.mrf.mxu0
        %v1544 = vadd.f32 %v1334, %v1543
        %v1545 = vpop.f32.mrf.mxu0
        %v1546 = vadd.f32 %v1330, %v1545
        %v1547 = vpop.f32.mrf.mxu0
        %v1548 = vadd.f32 %v1334, %v1547
        %1549 = vmatprep.mubr.bf16.mxu0 %v1265
        %1550 = vmatmul.mubr.bf16.gmra.mxu0 %v1264
        %v1551 = vpop.f32.mrf.mxu0
        %v1552 = vadd.f32 %v1330, %v1551
        %v1553 = vpop.f32.mrf.mxu0
        %v1554 = vadd.f32 %v1334, %v1553
        %v1555 = vpop.f32.mrf.mxu0
        %v1556 = vadd.f32 %v1330, %v1555
        %v1557 = vpop.f32.mrf.mxu0
        %v1558 = vadd.f32 %v1334, %v1557
        %1559 = vmatprep.mubr.bf16.mxu0 %v1267
        %1560 = vmatmul.mubr.bf16.gmra.mxu0 %v1266
        %v1561 = vpop.f32.mrf.mxu0
        %v1562 = vadd.f32 %v1330, %v1561
        %v1563 = vpop.f32.mrf.mxu0
        %v1564 = vadd.f32 %v1334, %v1563
        %v1565 = vpop.f32.mrf.mxu0
        %v1566 = vadd.f32 %v1330, %v1565
        %v1567 = vpop.f32.mrf.mxu0
        %v1568 = vadd.f32 %v1334, %v1567
        %1569 = vmatprep.mubr.bf16.mxu0 %v1269
        %1570 = vmatmul.mubr.bf16.gmra.mxu0 %v1268
        %v1571 = vpop.f32.mrf.mxu0
        %v1572 = vadd.f32 %v1330, %v1571
        %v1573 = vpop.f32.mrf.mxu0
        %v1574 = vadd.f32 %v1334, %v1573
        %v1575 = vpop.f32.mrf.mxu0
        %v1576 = vadd.f32 %v1330, %v1575
        %v1577 = vpop.f32.mrf.mxu0
        %v1578 = vadd.f32 %v1334, %v1577
        %1579 = vmatprep.mubr.bf16.mxu0 %v1271
        %1580 = vmatmul.mubr.bf16.gmra.mxu0 %v1270
        %v1581 = vpop.f32.mrf.mxu0
        %v1582 = vadd.f32 %v1330, %v1581
        %v1583 = vpop.f32.mrf.mxu0
        %v1584 = vadd.f32 %v1334, %v1583
        %v1585 = vpop.f32.mrf.mxu0
        %v1586 = vadd.f32 %v1330, %v1585
        %v1587 = vpop.f32.mrf.mxu0
        %v1588 = vadd.f32 %v1334, %v1587
        %1589 = vmatprep.mubr.bf16.mxu0 %v1273
        %1590 = vmatmul.mubr.bf16.gmra.mxu0 %v1272
        %v1591 = vpop.f32.mrf.mxu0
        %v1592 = vadd.f32 %v1330, %v1591
        %v1593 = vpop.f32.mrf.mxu0
        %v1594 = vadd.f32 %v1334, %v1593
        %v1595 = vpop.f32.mrf.mxu0
        %v1596 = vadd.f32 %v1330, %v1595
        %v1597 = vpop.f32.mrf.mxu0
        %v1598 = vadd.f32 %v1334, %v1597
        %1599 = vmatprep.mubr.bf16.mxu0 %v1275
        %1600 = vmatmul.mubr.bf16.gmra.mxu0 %v1274
        %v1601 = vpop.f32.mrf.mxu0
        %v1602 = vadd.f32 %v1330, %v1601
        %v1603 = vpop.f32.mrf.mxu0
        %v1604 = vadd.f32 %v1334, %v1603
        %v1605 = vpop.f32.mrf.mxu0
        %v1606 = vadd.f32 %v1330, %v1605
        %v1607 = vpop.f32.mrf.mxu0
        %v1608 = vadd.f32 %v1334, %v1607
        %1609 = vmatprep.mubr.bf16.mxu0 %v1277
        %1610 = vmatmul.mubr.bf16.gmra.mxu0 %v1276
        %v1611 = vpop.f32.mrf.mxu0
        %v1612 = vadd.f32 %v1330, %v1611
        %v1613 = vpop.f32.mrf.mxu0
        %v1614 = vadd.f32 %v1334, %v1613
        %v1615 = vpop.f32.mrf.mxu0
        %v1616 = vadd.f32 %v1330, %v1615
        %v1617 = vpop.f32.mrf.mxu0
        %v1618 = vadd.f32 %v1334, %v1617
        %1619 = vmatprep.mubr.bf16.mxu0 %v1279
        %1620 = vmatmul.mubr.bf16.gmra.mxu0 %v1278
        %v1621 = vpop.f32.mrf.mxu0
        %v1622 = vadd.f32 %v1330, %v1621
        %v1623 = vpop.f32.mrf.mxu0
        %v1624 = vadd.f32 %v1334, %v1623
        %v1625 = vpop.f32.mrf.mxu0
        %v1626 = vadd.f32 %v1330, %v1625
        %v1627 = vpop.f32.mrf.mxu0
        %v1628 = vadd.f32 %v1334, %v1627
        %1629 = vmatprep.mubr.bf16.mxu0 %v1281
        %1630 = vmatmul.mubr.bf16.gmra.mxu0 %v1280
        %v1631 = vpop.f32.mrf.mxu0
        %v1632 = vadd.f32 %v1330, %v1631
        %v1633 = vpop.f32.mrf.mxu0
        %v1634 = vadd.f32 %v1334, %v1633
        %v1635 = vpop.f32.mrf.mxu0
        %v1636 = vadd.f32 %v1330, %v1635
        %v1637 = vpop.f32.mrf.mxu0
        %v1638 = vadd.f32 %v1334, %v1637
        %1639 = vmatprep.mubr.bf16.mxu0 %v1283
        %1640 = vmatmul.mubr.bf16.gmra.mxu0 %v1282
        %v1641 = vpop.f32.mrf.mxu0
        %v1642 = vadd.f32 %v1330, %v1641
        %v1643 = vpop.f32.mrf.mxu0
        %v1644 = vadd.f32 %v1334, %v1643
        %v1645 = vpop.f32.mrf.mxu0
        %v1646 = vadd.f32 %v1330, %v1645
        %v1647 = vpop.f32.mrf.mxu0
        %v1648 = vadd.f32 %v1334, %v1647
        %1649 = vmatprep.mubr.bf16.mxu0 %v1285
        %1650 = vmatmul.mubr.bf16.gmra.mxu0 %v1284
        %v1651 = vpop.f32.mrf.mxu0
        %v1652 = vadd.f32 %v1330, %v1651
        %v1653 = vpop.f32.mrf.mxu0
        %v1654 = vadd.f32 %v1334, %v1653
        %v1655 = vpop.f32.mrf.mxu0
        %v1656 = vadd.f32 %v1330, %v1655
        %v1657 = vpop.f32.mrf.mxu0
        %v1658 = vadd.f32 %v1334, %v1657
        %1659 = vmatprep.mubr.bf16.mxu0 %v1287
        %1660 = vmatmul.mubr.bf16.gmra.mxu0 %v1286
        %v1661 = vpop.f32.mrf.mxu0
        %v1662 = vadd.f32 %v1330, %v1661
        %v1663 = vpop.f32.mrf.mxu0
        %v1664 = vadd.f32 %v1334, %v1663
        %v1665 = vpop.f32.mrf.mxu0
        %v1666 = vadd.f32 %v1330, %v1665
        %v1667 = vpop.f32.mrf.mxu0
        %v1668 = vadd.f32 %v1334, %v1667
        %1669 = vmatprep.mubr.bf16.mxu0 %v1289
        %1670 = vmatmul.mubr.bf16.gmra.mxu0 %v1288
        %v1671 = vpop.f32.mrf.mxu0
        %v1672 = vadd.f32 %v1330, %v1671
        %v1673 = vpop.f32.mrf.mxu0
        %v1674 = vadd.f32 %v1334, %v1673
        %v1675 = vpop.f32.mrf.mxu0
        %v1676 = vadd.f32 %v1330, %v1675
        %v1677 = vpop.f32.mrf.mxu0
        %v1678 = vadd.f32 %v1334, %v1677
        %1679 = vmatprep.mubr.bf16.mxu0 %v1291
        %1680 = vmatmul.mubr.bf16.gmra.mxu0 %v1290
        %v1681 = vpop.f32.mrf.mxu0
        %v1682 = vadd.f32 %v1330, %v1681
        %v1683 = vpop.f32.mrf.mxu0
        %v1684 = vadd.f32 %v1334, %v1683
        %v1685 = vpop.f32.mrf.mxu0
        %v1686 = vadd.f32 %v1330, %v1685
        %v1687 = vpop.f32.mrf.mxu0
        %v1688 = vadd.f32 %v1334, %v1687
        %1689 = vdwg.mxu0
        %v1690 = vmax.f32 %v1532, 0.0
        %v1691 = vmax.f32 %v1534, 0.0
        %v1692 = vmax.f32 %v1536, 0.0
        %v1693 = vmax.f32 %v1538, 0.0
        %v1694 = vmax.f32 %v1542, 0.0
        %v1695 = vmax.f32 %v1544, 0.0
        %v1696 = vmax.f32 %v1546, 0.0
        %v1697 = vmax.f32 %v1548, 0.0
        %v1698 = vmax.f32 %v1552, 0.0
        %v1699 = vmax.f32 %v1554, 0.0
        %v1700 = vmax.f32 %v1556, 0.0
        %v1701 = vmax.f32 %v1558, 0.0
        %v1702 = vmax.f32 %v1562, 0.0
        %v1703 = vmax.f32 %v1564, 0.0
        %v1704 = vmax.f32 %v1566, 0.0
        %v1705 = vmax.f32 %v1568, 0.0
        %v1706 = vmax.f32 %v1572, 0.0
        %v1707 = vmax.f32 %v1574, 0.0
        %v1708 = vmax.f32 %v1576, 0.0
        %v1709 = vmax.f32 %v1578, 0.0
        %v1710 = vmax.f32 %v1582, 0.0
        %v1711 = vmax.f32 %v1584, 0.0
        %v1712 = vmax.f32 %v1586, 0.0
        %v1713 = vmax.f32 %v1588, 0.0
        %v1714 = vmax.f32 %v1592, 0.0
        %v1715 = vmax.f32 %v1594, 0.0
        %v1716 = vmax.f32 %v1596, 0.0
        %v1717 = vmax.f32 %v1598, 0.0
        %v1718 = vmax.f32 %v1602, 0.0
        %v1719 = vmax.f32 %v1604, 0.0
        %v1720 = vmax.f32 %v1606, 0.0
        %v1721 = vmax.f32 %v1608, 0.0
        %v1722 = vmax.f32 %v1612, 0.0
        %v1723 = vmax.f32 %v1614, 0.0
        %v1724 = vmax.f32 %v1616, 0.0
        %v1725 = vmax.f32 %v1618, 0.0
        %v1726 = vmax.f32 %v1622, 0.0
        %v1727 = vmax.f32 %v1624, 0.0
        %v1728 = vmax.f32 %v1626, 0.0
        %v1729 = vmax.f32 %v1628, 0.0
        %v1730 = vmax.f32 %v1632, 0.0
        %v1731 = vmax.f32 %v1634, 0.0
        %v1732 = vmax.f32 %v1636, 0.0
        %v1733 = vmax.f32 %v1638, 0.0
        %v1734 = vmax.f32 %v1642, 0.0
        %v1735 = vmax.f32 %v1644, 0.0
        %v1736 = vmax.f32 %v1646, 0.0
        %v1737 = vmax.f32 %v1648, 0.0
        %v1738 = vmax.f32 %v1652, 0.0
        %v1739 = vmax.f32 %v1654, 0.0
        %v1740 = vmax.f32 %v1656, 0.0
        %v1741 = vmax.f32 %v1658, 0.0
        %v1742 = vmax.f32 %v1662, 0.0
        %v1743 = vmax.f32 %v1664, 0.0
        %v1744 = vmax.f32 %v1666, 0.0
        %v1745 = vmax.f32 %v1668, 0.0
        %v1746 = vmax.f32 %v1672, 0.0
        %v1747 = vmax.f32 %v1674, 0.0
        %v1748 = vmax.f32 %v1676, 0.0
        %v1749 = vmax.f32 %v1678, 0.0
        %v1750 = vmax.f32 %v1682, 0.0
        %v1751 = vmax.f32 %v1684, 0.0
        %v1752 = vmax.f32 %v1686, 0.0
        %v1753 = vmax.f32 %v1688, 0.0
        %v1754 = vpack.c.bf16 %v1692, %v1690
        %v1755 = vpack.c.bf16 %v1693, %v1691
        %v1756 = vpack.c.bf16 %v1696, %v1694
        %v1757 = vpack.c.bf16 %v1697, %v1695
        %v1758 = vpack.c.bf16 %v1700, %v1698
        %v1759 = vpack.c.bf16 %v1701, %v1699
        %v1760 = vpack.c.bf16 %v1704, %v1702
        %v1761 = vpack.c.bf16 %v1705, %v1703
        %v1762 = vpack.c.bf16 %v1708, %v1706
        %v1763 = vpack.c.bf16 %v1709, %v1707
        %v1764 = vpack.c.bf16 %v1712, %v1710
        %v1765 = vpack.c.bf16 %v1713, %v1711
        %v1766 = vpack.c.bf16 %v1716, %v1714
        %v1767 = vpack.c.bf16 %v1717, %v1715
        %v1768 = vpack.c.bf16 %v1720, %v1718
        %v1769 = vpack.c.bf16 %v1721, %v1719
        %v1770 = vpack.c.bf16 %v1724, %v1722
        %v1771 = vpack.c.bf16 %v1725, %v1723
        %v1772 = vpack.c.bf16 %v1728, %v1726
        %v1773 = vpack.c.bf16 %v1729, %v1727
        %v1774 = vpack.c.bf16 %v1732, %v1730
        %v1775 = vpack.c.bf16 %v1733, %v1731
        %v1776 = vpack.c.bf16 %v1736, %v1734
        %v1777 = vpack.c.bf16 %v1737, %v1735
        %v1778 = vpack.c.bf16 %v1740, %v1738
        %v1779 = vpack.c.bf16 %v1741, %v1739
        %v1780 = vpack.c.bf16 %v1744, %v1742
        %v1781 = vpack.c.bf16 %v1745, %v1743
        %v1782 = vpack.c.bf16 %v1748, %v1746
        %v1783 = vpack.c.bf16 %v1749, %v1747
        %v1784 = vpack.c.bf16 %v1752, %v1750
        %v1785 = vpack.c.bf16 %v1753, %v1751
        %s1786 = scalar_lea.vmem [#allocation2], 256
        %v1787 = vld [vmem:[%s1786] sm:$0xff]
        %v1788 = vld [vmem:[%s1786 + $0x8] sm:$0xff]
        %v1789 = vld [vmem:[%s1786 + $0x10] sm:$0xff]
        %v1790 = vld [vmem:[%s1786 + $0x18] sm:$0xff]
        %v1791 = vld [vmem:[%s1786 + $0x20] sm:$0xff]
        %v1792 = vld [vmem:[%s1786 + $0x28] sm:$0xff]
        %v1793 = vld [vmem:[%s1786 + $0x30] sm:$0xff]
        %v1794 = vld [vmem:[%s1786 + $0x38] sm:$0xff]
        %v1795 = vld [vmem:[%s1786 + $0x40] sm:$0xff]
        %v1796 = vld [vmem:[%s1786 + $0x48] sm:$0xff]
        %v1797 = vld [vmem:[%s1786 + $0x50] sm:$0xff]
        %v1798 = vld [vmem:[%s1786 + $0x58] sm:$0xff]
        %v1799 = vld [vmem:[%s1786 + $0x60] sm:$0xff]
        %v1800 = vld [vmem:[%s1786 + $0x68] sm:$0xff]
        %v1801 = vld [vmem:[%s1786 + $0x70] sm:$0xff]
        %v1802 = vld [vmem:[%s1786 + $0x78] sm:$0xff]
        %v1803 = vld [vmem:[%s1786 + $0x80] sm:$0xff]
        %v1804 = vld [vmem:[%s1786 + $0x88] sm:$0xff]
        %v1805 = vld [vmem:[%s1786 + $0x90] sm:$0xff]
        %v1806 = vld [vmem:[%s1786 + $0x98] sm:$0xff]
        %v1807 = vld [vmem:[%s1786 + $0xa0] sm:$0xff]
        %v1808 = vld [vmem:[%s1786 + $0xa8] sm:$0xff]
        %v1809 = vld [vmem:[%s1786 + $0xb0] sm:$0xff]
        %v1810 = vld [vmem:[%s1786 + $0xb8] sm:$0xff]
        %v1811 = vld [vmem:[%s1786 + $0xc0] sm:$0xff]
        %v1812 = vld [vmem:[%s1786 + $0xc8] sm:$0xff]
        %v1813 = vld [vmem:[%s1786 + $0xd0] sm:$0xff]
        %v1814 = vld [vmem:[%s1786 + $0xd8] sm:$0xff]
        %v1815 = vld [vmem:[%s1786 + $0xe0] sm:$0xff]
        %v1816 = vld [vmem:[%s1786 + $0xe8] sm:$0xff]
        %v1817 = vld [vmem:[%s1786 + $0xf0] sm:$0xff]
        %v1818 = vld [vmem:[%s1786 + $0xf8] sm:$0xff]
        %s1819 = scalar_lea.vmem %s4, 2
        %v1820 = vld [vmem:[%s1819] ss:$8 sm:$0x3]
        %v1822 = vlaneseq
        %v1823 = vshrl.u32 %v1822, 7
        %v1824 = vsub.s32 0, %v1823
        %v1825 = vrot.slane %v1820, %v1824
        %v1826 = vlaneseq
        %v1827 = vshrl.u32 %v1826, 7
        %v1828 = vsub.s32 1, %v1827
        %v1829 = vrot.slane %v1820, %v1828
        %v1864 = vunpack.c.l.b16 %v1787
        %v1865 = vunpack.c.h.b16 %v1787
        %v1866 = vunpack.c.l.b16 %v1788
        %v1867 = vunpack.c.h.b16 %v1788
        %v1868 = vunpack.c.l.b16 %v1789
        %v1869 = vunpack.c.h.b16 %v1789
        %v1870 = vunpack.c.l.b16 %v1790
        %v1871 = vunpack.c.h.b16 %v1790
        %v1872 = vunpack.c.l.b16 %v1791
        %v1873 = vunpack.c.h.b16 %v1791
        %v1874 = vunpack.c.l.b16 %v1792
        %v1875 = vunpack.c.h.b16 %v1792
        %v1876 = vunpack.c.l.b16 %v1793
        %v1877 = vunpack.c.h.b16 %v1793
        %v1878 = vunpack.c.l.b16 %v1794
        %v1879 = vunpack.c.h.b16 %v1794
        %v1880 = vunpack.c.l.b16 %v1795
        %v1881 = vunpack.c.h.b16 %v1795
        %v1882 = vunpack.c.l.b16 %v1796
        %v1883 = vunpack.c.h.b16 %v1796
        %v1884 = vunpack.c.l.b16 %v1797
        %v1885 = vunpack.c.h.b16 %v1797
        %v1886 = vunpack.c.l.b16 %v1798
        %v1887 = vunpack.c.h.b16 %v1798
        %v1888 = vunpack.c.l.b16 %v1799
        %v1889 = vunpack.c.h.b16 %v1799
        %v1890 = vunpack.c.l.b16 %v1800
        %v1891 = vunpack.c.h.b16 %v1800
        %v1892 = vunpack.c.l.b16 %v1801
        %v1893 = vunpack.c.h.b16 %v1801
        %v1894 = vunpack.c.l.b16 %v1802
        %v1895 = vunpack.c.h.b16 %v1802
        %v1896 = vunpack.c.l.b16 %v1803
        %v1897 = vunpack.c.h.b16 %v1803
        %v1898 = vunpack.c.l.b16 %v1804
        %v1899 = vunpack.c.h.b16 %v1804
        %v1900 = vunpack.c.l.b16 %v1805
        %v1901 = vunpack.c.h.b16 %v1805
        %v1902 = vunpack.c.l.b16 %v1806
        %v1903 = vunpack.c.h.b16 %v1806
        %v1904 = vunpack.c.l.b16 %v1807
        %v1905 = vunpack.c.h.b16 %v1807
        %v1906 = vunpack.c.l.b16 %v1808
        %v1907 = vunpack.c.h.b16 %v1808
        %v1908 = vunpack.c.l.b16 %v1809
        %v1909 = vunpack.c.h.b16 %v1809
        %v1910 = vunpack.c.l.b16 %v1810
        %v1911 = vunpack.c.h.b16 %v1810
        %v1912 = vunpack.c.l.b16 %v1811
        %v1913 = vunpack.c.h.b16 %v1811
        %v1914 = vunpack.c.l.b16 %v1812
        %v1915 = vunpack.c.h.b16 %v1812
        %v1916 = vunpack.c.l.b16 %v1813
        %v1917 = vunpack.c.h.b16 %v1813
        %v1918 = vunpack.c.l.b16 %v1814
        %v1919 = vunpack.c.h.b16 %v1814
        %v1920 = vunpack.c.l.b16 %v1815
        %v1921 = vunpack.c.h.b16 %v1815
        %v1922 = vunpack.c.l.b16 %v1816
        %v1923 = vunpack.c.h.b16 %v1816
        %v1924 = vunpack.c.l.b16 %v1817
        %v1925 = vunpack.c.h.b16 %v1817
        %v1926 = vunpack.c.l.b16 %v1818
        %v1927 = vunpack.c.h.b16 %v1818
        %v1928 = vpack.c.b16 %v1866, %v1864
        %v1929 = vpack.c.b16 %v1867, %v1865
        %v1930 = vpack.c.b16 %v1870, %v1868
        %v1931 = vpack.c.b16 %v1871, %v1869
        %v1932 = vpack.c.b16 %v1874, %v1872
        %v1933 = vpack.c.b16 %v1875, %v1873
        %v1934 = vpack.c.b16 %v1878, %v1876
        %v1935 = vpack.c.b16 %v1879, %v1877
        %v1936 = vpack.c.b16 %v1882, %v1880
        %v1937 = vpack.c.b16 %v1883, %v1881
        %v1938 = vpack.c.b16 %v1886, %v1884
        %v1939 = vpack.c.b16 %v1887, %v1885
        %v1940 = vpack.c.b16 %v1890, %v1888
        %v1941 = vpack.c.b16 %v1891, %v1889
        %v1942 = vpack.c.b16 %v1894, %v1892
        %v1943 = vpack.c.b16 %v1895, %v1893
        %v1944 = vpack.c.b16 %v1898, %v1896
        %v1945 = vpack.c.b16 %v1899, %v1897
        %v1946 = vpack.c.b16 %v1902, %v1900
        %v1947 = vpack.c.b16 %v1903, %v1901
        %v1948 = vpack.c.b16 %v1906, %v1904
        %v1949 = vpack.c.b16 %v1907, %v1905
        %v1950 = vpack.c.b16 %v1910, %v1908
        %v1951 = vpack.c.b16 %v1911, %v1909
        %v1952 = vpack.c.b16 %v1914, %v1912
        %v1953 = vpack.c.b16 %v1915, %v1913
        %v1954 = vpack.c.b16 %v1918, %v1916
        %v1955 = vpack.c.b16 %v1919, %v1917
        %v1956 = vpack.c.b16 %v1922, %v1920
        %v1957 = vpack.c.b16 %v1923, %v1921
        %v1958 = vpack.c.b16 %v1926, %v1924
        %v1959 = vpack.c.b16 %v1927, %v1925
        %1992 = vmatprep.subr.bf16.mxu0 %v1943
        %1993 = vmatpush1.bf16.msra.mxu0 %v1942
        %1994 = vmatprep.subr.bf16.mxu0 %v1941
        %1995 = vmatpush1.bf16.msra.mxu0 %v1940
        %1996 = vmatprep.subr.bf16.mxu0 %v1939
        %1997 = vmatpush1.bf16.msra.mxu0 %v1938
        %1998 = vmatprep.subr.bf16.mxu0 %v1937
        %1999 = vmatpush1.bf16.msra.mxu0 %v1936
        %2000 = vmatprep.subr.bf16.mxu0 %v1935
        %2001 = vmatpush1.bf16.msra.mxu0 %v1934
        %2002 = vmatprep.subr.bf16.mxu0 %v1933
        %2003 = vmatpush1.bf16.msra.mxu0 %v1932
        %2004 = vmatprep.subr.bf16.mxu0 %v1931
        %2005 = vmatpush1.bf16.msra.mxu0 %v1930
        %2006 = vmatprep.subr.bf16.mxu0 %v1929
        %2007 = vmatpush1.bf16.msra.mxu0 %v1928
        %2008 = vmatprep.subr.bf16.mxu0 %v1959
        %2009 = vmatpush2.bf16.msra.mxu0 %v1958
        %2010 = vmatprep.subr.bf16.mxu0 %v1957
        %2011 = vmatpush2.bf16.msra.mxu0 %v1956
        %2012 = vmatprep.subr.bf16.mxu0 %v1955
        %2013 = vmatpush2.bf16.msra.mxu0 %v1954
        %2014 = vmatprep.subr.bf16.mxu0 %v1953
        %2015 = vmatpush2.bf16.msra.mxu0 %v1952
        %2016 = vmatprep.subr.bf16.mxu0 %v1951
        %2017 = vmatpush2.bf16.msra.mxu0 %v1950
        %2018 = vmatprep.subr.bf16.mxu0 %v1949
        %2019 = vmatpush2.bf16.msra.mxu0 %v1948
        %2020 = vmatprep.subr.bf16.mxu0 %v1947
        %2021 = vmatpush2.bf16.msra.mxu0 %v1946
        %2022 = vmatprep.subr.bf16.mxu0 %v1945
        %2023 = vmatpush2.bf16.msra.mxu0 %v1944
        %2024 = vmatprep.mubr.bf16.mxu0 %v1755
        %2025 = vmatmul.mubr.bf16.gmra.mxu0 %v1754
        %v2026 = vpop.f32.mrf.mxu0
        %v2027 = vadd.f32 %v1825, %v2026
        %v2028 = vpop.f32.mrf.mxu0
        %v2029 = vadd.f32 %v1829, %v2028
        %v2030 = vpop.f32.mrf.mxu0
        %v2031 = vadd.f32 %v1825, %v2030
        %v2032 = vpop.f32.mrf.mxu0
        %v2033 = vadd.f32 %v1829, %v2032
        %2034 = vmatprep.mubr.bf16.mxu0 %v1757
        %2035 = vmatmul.mubr.bf16.gmra.mxu0 %v1756
        %v2036 = vpop.f32.mrf.mxu0
        %v2037 = vadd.f32 %v1825, %v2036
        %v2038 = vpop.f32.mrf.mxu0
        %v2039 = vadd.f32 %v1829, %v2038
        %v2040 = vpop.f32.mrf.mxu0
        %v2041 = vadd.f32 %v1825, %v2040
        %v2042 = vpop.f32.mrf.mxu0
        %v2043 = vadd.f32 %v1829, %v2042
        %2044 = vmatprep.mubr.bf16.mxu0 %v1759
        %2045 = vmatmul.mubr.bf16.gmra.mxu0 %v1758
        %v2046 = vpop.f32.mrf.mxu0
        %v2047 = vadd.f32 %v1825, %v2046
        %v2048 = vpop.f32.mrf.mxu0
        %v2049 = vadd.f32 %v1829, %v2048
        %v2050 = vpop.f32.mrf.mxu0
        %v2051 = vadd.f32 %v1825, %v2050
        %v2052 = vpop.f32.mrf.mxu0
        %v2053 = vadd.f32 %v1829, %v2052
        %2054 = vmatprep.mubr.bf16.mxu0 %v1761
        %2055 = vmatmul.mubr.bf16.gmra.mxu0 %v1760
        %v2056 = vpop.f32.mrf.mxu0
        %v2057 = vadd.f32 %v1825, %v2056
        %v2058 = vpop.f32.mrf.mxu0
        %v2059 = vadd.f32 %v1829, %v2058
        %v2060 = vpop.f32.mrf.mxu0
        %v2061 = vadd.f32 %v1825, %v2060
        %v2062 = vpop.f32.mrf.mxu0
        %v2063 = vadd.f32 %v1829, %v2062
        %2064 = vmatprep.mubr.bf16.mxu0 %v1763
        %2065 = vmatmul.mubr.bf16.gmra.mxu0 %v1762
        %v2066 = vpop.f32.mrf.mxu0
        %v2067 = vadd.f32 %v1825, %v2066
        %v2068 = vpop.f32.mrf.mxu0
        %v2069 = vadd.f32 %v1829, %v2068
        %v2070 = vpop.f32.mrf.mxu0
        %v2071 = vadd.f32 %v1825, %v2070
        %v2072 = vpop.f32.mrf.mxu0
        %v2073 = vadd.f32 %v1829, %v2072
        %2074 = vmatprep.mubr.bf16.mxu0 %v1765
        %2075 = vmatmul.mubr.bf16.gmra.mxu0 %v1764
        %v2076 = vpop.f32.mrf.mxu0
        %v2077 = vadd.f32 %v1825, %v2076
        %v2078 = vpop.f32.mrf.mxu0
        %v2079 = vadd.f32 %v1829, %v2078
        %v2080 = vpop.f32.mrf.mxu0
        %v2081 = vadd.f32 %v1825, %v2080
        %v2082 = vpop.f32.mrf.mxu0
        %v2083 = vadd.f32 %v1829, %v2082
        %2084 = vmatprep.mubr.bf16.mxu0 %v1767
        %2085 = vmatmul.mubr.bf16.gmra.mxu0 %v1766
        %v2086 = vpop.f32.mrf.mxu0
        %v2087 = vadd.f32 %v1825, %v2086
        %v2088 = vpop.f32.mrf.mxu0
        %v2089 = vadd.f32 %v1829, %v2088
        %v2090 = vpop.f32.mrf.mxu0
        %v2091 = vadd.f32 %v1825, %v2090
        %v2092 = vpop.f32.mrf.mxu0
        %v2093 = vadd.f32 %v1829, %v2092
        %2094 = vmatprep.mubr.bf16.mxu0 %v1769
        %2095 = vmatmul.mubr.bf16.gmra.mxu0 %v1768
        %v2096 = vpop.f32.mrf.mxu0
        %v2097 = vadd.f32 %v1825, %v2096
        %v2098 = vpop.f32.mrf.mxu0
        %v2099 = vadd.f32 %v1829, %v2098
        %v2100 = vpop.f32.mrf.mxu0
        %v2101 = vadd.f32 %v1825, %v2100
        %v2102 = vpop.f32.mrf.mxu0
        %v2103 = vadd.f32 %v1829, %v2102
        %2104 = vmatprep.mubr.bf16.mxu0 %v1771
        %2105 = vmatmul.mubr.bf16.gmra.mxu0 %v1770
        %v2106 = vpop.f32.mrf.mxu0
        %v2107 = vadd.f32 %v1825, %v2106
        %v2108 = vpop.f32.mrf.mxu0
        %v2109 = vadd.f32 %v1829, %v2108
        %v2110 = vpop.f32.mrf.mxu0
        %v2111 = vadd.f32 %v1825, %v2110
        %v2112 = vpop.f32.mrf.mxu0
        %v2113 = vadd.f32 %v1829, %v2112
        %2114 = vmatprep.mubr.bf16.mxu0 %v1773
        %2115 = vmatmul.mubr.bf16.gmra.mxu0 %v1772
        %v2116 = vpop.f32.mrf.mxu0
        %v2117 = vadd.f32 %v1825, %v2116
        %v2118 = vpop.f32.mrf.mxu0
        %v2119 = vadd.f32 %v1829, %v2118
        %v2120 = vpop.f32.mrf.mxu0
        %v2121 = vadd.f32 %v1825, %v2120
        %v2122 = vpop.f32.mrf.mxu0
        %v2123 = vadd.f32 %v1829, %v2122
        %2124 = vmatprep.mubr.bf16.mxu0 %v1775
        %2125 = vmatmul.mubr.bf16.gmra.mxu0 %v1774
        %v2126 = vpop.f32.mrf.mxu0
        %v2127 = vadd.f32 %v1825, %v2126
        %v2128 = vpop.f32.mrf.mxu0
        %v2129 = vadd.f32 %v1829, %v2128
        %v2130 = vpop.f32.mrf.mxu0
        %v2131 = vadd.f32 %v1825, %v2130
        %v2132 = vpop.f32.mrf.mxu0
        %v2133 = vadd.f32 %v1829, %v2132
        %2134 = vmatprep.mubr.bf16.mxu0 %v1777
        %2135 = vmatmul.mubr.bf16.gmra.mxu0 %v1776
        %v2136 = vpop.f32.mrf.mxu0
        %v2137 = vadd.f32 %v1825, %v2136
        %v2138 = vpop.f32.mrf.mxu0
        %v2139 = vadd.f32 %v1829, %v2138
        %v2140 = vpop.f32.mrf.mxu0
        %v2141 = vadd.f32 %v1825, %v2140
        %v2142 = vpop.f32.mrf.mxu0
        %v2143 = vadd.f32 %v1829, %v2142
        %2144 = vmatprep.mubr.bf16.mxu0 %v1779
        %2145 = vmatmul.mubr.bf16.gmra.mxu0 %v1778
        %v2146 = vpop.f32.mrf.mxu0
        %v2147 = vadd.f32 %v1825, %v2146
        %v2148 = vpop.f32.mrf.mxu0
        %v2149 = vadd.f32 %v1829, %v2148
        %v2150 = vpop.f32.mrf.mxu0
        %v2151 = vadd.f32 %v1825, %v2150
        %v2152 = vpop.f32.mrf.mxu0
        %v2153 = vadd.f32 %v1829, %v2152
        %2154 = vmatprep.mubr.bf16.mxu0 %v1781
        %2155 = vmatmul.mubr.bf16.gmra.mxu0 %v1780
        %v2156 = vpop.f32.mrf.mxu0
        %v2157 = vadd.f32 %v1825, %v2156
        %v2158 = vpop.f32.mrf.mxu0
        %v2159 = vadd.f32 %v1829, %v2158
        %v2160 = vpop.f32.mrf.mxu0
        %v2161 = vadd.f32 %v1825, %v2160
        %v2162 = vpop.f32.mrf.mxu0
        %v2163 = vadd.f32 %v1829, %v2162
        %2164 = vmatprep.mubr.bf16.mxu0 %v1783
        %2165 = vmatmul.mubr.bf16.gmra.mxu0 %v1782
        %v2166 = vpop.f32.mrf.mxu0
        %v2167 = vadd.f32 %v1825, %v2166
        %v2168 = vpop.f32.mrf.mxu0
        %v2169 = vadd.f32 %v1829, %v2168
        %v2170 = vpop.f32.mrf.mxu0
        %v2171 = vadd.f32 %v1825, %v2170
        %v2172 = vpop.f32.mrf.mxu0
        %v2173 = vadd.f32 %v1829, %v2172
        %2174 = vmatprep.mubr.bf16.mxu0 %v1785
        %2175 = vmatmul.mubr.bf16.gmra.mxu0 %v1784
        %v2176 = vpop.f32.mrf.mxu0
        %v2177 = vadd.f32 %v1825, %v2176
        %v2178 = vpop.f32.mrf.mxu0
        %v2179 = vadd.f32 %v1829, %v2178
        %v2180 = vpop.f32.mrf.mxu0
        %v2181 = vadd.f32 %v1825, %v2180
        %v2182 = vpop.f32.mrf.mxu0
        %v2183 = vadd.f32 %v1829, %v2182
        %2184 = vdwg.mxu0
        %v2185 = vmax.f32 %v2027, 0.0
        %v2186 = vmax.f32 %v2029, 0.0
        %v2187 = vmax.f32 %v2031, 0.0
        %v2188 = vmax.f32 %v2033, 0.0
        %v2189 = vmax.f32 %v2037, 0.0
        %v2190 = vmax.f32 %v2039, 0.0
        %v2191 = vmax.f32 %v2041, 0.0
        %v2192 = vmax.f32 %v2043, 0.0
        %v2193 = vmax.f32 %v2047, 0.0
        %v2194 = vmax.f32 %v2049, 0.0
        %v2195 = vmax.f32 %v2051, 0.0
        %v2196 = vmax.f32 %v2053, 0.0
        %v2197 = vmax.f32 %v2057, 0.0
        %v2198 = vmax.f32 %v2059, 0.0
        %v2199 = vmax.f32 %v2061, 0.0
        %v2200 = vmax.f32 %v2063, 0.0
        %v2201 = vmax.f32 %v2067, 0.0
        %v2202 = vmax.f32 %v2069, 0.0
        %v2203 = vmax.f32 %v2071, 0.0
        %v2204 = vmax.f32 %v2073, 0.0
        %v2205 = vmax.f32 %v2077, 0.0
        %v2206 = vmax.f32 %v2079, 0.0
        %v2207 = vmax.f32 %v2081, 0.0
        %v2208 = vmax.f32 %v2083, 0.0
        %v2209 = vmax.f32 %v2087, 0.0
        %v2210 = vmax.f32 %v2089, 0.0
        %v2211 = vmax.f32 %v2091, 0.0
        %v2212 = vmax.f32 %v2093, 0.0
        %v2213 = vmax.f32 %v2097, 0.0
        %v2214 = vmax.f32 %v2099, 0.0
        %v2215 = vmax.f32 %v2101, 0.0
        %v2216 = vmax.f32 %v2103, 0.0
        %v2217 = vmax.f32 %v2107, 0.0
        %v2218 = vmax.f32 %v2109, 0.0
        %v2219 = vmax.f32 %v2111, 0.0
        %v2220 = vmax.f32 %v2113, 0.0
        %v2221 = vmax.f32 %v2117, 0.0
        %v2222 = vmax.f32 %v2119, 0.0
        %v2223 = vmax.f32 %v2121, 0.0
        %v2224 = vmax.f32 %v2123, 0.0
        %v2225 = vmax.f32 %v2127, 0.0
        %v2226 = vmax.f32 %v2129, 0.0
        %v2227 = vmax.f32 %v2131, 0.0
        %v2228 = vmax.f32 %v2133, 0.0
        %v2229 = vmax.f32 %v2137, 0.0
        %v2230 = vmax.f32 %v2139, 0.0
        %v2231 = vmax.f32 %v2141, 0.0
        %v2232 = vmax.f32 %v2143, 0.0
        %v2233 = vmax.f32 %v2147, 0.0
        %v2234 = vmax.f32 %v2149, 0.0
        %v2235 = vmax.f32 %v2151, 0.0
        %v2236 = vmax.f32 %v2153, 0.0
        %v2237 = vmax.f32 %v2157, 0.0
        %v2238 = vmax.f32 %v2159, 0.0
        %v2239 = vmax.f32 %v2161, 0.0
        %v2240 = vmax.f32 %v2163, 0.0
        %v2241 = vmax.f32 %v2167, 0.0
        %v2242 = vmax.f32 %v2169, 0.0
        %v2243 = vmax.f32 %v2171, 0.0
        %v2244 = vmax.f32 %v2173, 0.0
        %v2245 = vmax.f32 %v2177, 0.0
        %v2246 = vmax.f32 %v2179, 0.0
        %v2247 = vmax.f32 %v2181, 0.0
        %v2248 = vmax.f32 %v2183, 0.0
        %v2249 = vpack.c.bf16 %v2187, %v2185
        %v2250 = vpack.c.bf16 %v2188, %v2186
        %v2251 = vpack.c.bf16 %v2191, %v2189
        %v2252 = vpack.c.bf16 %v2192, %v2190
        %v2253 = vpack.c.bf16 %v2195, %v2193
        %v2254 = vpack.c.bf16 %v2196, %v2194
        %v2255 = vpack.c.bf16 %v2199, %v2197
        %v2256 = vpack.c.bf16 %v2200, %v2198
        %v2257 = vpack.c.bf16 %v2203, %v2201
        %v2258 = vpack.c.bf16 %v2204, %v2202
        %v2259 = vpack.c.bf16 %v2207, %v2205
        %v2260 = vpack.c.bf16 %v2208, %v2206
        %v2261 = vpack.c.bf16 %v2211, %v2209
        %v2262 = vpack.c.bf16 %v2212, %v2210
        %v2263 = vpack.c.bf16 %v2215, %v2213
        %v2264 = vpack.c.bf16 %v2216, %v2214
        %v2265 = vpack.c.bf16 %v2219, %v2217
        %v2266 = vpack.c.bf16 %v2220, %v2218
        %v2267 = vpack.c.bf16 %v2223, %v2221
        %v2268 = vpack.c.bf16 %v2224, %v2222
        %v2269 = vpack.c.bf16 %v2227, %v2225
        %v2270 = vpack.c.bf16 %v2228, %v2226
        %v2271 = vpack.c.bf16 %v2231, %v2229
        %v2272 = vpack.c.bf16 %v2232, %v2230
        %v2273 = vpack.c.bf16 %v2235, %v2233
        %v2274 = vpack.c.bf16 %v2236, %v2234
        %v2275 = vpack.c.bf16 %v2239, %v2237
        %v2276 = vpack.c.bf16 %v2240, %v2238
        %v2277 = vpack.c.bf16 %v2243, %v2241
        %v2278 = vpack.c.bf16 %v2244, %v2242
        %v2279 = vpack.c.bf16 %v2247, %v2245
        %v2280 = vpack.c.bf16 %v2248, %v2246
        %s2281 = scalar_lea.vmem [#allocation2], 512
        %v2282 = vld [vmem:[%s2281] sm:$0xff]
        %v2283 = vld [vmem:[%s2281 + $0x8] sm:$0xff]
        %v2284 = vld [vmem:[%s2281 + $0x10] sm:$0xff]
        %v2285 = vld [vmem:[%s2281 + $0x18] sm:$0xff]
        %v2286 = vld [vmem:[%s2281 + $0x20] sm:$0xff]
        %v2287 = vld [vmem:[%s2281 + $0x28] sm:$0xff]
        %v2288 = vld [vmem:[%s2281 + $0x30] sm:$0xff]
        %v2289 = vld [vmem:[%s2281 + $0x38] sm:$0xff]
        %v2290 = vld [vmem:[%s2281 + $0x40] sm:$0xff]
        %v2291 = vld [vmem:[%s2281 + $0x48] sm:$0xff]
        %v2292 = vld [vmem:[%s2281 + $0x50] sm:$0xff]
        %v2293 = vld [vmem:[%s2281 + $0x58] sm:$0xff]
        %v2294 = vld [vmem:[%s2281 + $0x60] sm:$0xff]
        %v2295 = vld [vmem:[%s2281 + $0x68] sm:$0xff]
        %v2296 = vld [vmem:[%s2281 + $0x70] sm:$0xff]
        %v2297 = vld [vmem:[%s2281 + $0x78] sm:$0xff]
        %v2298 = vld [vmem:[%s2281 + $0x80] sm:$0xff]
        %v2299 = vld [vmem:[%s2281 + $0x88] sm:$0xff]
        %v2300 = vld [vmem:[%s2281 + $0x90] sm:$0xff]
        %v2301 = vld [vmem:[%s2281 + $0x98] sm:$0xff]
        %v2302 = vld [vmem:[%s2281 + $0xa0] sm:$0xff]
        %v2303 = vld [vmem:[%s2281 + $0xa8] sm:$0xff]
        %v2304 = vld [vmem:[%s2281 + $0xb0] sm:$0xff]
        %v2305 = vld [vmem:[%s2281 + $0xb8] sm:$0xff]
        %v2306 = vld [vmem:[%s2281 + $0xc0] sm:$0xff]
        %v2307 = vld [vmem:[%s2281 + $0xc8] sm:$0xff]
        %v2308 = vld [vmem:[%s2281 + $0xd0] sm:$0xff]
        %v2309 = vld [vmem:[%s2281 + $0xd8] sm:$0xff]
        %v2310 = vld [vmem:[%s2281 + $0xe0] sm:$0xff]
        %v2311 = vld [vmem:[%s2281 + $0xe8] sm:$0xff]
        %v2312 = vld [vmem:[%s2281 + $0xf0] sm:$0xff]
        %v2313 = vld [vmem:[%s2281 + $0xf8] sm:$0xff]
        %s2314 = scalar_lea.vmem %s4, 3
        %v2315 = vld [vmem:[%s2314] ss:$8 sm:$0x3]
        %v2317 = vlaneseq
        %v2318 = vshrl.u32 %v2317, 7
        %v2319 = vsub.s32 0, %v2318
        %v2320 = vrot.slane %v2315, %v2319
        %v2321 = vlaneseq
        %v2322 = vshrl.u32 %v2321, 7
        %v2323 = vsub.s32 1, %v2322
        %v2324 = vrot.slane %v2315, %v2323
        %v2359 = vunpack.c.l.b16 %v2282
        %v2360 = vunpack.c.h.b16 %v2282
        %v2361 = vunpack.c.l.b16 %v2283
        %v2362 = vunpack.c.h.b16 %v2283
        %v2363 = vunpack.c.l.b16 %v2284
        %v2364 = vunpack.c.h.b16 %v2284
        %v2365 = vunpack.c.l.b16 %v2285
        %v2366 = vunpack.c.h.b16 %v2285
        %v2367 = vunpack.c.l.b16 %v2286
        %v2368 = vunpack.c.h.b16 %v2286
        %v2369 = vunpack.c.l.b16 %v2287
        %v2370 = vunpack.c.h.b16 %v2287
        %v2371 = vunpack.c.l.b16 %v2288
        %v2372 = vunpack.c.h.b16 %v2288
        %v2373 = vunpack.c.l.b16 %v2289
        %v2374 = vunpack.c.h.b16 %v2289
        %v2375 = vunpack.c.l.b16 %v2290
        %v2376 = vunpack.c.h.b16 %v2290
        %v2377 = vunpack.c.l.b16 %v2291
        %v2378 = vunpack.c.h.b16 %v2291
        %v2379 = vunpack.c.l.b16 %v2292
        %v2380 = vunpack.c.h.b16 %v2292
        %v2381 = vunpack.c.l.b16 %v2293
        %v2382 = vunpack.c.h.b16 %v2293
        %v2383 = vunpack.c.l.b16 %v2294
        %v2384 = vunpack.c.h.b16 %v2294
        %v2385 = vunpack.c.l.b16 %v2295
        %v2386 = vunpack.c.h.b16 %v2295
        %v2387 = vunpack.c.l.b16 %v2296
        %v2388 = vunpack.c.h.b16 %v2296
        %v2389 = vunpack.c.l.b16 %v2297
        %v2390 = vunpack.c.h.b16 %v2297
        %v2391 = vunpack.c.l.b16 %v2298
        %v2392 = vunpack.c.h.b16 %v2298
        %v2393 = vunpack.c.l.b16 %v2299
        %v2394 = vunpack.c.h.b16 %v2299
        %v2395 = vunpack.c.l.b16 %v2300
        %v2396 = vunpack.c.h.b16 %v2300
        %v2397 = vunpack.c.l.b16 %v2301
        %v2398 = vunpack.c.h.b16 %v2301
        %v2399 = vunpack.c.l.b16 %v2302
        %v2400 = vunpack.c.h.b16 %v2302
        %v2401 = vunpack.c.l.b16 %v2303
        %v2402 = vunpack.c.h.b16 %v2303
        %v2403 = vunpack.c.l.b16 %v2304
        %v2404 = vunpack.c.h.b16 %v2304
        %v2405 = vunpack.c.l.b16 %v2305
        %v2406 = vunpack.c.h.b16 %v2305
        %v2407 = vunpack.c.l.b16 %v2306
        %v2408 = vunpack.c.h.b16 %v2306
        %v2409 = vunpack.c.l.b16 %v2307
        %v2410 = vunpack.c.h.b16 %v2307
        %v2411 = vunpack.c.l.b16 %v2308
        %v2412 = vunpack.c.h.b16 %v2308
        %v2413 = vunpack.c.l.b16 %v2309
        %v2414 = vunpack.c.h.b16 %v2309
        %v2415 = vunpack.c.l.b16 %v2310
        %v2416 = vunpack.c.h.b16 %v2310
        %v2417 = vunpack.c.l.b16 %v2311
        %v2418 = vunpack.c.h.b16 %v2311
        %v2419 = vunpack.c.l.b16 %v2312
        %v2420 = vunpack.c.h.b16 %v2312
        %v2421 = vunpack.c.l.b16 %v2313
        %v2422 = vunpack.c.h.b16 %v2313
        %v2423 = vpack.c.b16 %v2361, %v2359
        %v2424 = vpack.c.b16 %v2362, %v2360
        %v2425 = vpack.c.b16 %v2365, %v2363
        %v2426 = vpack.c.b16 %v2366, %v2364
        %v2427 = vpack.c.b16 %v2369, %v2367
        %v2428 = vpack.c.b16 %v2370, %v2368
        %v2429 = vpack.c.b16 %v2373, %v2371
        %v2430 = vpack.c.b16 %v2374, %v2372
        %v2431 = vpack.c.b16 %v2377, %v2375
        %v2432 = vpack.c.b16 %v2378, %v2376
        %v2433 = vpack.c.b16 %v2381, %v2379
        %v2434 = vpack.c.b16 %v2382, %v2380
        %v2435 = vpack.c.b16 %v2385, %v2383
        %v2436 = vpack.c.b16 %v2386, %v2384
        %v2437 = vpack.c.b16 %v2389, %v2387
        %v2438 = vpack.c.b16 %v2390, %v2388
        %v2439 = vpack.c.b16 %v2393, %v2391
        %v2440 = vpack.c.b16 %v2394, %v2392
        %v2441 = vpack.c.b16 %v2397, %v2395
        %v2442 = vpack.c.b16 %v2398, %v2396
        %v2443 = vpack.c.b16 %v2401, %v2399
        %v2444 = vpack.c.b16 %v2402, %v2400
        %v2445 = vpack.c.b16 %v2405, %v2403
        %v2446 = vpack.c.b16 %v2406, %v2404
        %v2447 = vpack.c.b16 %v2409, %v2407
        %v2448 = vpack.c.b16 %v2410, %v2408
        %v2449 = vpack.c.b16 %v2413, %v2411
        %v2450 = vpack.c.b16 %v2414, %v2412
        %v2451 = vpack.c.b16 %v2417, %v2415
        %v2452 = vpack.c.b16 %v2418, %v2416
        %v2453 = vpack.c.b16 %v2421, %v2419
        %v2454 = vpack.c.b16 %v2422, %v2420
        %2487 = vmatprep.subr.bf16.mxu0 %v2438
        %2488 = vmatpush1.bf16.msra.mxu0 %v2437
        %2489 = vmatprep.subr.bf16.mxu0 %v2436
        %2490 = vmatpush1.bf16.msra.mxu0 %v2435
        %2491 = vmatprep.subr.bf16.mxu0 %v2434
        %2492 = vmatpush1.bf16.msra.mxu0 %v2433
        %2493 = vmatprep.subr.bf16.mxu0 %v2432
        %2494 = vmatpush1.bf16.msra.mxu0 %v2431
        %2495 = vmatprep.subr.bf16.mxu0 %v2430
        %2496 = vmatpush1.bf16.msra.mxu0 %v2429
        %2497 = vmatprep.subr.bf16.mxu0 %v2428
        %2498 = vmatpush1.bf16.msra.mxu0 %v2427
        %2499 = vmatprep.subr.bf16.mxu0 %v2426
        %2500 = vmatpush1.bf16.msra.mxu0 %v2425
        %2501 = vmatprep.subr.bf16.mxu0 %v2424
        %2502 = vmatpush1.bf16.msra.mxu0 %v2423
        %2503 = vmatprep.subr.bf16.mxu0 %v2454
        %2504 = vmatpush2.bf16.msra.mxu0 %v2453
        %2505 = vmatprep.subr.bf16.mxu0 %v2452
        %2506 = vmatpush2.bf16.msra.mxu0 %v2451
        %2507 = vmatprep.subr.bf16.mxu0 %v2450
        %2508 = vmatpush2.bf16.msra.mxu0 %v2449
        %2509 = vmatprep.subr.bf16.mxu0 %v2448
        %2510 = vmatpush2.bf16.msra.mxu0 %v2447
        %2511 = vmatprep.subr.bf16.mxu0 %v2446
        %2512 = vmatpush2.bf16.msra.mxu0 %v2445
        %2513 = vmatprep.subr.bf16.mxu0 %v2444
        %2514 = vmatpush2.bf16.msra.mxu0 %v2443
        %2515 = vmatprep.subr.bf16.mxu0 %v2442
        %2516 = vmatpush2.bf16.msra.mxu0 %v2441
        %2517 = vmatprep.subr.bf16.mxu0 %v2440
        %2518 = vmatpush2.bf16.msra.mxu0 %v2439
        %2519 = vmatprep.mubr.bf16.mxu0 %v2250
        %2520 = vmatmul.mubr.bf16.gmra.mxu0 %v2249
        %v2521 = vpop.f32.mrf.mxu0
        %v2522 = vadd.f32 %v2320, %v2521
        %v2523 = vpop.f32.mrf.mxu0
        %v2524 = vadd.f32 %v2324, %v2523
        %v2525 = vpop.f32.mrf.mxu0
        %v2526 = vadd.f32 %v2320, %v2525
        %v2527 = vpop.f32.mrf.mxu0
        %v2528 = vadd.f32 %v2324, %v2527
        %2529 = vmatprep.mubr.bf16.mxu0 %v2252
        %2530 = vmatmul.mubr.bf16.gmra.mxu0 %v2251
        %v2531 = vpop.f32.mrf.mxu0
        %v2532 = vadd.f32 %v2320, %v2531
        %v2533 = vpop.f32.mrf.mxu0
        %v2534 = vadd.f32 %v2324, %v2533
        %v2535 = vpop.f32.mrf.mxu0
        %v2536 = vadd.f32 %v2320, %v2535
        %v2537 = vpop.f32.mrf.mxu0
        %v2538 = vadd.f32 %v2324, %v2537
        %2539 = vmatprep.mubr.bf16.mxu0 %v2254
        %2540 = vmatmul.mubr.bf16.gmra.mxu0 %v2253
        %v2541 = vpop.f32.mrf.mxu0
        %v2542 = vadd.f32 %v2320, %v2541
        %v2543 = vpop.f32.mrf.mxu0
        %v2544 = vadd.f32 %v2324, %v2543
        %v2545 = vpop.f32.mrf.mxu0
        %v2546 = vadd.f32 %v2320, %v2545
        %v2547 = vpop.f32.mrf.mxu0
        %v2548 = vadd.f32 %v2324, %v2547
        %2549 = vmatprep.mubr.bf16.mxu0 %v2256
        %2550 = vmatmul.mubr.bf16.gmra.mxu0 %v2255
        %v2551 = vpop.f32.mrf.mxu0
        %v2552 = vadd.f32 %v2320, %v2551
        %v2553 = vpop.f32.mrf.mxu0
        %v2554 = vadd.f32 %v2324, %v2553
        %v2555 = vpop.f32.mrf.mxu0
        %v2556 = vadd.f32 %v2320, %v2555
        %v2557 = vpop.f32.mrf.mxu0
        %v2558 = vadd.f32 %v2324, %v2557
        %2559 = vmatprep.mubr.bf16.mxu0 %v2258
        %2560 = vmatmul.mubr.bf16.gmra.mxu0 %v2257
        %v2561 = vpop.f32.mrf.mxu0
        %v2562 = vadd.f32 %v2320, %v2561
        %v2563 = vpop.f32.mrf.mxu0
        %v2564 = vadd.f32 %v2324, %v2563
        %v2565 = vpop.f32.mrf.mxu0
        %v2566 = vadd.f32 %v2320, %v2565
        %v2567 = vpop.f32.mrf.mxu0
        %v2568 = vadd.f32 %v2324, %v2567
        %2569 = vmatprep.mubr.bf16.mxu0 %v2260
        %2570 = vmatmul.mubr.bf16.gmra.mxu0 %v2259
        %v2571 = vpop.f32.mrf.mxu0
        %v2572 = vadd.f32 %v2320, %v2571
        %v2573 = vpop.f32.mrf.mxu0
        %v2574 = vadd.f32 %v2324, %v2573
        %v2575 = vpop.f32.mrf.mxu0
        %v2576 = vadd.f32 %v2320, %v2575
        %v2577 = vpop.f32.mrf.mxu0
        %v2578 = vadd.f32 %v2324, %v2577
        %2579 = vmatprep.mubr.bf16.mxu0 %v2262
        %2580 = vmatmul.mubr.bf16.gmra.mxu0 %v2261
        %v2581 = vpop.f32.mrf.mxu0
        %v2582 = vadd.f32 %v2320, %v2581
        %v2583 = vpop.f32.mrf.mxu0
        %v2584 = vadd.f32 %v2324, %v2583
        %v2585 = vpop.f32.mrf.mxu0
        %v2586 = vadd.f32 %v2320, %v2585
        %v2587 = vpop.f32.mrf.mxu0
        %v2588 = vadd.f32 %v2324, %v2587
        %2589 = vmatprep.mubr.bf16.mxu0 %v2264
        %2590 = vmatmul.mubr.bf16.gmra.mxu0 %v2263
        %v2591 = vpop.f32.mrf.mxu0
        %v2592 = vadd.f32 %v2320, %v2591
        %v2593 = vpop.f32.mrf.mxu0
        %v2594 = vadd.f32 %v2324, %v2593
        %v2595 = vpop.f32.mrf.mxu0
        %v2596 = vadd.f32 %v2320, %v2595
        %v2597 = vpop.f32.mrf.mxu0
        %v2598 = vadd.f32 %v2324, %v2597
        %2599 = vmatprep.mubr.bf16.mxu0 %v2266
        %2600 = vmatmul.mubr.bf16.gmra.mxu0 %v2265
        %v2601 = vpop.f32.mrf.mxu0
        %v2602 = vadd.f32 %v2320, %v2601
        %v2603 = vpop.f32.mrf.mxu0
        %v2604 = vadd.f32 %v2324, %v2603
        %v2605 = vpop.f32.mrf.mxu0
        %v2606 = vadd.f32 %v2320, %v2605
        %v2607 = vpop.f32.mrf.mxu0
        %v2608 = vadd.f32 %v2324, %v2607
        %2609 = vmatprep.mubr.bf16.mxu0 %v2268
        %2610 = vmatmul.mubr.bf16.gmra.mxu0 %v2267
        %v2611 = vpop.f32.mrf.mxu0
        %v2612 = vadd.f32 %v2320, %v2611
        %v2613 = vpop.f32.mrf.mxu0
        %v2614 = vadd.f32 %v2324, %v2613
        %v2615 = vpop.f32.mrf.mxu0
        %v2616 = vadd.f32 %v2320, %v2615
        %v2617 = vpop.f32.mrf.mxu0
        %v2618 = vadd.f32 %v2324, %v2617
        %2619 = vmatprep.mubr.bf16.mxu0 %v2270
        %2620 = vmatmul.mubr.bf16.gmra.mxu0 %v2269
        %v2621 = vpop.f32.mrf.mxu0
        %v2622 = vadd.f32 %v2320, %v2621
        %v2623 = vpop.f32.mrf.mxu0
        %v2624 = vadd.f32 %v2324, %v2623
        %v2625 = vpop.f32.mrf.mxu0
        %v2626 = vadd.f32 %v2320, %v2625
        %v2627 = vpop.f32.mrf.mxu0
        %v2628 = vadd.f32 %v2324, %v2627
        %2629 = vmatprep.mubr.bf16.mxu0 %v2272
        %2630 = vmatmul.mubr.bf16.gmra.mxu0 %v2271
        %v2631 = vpop.f32.mrf.mxu0
        %v2632 = vadd.f32 %v2320, %v2631
        %v2633 = vpop.f32.mrf.mxu0
        %v2634 = vadd.f32 %v2324, %v2633
        %v2635 = vpop.f32.mrf.mxu0
        %v2636 = vadd.f32 %v2320, %v2635
        %v2637 = vpop.f32.mrf.mxu0
        %v2638 = vadd.f32 %v2324, %v2637
        %2639 = vmatprep.mubr.bf16.mxu0 %v2274
        %2640 = vmatmul.mubr.bf16.gmra.mxu0 %v2273
        %v2641 = vpop.f32.mrf.mxu0
        %v2642 = vadd.f32 %v2320, %v2641
        %v2643 = vpop.f32.mrf.mxu0
        %v2644 = vadd.f32 %v2324, %v2643
        %v2645 = vpop.f32.mrf.mxu0
        %v2646 = vadd.f32 %v2320, %v2645
        %v2647 = vpop.f32.mrf.mxu0
        %v2648 = vadd.f32 %v2324, %v2647
        %2649 = vmatprep.mubr.bf16.mxu0 %v2276
        %2650 = vmatmul.mubr.bf16.gmra.mxu0 %v2275
        %v2651 = vpop.f32.mrf.mxu0
        %v2652 = vadd.f32 %v2320, %v2651
        %v2653 = vpop.f32.mrf.mxu0
        %v2654 = vadd.f32 %v2324, %v2653
        %v2655 = vpop.f32.mrf.mxu0
        %v2656 = vadd.f32 %v2320, %v2655
        %v2657 = vpop.f32.mrf.mxu0
        %v2658 = vadd.f32 %v2324, %v2657
        %2659 = vmatprep.mubr.bf16.mxu0 %v2278
        %2660 = vmatmul.mubr.bf16.gmra.mxu0 %v2277
        %v2661 = vpop.f32.mrf.mxu0
        %v2662 = vadd.f32 %v2320, %v2661
        %v2663 = vpop.f32.mrf.mxu0
        %v2664 = vadd.f32 %v2324, %v2663
        %v2665 = vpop.f32.mrf.mxu0
        %v2666 = vadd.f32 %v2320, %v2665
        %v2667 = vpop.f32.mrf.mxu0
        %v2668 = vadd.f32 %v2324, %v2667
        %2669 = vmatprep.mubr.bf16.mxu0 %v2280
        %2670 = vmatmul.mubr.bf16.gmra.mxu0 %v2279
        %v2671 = vpop.f32.mrf.mxu0
        %v2672 = vadd.f32 %v2320, %v2671
        %v2673 = vpop.f32.mrf.mxu0
        %v2674 = vadd.f32 %v2324, %v2673
        %v2675 = vpop.f32.mrf.mxu0
        %v2676 = vadd.f32 %v2320, %v2675
        %v2677 = vpop.f32.mrf.mxu0
        %v2678 = vadd.f32 %v2324, %v2677
        %2679 = vdwg.mxu0
        %v2680 = vmax.f32 %v2522, 0.0
        %v2681 = vmax.f32 %v2524, 0.0
        %v2682 = vmax.f32 %v2526, 0.0
        %v2683 = vmax.f32 %v2528, 0.0
        %v2684 = vmax.f32 %v2532, 0.0
        %v2685 = vmax.f32 %v2534, 0.0
        %v2686 = vmax.f32 %v2536, 0.0
        %v2687 = vmax.f32 %v2538, 0.0
        %v2688 = vmax.f32 %v2542, 0.0
        %v2689 = vmax.f32 %v2544, 0.0
        %v2690 = vmax.f32 %v2546, 0.0
        %v2691 = vmax.f32 %v2548, 0.0
        %v2692 = vmax.f32 %v2552, 0.0
        %v2693 = vmax.f32 %v2554, 0.0
        %v2694 = vmax.f32 %v2556, 0.0
        %v2695 = vmax.f32 %v2558, 0.0
        %v2696 = vmax.f32 %v2562, 0.0
        %v2697 = vmax.f32 %v2564, 0.0
        %v2698 = vmax.f32 %v2566, 0.0
        %v2699 = vmax.f32 %v2568, 0.0
        %v2700 = vmax.f32 %v2572, 0.0
        %v2701 = vmax.f32 %v2574, 0.0
        %v2702 = vmax.f32 %v2576, 0.0
        %v2703 = vmax.f32 %v2578, 0.0
        %v2704 = vmax.f32 %v2582, 0.0
        %v2705 = vmax.f32 %v2584, 0.0
        %v2706 = vmax.f32 %v2586, 0.0
        %v2707 = vmax.f32 %v2588, 0.0
        %v2708 = vmax.f32 %v2592, 0.0
        %v2709 = vmax.f32 %v2594, 0.0
        %v2710 = vmax.f32 %v2596, 0.0
        %v2711 = vmax.f32 %v2598, 0.0
        %v2712 = vmax.f32 %v2602, 0.0
        %v2713 = vmax.f32 %v2604, 0.0
        %v2714 = vmax.f32 %v2606, 0.0
        %v2715 = vmax.f32 %v2608, 0.0
        %v2716 = vmax.f32 %v2612, 0.0
        %v2717 = vmax.f32 %v2614, 0.0
        %v2718 = vmax.f32 %v2616, 0.0
        %v2719 = vmax.f32 %v2618, 0.0
        %v2720 = vmax.f32 %v2622, 0.0
        %v2721 = vmax.f32 %v2624, 0.0
        %v2722 = vmax.f32 %v2626, 0.0
        %v2723 = vmax.f32 %v2628, 0.0
        %v2724 = vmax.f32 %v2632, 0.0
        %v2725 = vmax.f32 %v2634, 0.0
        %v2726 = vmax.f32 %v2636, 0.0
        %v2727 = vmax.f32 %v2638, 0.0
        %v2728 = vmax.f32 %v2642, 0.0
        %v2729 = vmax.f32 %v2644, 0.0
        %v2730 = vmax.f32 %v2646, 0.0
        %v2731 = vmax.f32 %v2648, 0.0
        %v2732 = vmax.f32 %v2652, 0.0
        %v2733 = vmax.f32 %v2654, 0.0
        %v2734 = vmax.f32 %v2656, 0.0
        %v2735 = vmax.f32 %v2658, 0.0
        %v2736 = vmax.f32 %v2662, 0.0
        %v2737 = vmax.f32 %v2664, 0.0
        %v2738 = vmax.f32 %v2666, 0.0
        %v2739 = vmax.f32 %v2668, 0.0
        %v2740 = vmax.f32 %v2672, 0.0
        %v2741 = vmax.f32 %v2674, 0.0
        %v2742 = vmax.f32 %v2676, 0.0
        %v2743 = vmax.f32 %v2678, 0.0
        %v2744 = vpack.c.bf16 %v2682, %v2680
        %v2745 = vpack.c.bf16 %v2683, %v2681
        %v2746 = vpack.c.bf16 %v2686, %v2684
        %v2747 = vpack.c.bf16 %v2687, %v2685
        %v2748 = vpack.c.bf16 %v2690, %v2688
        %v2749 = vpack.c.bf16 %v2691, %v2689
        %v2750 = vpack.c.bf16 %v2694, %v2692
        %v2751 = vpack.c.bf16 %v2695, %v2693
        %v2752 = vpack.c.bf16 %v2698, %v2696
        %v2753 = vpack.c.bf16 %v2699, %v2697
        %v2754 = vpack.c.bf16 %v2702, %v2700
        %v2755 = vpack.c.bf16 %v2703, %v2701
        %v2756 = vpack.c.bf16 %v2706, %v2704
        %v2757 = vpack.c.bf16 %v2707, %v2705
        %v2758 = vpack.c.bf16 %v2710, %v2708
        %v2759 = vpack.c.bf16 %v2711, %v2709
        %v2760 = vpack.c.bf16 %v2714, %v2712
        %v2761 = vpack.c.bf16 %v2715, %v2713
        %v2762 = vpack.c.bf16 %v2718, %v2716
        %v2763 = vpack.c.bf16 %v2719, %v2717
        %v2764 = vpack.c.bf16 %v2722, %v2720
        %v2765 = vpack.c.bf16 %v2723, %v2721
        %v2766 = vpack.c.bf16 %v2726, %v2724
        %v2767 = vpack.c.bf16 %v2727, %v2725
        %v2768 = vpack.c.bf16 %v2730, %v2728
        %v2769 = vpack.c.bf16 %v2731, %v2729
        %v2770 = vpack.c.bf16 %v2734, %v2732
        %v2771 = vpack.c.bf16 %v2735, %v2733
        %v2772 = vpack.c.bf16 %v2738, %v2736
        %v2773 = vpack.c.bf16 %v2739, %v2737
        %v2774 = vpack.c.bf16 %v2742, %v2740
        %v2775 = vpack.c.bf16 %v2743, %v2741
        %s2776 = scalar_lea.vmem [#allocation2], 768
        %v2777 = vld [vmem:[%s2776] sm:$0xff]
        %v2778 = vld [vmem:[%s2776 + $0x8] sm:$0xff]
        %v2779 = vld [vmem:[%s2776 + $0x10] sm:$0xff]
        %v2780 = vld [vmem:[%s2776 + $0x18] sm:$0xff]
        %v2781 = vld [vmem:[%s2776 + $0x20] sm:$0xff]
        %v2782 = vld [vmem:[%s2776 + $0x28] sm:$0xff]
        %v2783 = vld [vmem:[%s2776 + $0x30] sm:$0xff]
        %v2784 = vld [vmem:[%s2776 + $0x38] sm:$0xff]
        %v2785 = vld [vmem:[%s2776 + $0x40] sm:$0xff]
        %v2786 = vld [vmem:[%s2776 + $0x48] sm:$0xff]
        %v2787 = vld [vmem:[%s2776 + $0x50] sm:$0xff]
        %v2788 = vld [vmem:[%s2776 + $0x58] sm:$0xff]
        %v2789 = vld [vmem:[%s2776 + $0x60] sm:$0xff]
        %v2790 = vld [vmem:[%s2776 + $0x68] sm:$0xff]
        %v2791 = vld [vmem:[%s2776 + $0x70] sm:$0xff]
        %v2792 = vld [vmem:[%s2776 + $0x78] sm:$0xff]
        %v2793 = vld [vmem:[%s2776 + $0x80] sm:$0xff]
        %v2794 = vld [vmem:[%s2776 + $0x88] sm:$0xff]
        %v2795 = vld [vmem:[%s2776 + $0x90] sm:$0xff]
        %v2796 = vld [vmem:[%s2776 + $0x98] sm:$0xff]
        %v2797 = vld [vmem:[%s2776 + $0xa0] sm:$0xff]
        %v2798 = vld [vmem:[%s2776 + $0xa8] sm:$0xff]
        %v2799 = vld [vmem:[%s2776 + $0xb0] sm:$0xff]
        %v2800 = vld [vmem:[%s2776 + $0xb8] sm:$0xff]
        %v2801 = vld [vmem:[%s2776 + $0xc0] sm:$0xff]
        %v2802 = vld [vmem:[%s2776 + $0xc8] sm:$0xff]
        %v2803 = vld [vmem:[%s2776 + $0xd0] sm:$0xff]
        %v2804 = vld [vmem:[%s2776 + $0xd8] sm:$0xff]
        %v2805 = vld [vmem:[%s2776 + $0xe0] sm:$0xff]
        %v2806 = vld [vmem:[%s2776 + $0xe8] sm:$0xff]
        %v2807 = vld [vmem:[%s2776 + $0xf0] sm:$0xff]
        %v2808 = vld [vmem:[%s2776 + $0xf8] sm:$0xff]
        %s2809 = scalar_lea.vmem %s4, 4
        %v2810 = vld [vmem:[%s2809] ss:$8 sm:$0x3]
        %v2812 = vlaneseq
        %v2813 = vshrl.u32 %v2812, 7
        %v2814 = vsub.s32 0, %v2813
        %v2815 = vrot.slane %v2810, %v2814
        %v2816 = vlaneseq
        %v2817 = vshrl.u32 %v2816, 7
        %v2818 = vsub.s32 1, %v2817
        %v2819 = vrot.slane %v2810, %v2818
        %v2854 = vunpack.c.l.b16 %v2777
        %v2855 = vunpack.c.h.b16 %v2777
        %v2856 = vunpack.c.l.b16 %v2778
        %v2857 = vunpack.c.h.b16 %v2778
        %v2858 = vunpack.c.l.b16 %v2779
        %v2859 = vunpack.c.h.b16 %v2779
        %v2860 = vunpack.c.l.b16 %v2780
        %v2861 = vunpack.c.h.b16 %v2780
        %v2862 = vunpack.c.l.b16 %v2781
        %v2863 = vunpack.c.h.b16 %v2781
        %v2864 = vunpack.c.l.b16 %v2782
        %v2865 = vunpack.c.h.b16 %v2782
        %v2866 = vunpack.c.l.b16 %v2783
        %v2867 = vunpack.c.h.b16 %v2783
        %v2868 = vunpack.c.l.b16 %v2784
        %v2869 = vunpack.c.h.b16 %v2784
        %v2870 = vunpack.c.l.b16 %v2785
        %v2871 = vunpack.c.h.b16 %v2785
        %v2872 = vunpack.c.l.b16 %v2786
        %v2873 = vunpack.c.h.b16 %v2786
        %v2874 = vunpack.c.l.b16 %v2787
        %v2875 = vunpack.c.h.b16 %v2787
        %v2876 = vunpack.c.l.b16 %v2788
        %v2877 = vunpack.c.h.b16 %v2788
        %v2878 = vunpack.c.l.b16 %v2789
        %v2879 = vunpack.c.h.b16 %v2789
        %v2880 = vunpack.c.l.b16 %v2790
        %v2881 = vunpack.c.h.b16 %v2790
        %v2882 = vunpack.c.l.b16 %v2791
        %v2883 = vunpack.c.h.b16 %v2791
        %v2884 = vunpack.c.l.b16 %v2792
        %v2885 = vunpack.c.h.b16 %v2792
        %v2886 = vunpack.c.l.b16 %v2793
        %v2887 = vunpack.c.h.b16 %v2793
        %v2888 = vunpack.c.l.b16 %v2794
        %v2889 = vunpack.c.h.b16 %v2794
        %v2890 = vunpack.c.l.b16 %v2795
        %v2891 = vunpack.c.h.b16 %v2795
        %v2892 = vunpack.c.l.b16 %v2796
        %v2893 = vunpack.c.h.b16 %v2796
        %v2894 = vunpack.c.l.b16 %v2797
        %v2895 = vunpack.c.h.b16 %v2797
        %v2896 = vunpack.c.l.b16 %v2798
        %v2897 = vunpack.c.h.b16 %v2798
        %v2898 = vunpack.c.l.b16 %v2799
        %v2899 = vunpack.c.h.b16 %v2799
        %v2900 = vunpack.c.l.b16 %v2800
        %v2901 = vunpack.c.h.b16 %v2800
        %v2902 = vunpack.c.l.b16 %v2801
        %v2903 = vunpack.c.h.b16 %v2801
        %v2904 = vunpack.c.l.b16 %v2802
        %v2905 = vunpack.c.h.b16 %v2802
        %v2906 = vunpack.c.l.b16 %v2803
        %v2907 = vunpack.c.h.b16 %v2803
        %v2908 = vunpack.c.l.b16 %v2804
        %v2909 = vunpack.c.h.b16 %v2804
        %v2910 = vunpack.c.l.b16 %v2805
        %v2911 = vunpack.c.h.b16 %v2805
        %v2912 = vunpack.c.l.b16 %v2806
        %v2913 = vunpack.c.h.b16 %v2806
        %v2914 = vunpack.c.l.b16 %v2807
        %v2915 = vunpack.c.h.b16 %v2807
        %v2916 = vunpack.c.l.b16 %v2808
        %v2917 = vunpack.c.h.b16 %v2808
        %v2918 = vpack.c.b16 %v2856, %v2854
        %v2919 = vpack.c.b16 %v2857, %v2855
        %v2920 = vpack.c.b16 %v2860, %v2858
        %v2921 = vpack.c.b16 %v2861, %v2859
        %v2922 = vpack.c.b16 %v2864, %v2862
        %v2923 = vpack.c.b16 %v2865, %v2863
        %v2924 = vpack.c.b16 %v2868, %v2866
        %v2925 = vpack.c.b16 %v2869, %v2867
        %v2926 = vpack.c.b16 %v2872, %v2870
        %v2927 = vpack.c.b16 %v2873, %v2871
        %v2928 = vpack.c.b16 %v2876, %v2874
        %v2929 = vpack.c.b16 %v2877, %v2875
        %v2930 = vpack.c.b16 %v2880, %v2878
        %v2931 = vpack.c.b16 %v2881, %v2879
        %v2932 = vpack.c.b16 %v2884, %v2882
        %v2933 = vpack.c.b16 %v2885, %v2883
        %v2934 = vpack.c.b16 %v2888, %v2886
        %v2935 = vpack.c.b16 %v2889, %v2887
        %v2936 = vpack.c.b16 %v2892, %v2890
        %v2937 = vpack.c.b16 %v2893, %v2891
        %v2938 = vpack.c.b16 %v2896, %v2894
        %v2939 = vpack.c.b16 %v2897, %v2895
        %v2940 = vpack.c.b16 %v2900, %v2898
        %v2941 = vpack.c.b16 %v2901, %v2899
        %v2942 = vpack.c.b16 %v2904, %v2902
        %v2943 = vpack.c.b16 %v2905, %v2903
        %v2944 = vpack.c.b16 %v2908, %v2906
        %v2945 = vpack.c.b16 %v2909, %v2907
        %v2946 = vpack.c.b16 %v2912, %v2910
        %v2947 = vpack.c.b16 %v2913, %v2911
        %v2948 = vpack.c.b16 %v2916, %v2914
        %v2949 = vpack.c.b16 %v2917, %v2915
        %2982 = vmatprep.subr.bf16.mxu0 %v2933
        %2983 = vmatpush1.bf16.msra.mxu0 %v2932
        %2984 = vmatprep.subr.bf16.mxu0 %v2931
        %2985 = vmatpush1.bf16.msra.mxu0 %v2930
        %2986 = vmatprep.subr.bf16.mxu0 %v2929
        %2987 = vmatpush1.bf16.msra.mxu0 %v2928
        %2988 = vmatprep.subr.bf16.mxu0 %v2927
        %2989 = vmatpush1.bf16.msra.mxu0 %v2926
        %2990 = vmatprep.subr.bf16.mxu0 %v2925
        %2991 = vmatpush1.bf16.msra.mxu0 %v2924
        %2992 = vmatprep.subr.bf16.mxu0 %v2923
        %2993 = vmatpush1.bf16.msra.mxu0 %v2922
        %2994 = vmatprep.subr.bf16.mxu0 %v2921
        %2995 = vmatpush1.bf16.msra.mxu0 %v2920
        %2996 = vmatprep.subr.bf16.mxu0 %v2919
        %2997 = vmatpush1.bf16.msra.mxu0 %v2918
        %2998 = vmatprep.subr.bf16.mxu0 %v2949
        %2999 = vmatpush2.bf16.msra.mxu0 %v2948
        %3000 = vmatprep.subr.bf16.mxu0 %v2947
        %3001 = vmatpush2.bf16.msra.mxu0 %v2946
        %3002 = vmatprep.subr.bf16.mxu0 %v2945
        %3003 = vmatpush2.bf16.msra.mxu0 %v2944
        %3004 = vmatprep.subr.bf16.mxu0 %v2943
        %3005 = vmatpush2.bf16.msra.mxu0 %v2942
        %3006 = vmatprep.subr.bf16.mxu0 %v2941
        %3007 = vmatpush2.bf16.msra.mxu0 %v2940
        %3008 = vmatprep.subr.bf16.mxu0 %v2939
        %3009 = vmatpush2.bf16.msra.mxu0 %v2938
        %3010 = vmatprep.subr.bf16.mxu0 %v2937
        %3011 = vmatpush2.bf16.msra.mxu0 %v2936
        %3012 = vmatprep.subr.bf16.mxu0 %v2935
        %3013 = vmatpush2.bf16.msra.mxu0 %v2934
        %3014 = vmatprep.mubr.bf16.mxu0 %v2745
        %3015 = vmatmul.mubr.bf16.gmra.mxu0 %v2744
        %v3016 = vpop.f32.mrf.mxu0
        %v3017 = vadd.f32 %v2815, %v3016
        %v3018 = vpop.f32.mrf.mxu0
        %v3019 = vadd.f32 %v2819, %v3018
        %v3020 = vpop.f32.mrf.mxu0
        %v3021 = vadd.f32 %v2815, %v3020
        %v3022 = vpop.f32.mrf.mxu0
        %v3023 = vadd.f32 %v2819, %v3022
        %3024 = vmatprep.mubr.bf16.mxu0 %v2747
        %3025 = vmatmul.mubr.bf16.gmra.mxu0 %v2746
        %v3026 = vpop.f32.mrf.mxu0
        %v3027 = vadd.f32 %v2815, %v3026
        %v3028 = vpop.f32.mrf.mxu0
        %v3029 = vadd.f32 %v2819, %v3028
        %v3030 = vpop.f32.mrf.mxu0
        %v3031 = vadd.f32 %v2815, %v3030
        %v3032 = vpop.f32.mrf.mxu0
        %v3033 = vadd.f32 %v2819, %v3032
        %3034 = vmatprep.mubr.bf16.mxu0 %v2749
        %3035 = vmatmul.mubr.bf16.gmra.mxu0 %v2748
        %v3036 = vpop.f32.mrf.mxu0
        %v3037 = vadd.f32 %v2815, %v3036
        %v3038 = vpop.f32.mrf.mxu0
        %v3039 = vadd.f32 %v2819, %v3038
        %v3040 = vpop.f32.mrf.mxu0
        %v3041 = vadd.f32 %v2815, %v3040
        %v3042 = vpop.f32.mrf.mxu0
        %v3043 = vadd.f32 %v2819, %v3042
        %3044 = vmatprep.mubr.bf16.mxu0 %v2751
        %3045 = vmatmul.mubr.bf16.gmra.mxu0 %v2750
        %v3046 = vpop.f32.mrf.mxu0
        %v3047 = vadd.f32 %v2815, %v3046
        %v3048 = vpop.f32.mrf.mxu0
        %v3049 = vadd.f32 %v2819, %v3048
        %v3050 = vpop.f32.mrf.mxu0
        %v3051 = vadd.f32 %v2815, %v3050
        %v3052 = vpop.f32.mrf.mxu0
        %v3053 = vadd.f32 %v2819, %v3052
        %3054 = vmatprep.mubr.bf16.mxu0 %v2753
        %3055 = vmatmul.mubr.bf16.gmra.mxu0 %v2752
        %v3056 = vpop.f32.mrf.mxu0
        %v3057 = vadd.f32 %v2815, %v3056
        %v3058 = vpop.f32.mrf.mxu0
        %v3059 = vadd.f32 %v2819, %v3058
        %v3060 = vpop.f32.mrf.mxu0
        %v3061 = vadd.f32 %v2815, %v3060
        %v3062 = vpop.f32.mrf.mxu0
        %v3063 = vadd.f32 %v2819, %v3062
        %3064 = vmatprep.mubr.bf16.mxu0 %v2755
        %3065 = vmatmul.mubr.bf16.gmra.mxu0 %v2754
        %v3066 = vpop.f32.mrf.mxu0
        %v3067 = vadd.f32 %v2815, %v3066
        %v3068 = vpop.f32.mrf.mxu0
        %v3069 = vadd.f32 %v2819, %v3068
        %v3070 = vpop.f32.mrf.mxu0
        %v3071 = vadd.f32 %v2815, %v3070
        %v3072 = vpop.f32.mrf.mxu0
        %v3073 = vadd.f32 %v2819, %v3072
        %3074 = vmatprep.mubr.bf16.mxu0 %v2757
        %3075 = vmatmul.mubr.bf16.gmra.mxu0 %v2756
        %v3076 = vpop.f32.mrf.mxu0
        %v3077 = vadd.f32 %v2815, %v3076
        %v3078 = vpop.f32.mrf.mxu0
        %v3079 = vadd.f32 %v2819, %v3078
        %v3080 = vpop.f32.mrf.mxu0
        %v3081 = vadd.f32 %v2815, %v3080
        %v3082 = vpop.f32.mrf.mxu0
        %v3083 = vadd.f32 %v2819, %v3082
        %3084 = vmatprep.mubr.bf16.mxu0 %v2759
        %3085 = vmatmul.mubr.bf16.gmra.mxu0 %v2758
        %v3086 = vpop.f32.mrf.mxu0
        %v3087 = vadd.f32 %v2815, %v3086
        %v3088 = vpop.f32.mrf.mxu0
        %v3089 = vadd.f32 %v2819, %v3088
        %v3090 = vpop.f32.mrf.mxu0
        %v3091 = vadd.f32 %v2815, %v3090
        %v3092 = vpop.f32.mrf.mxu0
        %v3093 = vadd.f32 %v2819, %v3092
        %3094 = vmatprep.mubr.bf16.mxu0 %v2761
        %3095 = vmatmul.mubr.bf16.gmra.mxu0 %v2760
        %v3096 = vpop.f32.mrf.mxu0
        %v3097 = vadd.f32 %v2815, %v3096
        %v3098 = vpop.f32.mrf.mxu0
        %v3099 = vadd.f32 %v2819, %v3098
        %v3100 = vpop.f32.mrf.mxu0
        %v3101 = vadd.f32 %v2815, %v3100
        %v3102 = vpop.f32.mrf.mxu0
        %v3103 = vadd.f32 %v2819, %v3102
        %3104 = vmatprep.mubr.bf16.mxu0 %v2763
        %3105 = vmatmul.mubr.bf16.gmra.mxu0 %v2762
        %v3106 = vpop.f32.mrf.mxu0
        %v3107 = vadd.f32 %v2815, %v3106
        %v3108 = vpop.f32.mrf.mxu0
        %v3109 = vadd.f32 %v2819, %v3108
        %v3110 = vpop.f32.mrf.mxu0
        %v3111 = vadd.f32 %v2815, %v3110
        %v3112 = vpop.f32.mrf.mxu0
        %v3113 = vadd.f32 %v2819, %v3112
        %3114 = vmatprep.mubr.bf16.mxu0 %v2765
        %3115 = vmatmul.mubr.bf16.gmra.mxu0 %v2764
        %v3116 = vpop.f32.mrf.mxu0
        %v3117 = vadd.f32 %v2815, %v3116
        %v3118 = vpop.f32.mrf.mxu0
        %v3119 = vadd.f32 %v2819, %v3118
        %v3120 = vpop.f32.mrf.mxu0
        %v3121 = vadd.f32 %v2815, %v3120
        %v3122 = vpop.f32.mrf.mxu0
        %v3123 = vadd.f32 %v2819, %v3122
        %3124 = vmatprep.mubr.bf16.mxu0 %v2767
        %3125 = vmatmul.mubr.bf16.gmra.mxu0 %v2766
        %v3126 = vpop.f32.mrf.mxu0
        %v3127 = vadd.f32 %v2815, %v3126
        %v3128 = vpop.f32.mrf.mxu0
        %v3129 = vadd.f32 %v2819, %v3128
        %v3130 = vpop.f32.mrf.mxu0
        %v3131 = vadd.f32 %v2815, %v3130
        %v3132 = vpop.f32.mrf.mxu0
        %v3133 = vadd.f32 %v2819, %v3132
        %3134 = vmatprep.mubr.bf16.mxu0 %v2769
        %3135 = vmatmul.mubr.bf16.gmra.mxu0 %v2768
        %v3136 = vpop.f32.mrf.mxu0
        %v3137 = vadd.f32 %v2815, %v3136
        %v3138 = vpop.f32.mrf.mxu0
        %v3139 = vadd.f32 %v2819, %v3138
        %v3140 = vpop.f32.mrf.mxu0
        %v3141 = vadd.f32 %v2815, %v3140
        %v3142 = vpop.f32.mrf.mxu0
        %v3143 = vadd.f32 %v2819, %v3142
        %3144 = vmatprep.mubr.bf16.mxu0 %v2771
        %3145 = vmatmul.mubr.bf16.gmra.mxu0 %v2770
        %v3146 = vpop.f32.mrf.mxu0
        %v3147 = vadd.f32 %v2815, %v3146
        %v3148 = vpop.f32.mrf.mxu0
        %v3149 = vadd.f32 %v2819, %v3148
        %v3150 = vpop.f32.mrf.mxu0
        %v3151 = vadd.f32 %v2815, %v3150
        %v3152 = vpop.f32.mrf.mxu0
        %v3153 = vadd.f32 %v2819, %v3152
        %3154 = vmatprep.mubr.bf16.mxu0 %v2773
        %3155 = vmatmul.mubr.bf16.gmra.mxu0 %v2772
        %v3156 = vpop.f32.mrf.mxu0
        %v3157 = vadd.f32 %v2815, %v3156
        %v3158 = vpop.f32.mrf.mxu0
        %v3159 = vadd.f32 %v2819, %v3158
        %v3160 = vpop.f32.mrf.mxu0
        %v3161 = vadd.f32 %v2815, %v3160
        %v3162 = vpop.f32.mrf.mxu0
        %v3163 = vadd.f32 %v2819, %v3162
        %3164 = vmatprep.mubr.bf16.mxu0 %v2775
        %3165 = vmatmul.mubr.bf16.gmra.mxu0 %v2774
        %v3166 = vpop.f32.mrf.mxu0
        %v3167 = vadd.f32 %v2815, %v3166
        %v3168 = vpop.f32.mrf.mxu0
        %v3169 = vadd.f32 %v2819, %v3168
        %v3170 = vpop.f32.mrf.mxu0
        %v3171 = vadd.f32 %v2815, %v3170
        %v3172 = vpop.f32.mrf.mxu0
        %v3173 = vadd.f32 %v2819, %v3172
        %3174 = vdwg.mxu0
        %v3175 = vmax.f32 %v3017, 0.0
        %v3176 = vmax.f32 %v3019, 0.0
        %v3177 = vmax.f32 %v3021, 0.0
        %v3178 = vmax.f32 %v3023, 0.0
        %v3179 = vmax.f32 %v3027, 0.0
        %v3180 = vmax.f32 %v3029, 0.0
        %v3181 = vmax.f32 %v3031, 0.0
        %v3182 = vmax.f32 %v3033, 0.0
        %v3183 = vmax.f32 %v3037, 0.0
        %v3184 = vmax.f32 %v3039, 0.0
        %v3185 = vmax.f32 %v3041, 0.0
        %v3186 = vmax.f32 %v3043, 0.0
        %v3187 = vmax.f32 %v3047, 0.0
        %v3188 = vmax.f32 %v3049, 0.0
        %v3189 = vmax.f32 %v3051, 0.0
        %v3190 = vmax.f32 %v3053, 0.0
        %v3191 = vmax.f32 %v3057, 0.0
        %v3192 = vmax.f32 %v3059, 0.0
        %v3193 = vmax.f32 %v3061, 0.0
        %v3194 = vmax.f32 %v3063, 0.0
        %v3195 = vmax.f32 %v3067, 0.0
        %v3196 = vmax.f32 %v3069, 0.0
        %v3197 = vmax.f32 %v3071, 0.0
        %v3198 = vmax.f32 %v3073, 0.0
        %v3199 = vmax.f32 %v3077, 0.0
        %v3200 = vmax.f32 %v3079, 0.0
        %v3201 = vmax.f32 %v3081, 0.0
        %v3202 = vmax.f32 %v3083, 0.0
        %v3203 = vmax.f32 %v3087, 0.0
        %v3204 = vmax.f32 %v3089, 0.0
        %v3205 = vmax.f32 %v3091, 0.0
        %v3206 = vmax.f32 %v3093, 0.0
        %v3207 = vmax.f32 %v3097, 0.0
        %v3208 = vmax.f32 %v3099, 0.0
        %v3209 = vmax.f32 %v3101, 0.0
        %v3210 = vmax.f32 %v3103, 0.0
        %v3211 = vmax.f32 %v3107, 0.0
        %v3212 = vmax.f32 %v3109, 0.0
        %v3213 = vmax.f32 %v3111, 0.0
        %v3214 = vmax.f32 %v3113, 0.0
        %v3215 = vmax.f32 %v3117, 0.0
        %v3216 = vmax.f32 %v3119, 0.0
        %v3217 = vmax.f32 %v3121, 0.0
        %v3218 = vmax.f32 %v3123, 0.0
        %v3219 = vmax.f32 %v3127, 0.0
        %v3220 = vmax.f32 %v3129, 0.0
        %v3221 = vmax.f32 %v3131, 0.0
        %v3222 = vmax.f32 %v3133, 0.0
        %v3223 = vmax.f32 %v3137, 0.0
        %v3224 = vmax.f32 %v3139, 0.0
        %v3225 = vmax.f32 %v3141, 0.0
        %v3226 = vmax.f32 %v3143, 0.0
        %v3227 = vmax.f32 %v3147, 0.0
        %v3228 = vmax.f32 %v3149, 0.0
        %v3229 = vmax.f32 %v3151, 0.0
        %v3230 = vmax.f32 %v3153, 0.0
        %v3231 = vmax.f32 %v3157, 0.0
        %v3232 = vmax.f32 %v3159, 0.0
        %v3233 = vmax.f32 %v3161, 0.0
        %v3234 = vmax.f32 %v3163, 0.0
        %v3235 = vmax.f32 %v3167, 0.0
        %v3236 = vmax.f32 %v3169, 0.0
        %v3237 = vmax.f32 %v3171, 0.0
        %v3238 = vmax.f32 %v3173, 0.0
        %v3239 = vpack.c.bf16 %v3177, %v3175
        %v3240 = vpack.c.bf16 %v3178, %v3176
        %v3241 = vpack.c.bf16 %v3181, %v3179
        %v3242 = vpack.c.bf16 %v3182, %v3180
        %v3243 = vpack.c.bf16 %v3185, %v3183
        %v3244 = vpack.c.bf16 %v3186, %v3184
        %v3245 = vpack.c.bf16 %v3189, %v3187
        %v3246 = vpack.c.bf16 %v3190, %v3188
        %v3247 = vpack.c.bf16 %v3193, %v3191
        %v3248 = vpack.c.bf16 %v3194, %v3192
        %v3249 = vpack.c.bf16 %v3197, %v3195
        %v3250 = vpack.c.bf16 %v3198, %v3196
        %v3251 = vpack.c.bf16 %v3201, %v3199
        %v3252 = vpack.c.bf16 %v3202, %v3200
        %v3253 = vpack.c.bf16 %v3205, %v3203
        %v3254 = vpack.c.bf16 %v3206, %v3204
        %v3255 = vpack.c.bf16 %v3209, %v3207
        %v3256 = vpack.c.bf16 %v3210, %v3208
        %v3257 = vpack.c.bf16 %v3213, %v3211
        %v3258 = vpack.c.bf16 %v3214, %v3212
        %v3259 = vpack.c.bf16 %v3217, %v3215
        %v3260 = vpack.c.bf16 %v3218, %v3216
        %v3261 = vpack.c.bf16 %v3221, %v3219
        %v3262 = vpack.c.bf16 %v3222, %v3220
        %v3263 = vpack.c.bf16 %v3225, %v3223
        %v3264 = vpack.c.bf16 %v3226, %v3224
        %v3265 = vpack.c.bf16 %v3229, %v3227
        %v3266 = vpack.c.bf16 %v3230, %v3228
        %v3267 = vpack.c.bf16 %v3233, %v3231
        %v3268 = vpack.c.bf16 %v3234, %v3232
        %v3269 = vpack.c.bf16 %v3237, %v3235
        %v3270 = vpack.c.bf16 %v3238, %v3236
        %s3271 = scalar_lea.vmem [#allocation2], 1024
        %v3272 = vld [vmem:[%s3271] sm:$0xff]
        %v3273 = vld [vmem:[%s3271 + $0x8] sm:$0xff]
        %v3274 = vld [vmem:[%s3271 + $0x10] sm:$0xff]
        %v3275 = vld [vmem:[%s3271 + $0x18] sm:$0xff]
        %v3276 = vld [vmem:[%s3271 + $0x20] sm:$0xff]
        %v3277 = vld [vmem:[%s3271 + $0x28] sm:$0xff]
        %v3278 = vld [vmem:[%s3271 + $0x30] sm:$0xff]
        %v3279 = vld [vmem:[%s3271 + $0x38] sm:$0xff]
        %v3280 = vld [vmem:[%s3271 + $0x40] sm:$0xff]
        %v3281 = vld [vmem:[%s3271 + $0x48] sm:$0xff]
        %v3282 = vld [vmem:[%s3271 + $0x50] sm:$0xff]
        %v3283 = vld [vmem:[%s3271 + $0x58] sm:$0xff]
        %v3284 = vld [vmem:[%s3271 + $0x60] sm:$0xff]
        %v3285 = vld [vmem:[%s3271 + $0x68] sm:$0xff]
        %v3286 = vld [vmem:[%s3271 + $0x70] sm:$0xff]
        %v3287 = vld [vmem:[%s3271 + $0x78] sm:$0xff]
        %v3288 = vld [vmem:[%s3271 + $0x80] sm:$0xff]
        %v3289 = vld [vmem:[%s3271 + $0x88] sm:$0xff]
        %v3290 = vld [vmem:[%s3271 + $0x90] sm:$0xff]
        %v3291 = vld [vmem:[%s3271 + $0x98] sm:$0xff]
        %v3292 = vld [vmem:[%s3271 + $0xa0] sm:$0xff]
        %v3293 = vld [vmem:[%s3271 + $0xa8] sm:$0xff]
        %v3294 = vld [vmem:[%s3271 + $0xb0] sm:$0xff]
        %v3295 = vld [vmem:[%s3271 + $0xb8] sm:$0xff]
        %v3296 = vld [vmem:[%s3271 + $0xc0] sm:$0xff]
        %v3297 = vld [vmem:[%s3271 + $0xc8] sm:$0xff]
        %v3298 = vld [vmem:[%s3271 + $0xd0] sm:$0xff]
        %v3299 = vld [vmem:[%s3271 + $0xd8] sm:$0xff]
        %v3300 = vld [vmem:[%s3271 + $0xe0] sm:$0xff]
        %v3301 = vld [vmem:[%s3271 + $0xe8] sm:$0xff]
        %v3302 = vld [vmem:[%s3271 + $0xf0] sm:$0xff]
        %v3303 = vld [vmem:[%s3271 + $0xf8] sm:$0xff]
        %s3304 = scalar_lea.vmem %s4, 5
        %v3305 = vld [vmem:[%s3304] ss:$8 sm:$0x3]
        %v3307 = vlaneseq
        %v3308 = vshrl.u32 %v3307, 7
        %v3309 = vsub.s32 0, %v3308
        %v3310 = vrot.slane %v3305, %v3309
        %v3311 = vlaneseq
        %v3312 = vshrl.u32 %v3311, 7
        %v3313 = vsub.s32 1, %v3312
        %v3314 = vrot.slane %v3305, %v3313
        %v3349 = vunpack.c.l.b16 %v3272
        %v3350 = vunpack.c.h.b16 %v3272
        %v3351 = vunpack.c.l.b16 %v3273
        %v3352 = vunpack.c.h.b16 %v3273
        %v3353 = vunpack.c.l.b16 %v3274
        %v3354 = vunpack.c.h.b16 %v3274
        %v3355 = vunpack.c.l.b16 %v3275
        %v3356 = vunpack.c.h.b16 %v3275
        %v3357 = vunpack.c.l.b16 %v3276
        %v3358 = vunpack.c.h.b16 %v3276
        %v3359 = vunpack.c.l.b16 %v3277
        %v3360 = vunpack.c.h.b16 %v3277
        %v3361 = vunpack.c.l.b16 %v3278
        %v3362 = vunpack.c.h.b16 %v3278
        %v3363 = vunpack.c.l.b16 %v3279
        %v3364 = vunpack.c.h.b16 %v3279
        %v3365 = vunpack.c.l.b16 %v3280
        %v3366 = vunpack.c.h.b16 %v3280
        %v3367 = vunpack.c.l.b16 %v3281
        %v3368 = vunpack.c.h.b16 %v3281
        %v3369 = vunpack.c.l.b16 %v3282
        %v3370 = vunpack.c.h.b16 %v3282
        %v3371 = vunpack.c.l.b16 %v3283
        %v3372 = vunpack.c.h.b16 %v3283
        %v3373 = vunpack.c.l.b16 %v3284
        %v3374 = vunpack.c.h.b16 %v3284
        %v3375 = vunpack.c.l.b16 %v3285
        %v3376 = vunpack.c.h.b16 %v3285
        %v3377 = vunpack.c.l.b16 %v3286
        %v3378 = vunpack.c.h.b16 %v3286
        %v3379 = vunpack.c.l.b16 %v3287
        %v3380 = vunpack.c.h.b16 %v3287
        %v3381 = vunpack.c.l.b16 %v3288
        %v3382 = vunpack.c.h.b16 %v3288
        %v3383 = vunpack.c.l.b16 %v3289
        %v3384 = vunpack.c.h.b16 %v3289
        %v3385 = vunpack.c.l.b16 %v3290
        %v3386 = vunpack.c.h.b16 %v3290
        %v3387 = vunpack.c.l.b16 %v3291
        %v3388 = vunpack.c.h.b16 %v3291
        %v3389 = vunpack.c.l.b16 %v3292
        %v3390 = vunpack.c.h.b16 %v3292
        %v3391 = vunpack.c.l.b16 %v3293
        %v3392 = vunpack.c.h.b16 %v3293
        %v3393 = vunpack.c.l.b16 %v3294
        %v3394 = vunpack.c.h.b16 %v3294
        %v3395 = vunpack.c.l.b16 %v3295
        %v3396 = vunpack.c.h.b16 %v3295
        %v3397 = vunpack.c.l.b16 %v3296
        %v3398 = vunpack.c.h.b16 %v3296
        %v3399 = vunpack.c.l.b16 %v3297
        %v3400 = vunpack.c.h.b16 %v3297
        %v3401 = vunpack.c.l.b16 %v3298
        %v3402 = vunpack.c.h.b16 %v3298
        %v3403 = vunpack.c.l.b16 %v3299
        %v3404 = vunpack.c.h.b16 %v3299
        %v3405 = vunpack.c.l.b16 %v3300
        %v3406 = vunpack.c.h.b16 %v3300
        %v3407 = vunpack.c.l.b16 %v3301
        %v3408 = vunpack.c.h.b16 %v3301
        %v3409 = vunpack.c.l.b16 %v3302
        %v3410 = vunpack.c.h.b16 %v3302
        %v3411 = vunpack.c.l.b16 %v3303
        %v3412 = vunpack.c.h.b16 %v3303
        %v3413 = vpack.c.b16 %v3351, %v3349
        %v3414 = vpack.c.b16 %v3352, %v3350
        %v3415 = vpack.c.b16 %v3355, %v3353
        %v3416 = vpack.c.b16 %v3356, %v3354
        %v3417 = vpack.c.b16 %v3359, %v3357
        %v3418 = vpack.c.b16 %v3360, %v3358
        %v3419 = vpack.c.b16 %v3363, %v3361
        %v3420 = vpack.c.b16 %v3364, %v3362
        %v3421 = vpack.c.b16 %v3367, %v3365
        %v3422 = vpack.c.b16 %v3368, %v3366
        %v3423 = vpack.c.b16 %v3371, %v3369
        %v3424 = vpack.c.b16 %v3372, %v3370
        %v3425 = vpack.c.b16 %v3375, %v3373
        %v3426 = vpack.c.b16 %v3376, %v3374
        %v3427 = vpack.c.b16 %v3379, %v3377
        %v3428 = vpack.c.b16 %v3380, %v3378
        %v3429 = vpack.c.b16 %v3383, %v3381
        %v3430 = vpack.c.b16 %v3384, %v3382
        %v3431 = vpack.c.b16 %v3387, %v3385
        %v3432 = vpack.c.b16 %v3388, %v3386
        %v3433 = vpack.c.b16 %v3391, %v3389
        %v3434 = vpack.c.b16 %v3392, %v3390
        %v3435 = vpack.c.b16 %v3395, %v3393
        %v3436 = vpack.c.b16 %v3396, %v3394
        %v3437 = vpack.c.b16 %v3399, %v3397
        %v3438 = vpack.c.b16 %v3400, %v3398
        %v3439 = vpack.c.b16 %v3403, %v3401
        %v3440 = vpack.c.b16 %v3404, %v3402
        %v3441 = vpack.c.b16 %v3407, %v3405
        %v3442 = vpack.c.b16 %v3408, %v3406
        %v3443 = vpack.c.b16 %v3411, %v3409
        %v3444 = vpack.c.b16 %v3412, %v3410
        %3477 = vmatprep.subr.bf16.mxu0 %v3428
        %3478 = vmatpush1.bf16.msra.mxu0 %v3427
        %3479 = vmatprep.subr.bf16.mxu0 %v3426
        %3480 = vmatpush1.bf16.msra.mxu0 %v3425
        %3481 = vmatprep.subr.bf16.mxu0 %v3424
        %3482 = vmatpush1.bf16.msra.mxu0 %v3423
        %3483 = vmatprep.subr.bf16.mxu0 %v3422
        %3484 = vmatpush1.bf16.msra.mxu0 %v3421
        %3485 = vmatprep.subr.bf16.mxu0 %v3420
        %3486 = vmatpush1.bf16.msra.mxu0 %v3419
        %3487 = vmatprep.subr.bf16.mxu0 %v3418
        %3488 = vmatpush1.bf16.msra.mxu0 %v3417
        %3489 = vmatprep.subr.bf16.mxu0 %v3416
        %3490 = vmatpush1.bf16.msra.mxu0 %v3415
        %3491 = vmatprep.subr.bf16.mxu0 %v3414
        %3492 = vmatpush1.bf16.msra.mxu0 %v3413
        %3493 = vmatprep.subr.bf16.mxu0 %v3444
        %3494 = vmatpush2.bf16.msra.mxu0 %v3443
        %3495 = vmatprep.subr.bf16.mxu0 %v3442
        %3496 = vmatpush2.bf16.msra.mxu0 %v3441
        %3497 = vmatprep.subr.bf16.mxu0 %v3440
        %3498 = vmatpush2.bf16.msra.mxu0 %v3439
        %3499 = vmatprep.subr.bf16.mxu0 %v3438
        %3500 = vmatpush2.bf16.msra.mxu0 %v3437
        %3501 = vmatprep.subr.bf16.mxu0 %v3436
        %3502 = vmatpush2.bf16.msra.mxu0 %v3435
        %3503 = vmatprep.subr.bf16.mxu0 %v3434
        %3504 = vmatpush2.bf16.msra.mxu0 %v3433
        %3505 = vmatprep.subr.bf16.mxu0 %v3432
        %3506 = vmatpush2.bf16.msra.mxu0 %v3431
        %3507 = vmatprep.subr.bf16.mxu0 %v3430
        %3508 = vmatpush2.bf16.msra.mxu0 %v3429
        %3509 = vmatprep.mubr.bf16.mxu0 %v3240
        %3510 = vmatmul.mubr.bf16.gmra.mxu0 %v3239
        %v3511 = vpop.f32.mrf.mxu0
        %v3512 = vadd.f32 %v3310, %v3511
        %v3513 = vpop.f32.mrf.mxu0
        %v3514 = vadd.f32 %v3314, %v3513
        %v3515 = vpop.f32.mrf.mxu0
        %v3516 = vadd.f32 %v3310, %v3515
        %v3517 = vpop.f32.mrf.mxu0
        %v3518 = vadd.f32 %v3314, %v3517
        %3519 = vmatprep.mubr.bf16.mxu0 %v3242
        %3520 = vmatmul.mubr.bf16.gmra.mxu0 %v3241
        %v3521 = vpop.f32.mrf.mxu0
        %v3522 = vadd.f32 %v3310, %v3521
        %v3523 = vpop.f32.mrf.mxu0
        %v3524 = vadd.f32 %v3314, %v3523
        %v3525 = vpop.f32.mrf.mxu0
        %v3526 = vadd.f32 %v3310, %v3525
        %v3527 = vpop.f32.mrf.mxu0
        %v3528 = vadd.f32 %v3314, %v3527
        %3529 = vmatprep.mubr.bf16.mxu0 %v3244
        %3530 = vmatmul.mubr.bf16.gmra.mxu0 %v3243
        %v3531 = vpop.f32.mrf.mxu0
        %v3532 = vadd.f32 %v3310, %v3531
        %v3533 = vpop.f32.mrf.mxu0
        %v3534 = vadd.f32 %v3314, %v3533
        %v3535 = vpop.f32.mrf.mxu0
        %v3536 = vadd.f32 %v3310, %v3535
        %v3537 = vpop.f32.mrf.mxu0
        %v3538 = vadd.f32 %v3314, %v3537
        %3539 = vmatprep.mubr.bf16.mxu0 %v3246
        %3540 = vmatmul.mubr.bf16.gmra.mxu0 %v3245
        %v3541 = vpop.f32.mrf.mxu0
        %v3542 = vadd.f32 %v3310, %v3541
        %v3543 = vpop.f32.mrf.mxu0
        %v3544 = vadd.f32 %v3314, %v3543
        %v3545 = vpop.f32.mrf.mxu0
        %v3546 = vadd.f32 %v3310, %v3545
        %v3547 = vpop.f32.mrf.mxu0
        %v3548 = vadd.f32 %v3314, %v3547
        %3549 = vmatprep.mubr.bf16.mxu0 %v3248
        %3550 = vmatmul.mubr.bf16.gmra.mxu0 %v3247
        %v3551 = vpop.f32.mrf.mxu0
        %v3552 = vadd.f32 %v3310, %v3551
        %v3553 = vpop.f32.mrf.mxu0
        %v3554 = vadd.f32 %v3314, %v3553
        %v3555 = vpop.f32.mrf.mxu0
        %v3556 = vadd.f32 %v3310, %v3555
        %v3557 = vpop.f32.mrf.mxu0
        %v3558 = vadd.f32 %v3314, %v3557
        %3559 = vmatprep.mubr.bf16.mxu0 %v3250
        %3560 = vmatmul.mubr.bf16.gmra.mxu0 %v3249
        %v3561 = vpop.f32.mrf.mxu0
        %v3562 = vadd.f32 %v3310, %v3561
        %v3563 = vpop.f32.mrf.mxu0
        %v3564 = vadd.f32 %v3314, %v3563
        %v3565 = vpop.f32.mrf.mxu0
        %v3566 = vadd.f32 %v3310, %v3565
        %v3567 = vpop.f32.mrf.mxu0
        %v3568 = vadd.f32 %v3314, %v3567
        %3569 = vmatprep.mubr.bf16.mxu0 %v3252
        %3570 = vmatmul.mubr.bf16.gmra.mxu0 %v3251
        %v3571 = vpop.f32.mrf.mxu0
        %v3572 = vadd.f32 %v3310, %v3571
        %v3573 = vpop.f32.mrf.mxu0
        %v3574 = vadd.f32 %v3314, %v3573
        %v3575 = vpop.f32.mrf.mxu0
        %v3576 = vadd.f32 %v3310, %v3575
        %v3577 = vpop.f32.mrf.mxu0
        %v3578 = vadd.f32 %v3314, %v3577
        %3579 = vmatprep.mubr.bf16.mxu0 %v3254
        %3580 = vmatmul.mubr.bf16.gmra.mxu0 %v3253
        %v3581 = vpop.f32.mrf.mxu0
        %v3582 = vadd.f32 %v3310, %v3581
        %v3583 = vpop.f32.mrf.mxu0
        %v3584 = vadd.f32 %v3314, %v3583
        %v3585 = vpop.f32.mrf.mxu0
        %v3586 = vadd.f32 %v3310, %v3585
        %v3587 = vpop.f32.mrf.mxu0
        %v3588 = vadd.f32 %v3314, %v3587
        %3589 = vmatprep.mubr.bf16.mxu0 %v3256
        %3590 = vmatmul.mubr.bf16.gmra.mxu0 %v3255
        %v3591 = vpop.f32.mrf.mxu0
        %v3592 = vadd.f32 %v3310, %v3591
        %v3593 = vpop.f32.mrf.mxu0
        %v3594 = vadd.f32 %v3314, %v3593
        %v3595 = vpop.f32.mrf.mxu0
        %v3596 = vadd.f32 %v3310, %v3595
        %v3597 = vpop.f32.mrf.mxu0
        %v3598 = vadd.f32 %v3314, %v3597
        %3599 = vmatprep.mubr.bf16.mxu0 %v3258
        %3600 = vmatmul.mubr.bf16.gmra.mxu0 %v3257
        %v3601 = vpop.f32.mrf.mxu0
        %v3602 = vadd.f32 %v3310, %v3601
        %v3603 = vpop.f32.mrf.mxu0
        %v3604 = vadd.f32 %v3314, %v3603
        %v3605 = vpop.f32.mrf.mxu0
        %v3606 = vadd.f32 %v3310, %v3605
        %v3607 = vpop.f32.mrf.mxu0
        %v3608 = vadd.f32 %v3314, %v3607
        %3609 = vmatprep.mubr.bf16.mxu0 %v3260
        %3610 = vmatmul.mubr.bf16.gmra.mxu0 %v3259
        %v3611 = vpop.f32.mrf.mxu0
        %v3612 = vadd.f32 %v3310, %v3611
        %v3613 = vpop.f32.mrf.mxu0
        %v3614 = vadd.f32 %v3314, %v3613
        %v3615 = vpop.f32.mrf.mxu0
        %v3616 = vadd.f32 %v3310, %v3615
        %v3617 = vpop.f32.mrf.mxu0
        %v3618 = vadd.f32 %v3314, %v3617
        %3619 = vmatprep.mubr.bf16.mxu0 %v3262
        %3620 = vmatmul.mubr.bf16.gmra.mxu0 %v3261
        %v3621 = vpop.f32.mrf.mxu0
        %v3622 = vadd.f32 %v3310, %v3621
        %v3623 = vpop.f32.mrf.mxu0
        %v3624 = vadd.f32 %v3314, %v3623
        %v3625 = vpop.f32.mrf.mxu0
        %v3626 = vadd.f32 %v3310, %v3625
        %v3627 = vpop.f32.mrf.mxu0
        %v3628 = vadd.f32 %v3314, %v3627
        %3629 = vmatprep.mubr.bf16.mxu0 %v3264
        %3630 = vmatmul.mubr.bf16.gmra.mxu0 %v3263
        %v3631 = vpop.f32.mrf.mxu0
        %v3632 = vadd.f32 %v3310, %v3631
        %v3633 = vpop.f32.mrf.mxu0
        %v3634 = vadd.f32 %v3314, %v3633
        %v3635 = vpop.f32.mrf.mxu0
        %v3636 = vadd.f32 %v3310, %v3635
        %v3637 = vpop.f32.mrf.mxu0
        %v3638 = vadd.f32 %v3314, %v3637
        %3639 = vmatprep.mubr.bf16.mxu0 %v3266
        %3640 = vmatmul.mubr.bf16.gmra.mxu0 %v3265
        %v3641 = vpop.f32.mrf.mxu0
        %v3642 = vadd.f32 %v3310, %v3641
        %v3643 = vpop.f32.mrf.mxu0
        %v3644 = vadd.f32 %v3314, %v3643
        %v3645 = vpop.f32.mrf.mxu0
        %v3646 = vadd.f32 %v3310, %v3645
        %v3647 = vpop.f32.mrf.mxu0
        %v3648 = vadd.f32 %v3314, %v3647
        %3649 = vmatprep.mubr.bf16.mxu0 %v3268
        %3650 = vmatmul.mubr.bf16.gmra.mxu0 %v3267
        %v3651 = vpop.f32.mrf.mxu0
        %v3652 = vadd.f32 %v3310, %v3651
        %v3653 = vpop.f32.mrf.mxu0
        %v3654 = vadd.f32 %v3314, %v3653
        %v3655 = vpop.f32.mrf.mxu0
        %v3656 = vadd.f32 %v3310, %v3655
        %v3657 = vpop.f32.mrf.mxu0
        %v3658 = vadd.f32 %v3314, %v3657
        %3659 = vmatprep.mubr.bf16.mxu0 %v3270
        %3660 = vmatmul.mubr.bf16.gmra.mxu0 %v3269
        %v3661 = vpop.f32.mrf.mxu0
        %v3662 = vadd.f32 %v3310, %v3661
        %v3663 = vpop.f32.mrf.mxu0
        %v3664 = vadd.f32 %v3314, %v3663
        %v3665 = vpop.f32.mrf.mxu0
        %v3666 = vadd.f32 %v3310, %v3665
        %v3667 = vpop.f32.mrf.mxu0
        %v3668 = vadd.f32 %v3314, %v3667
        %3669 = vdwg.mxu0
        %v3670 = vld [vmem:[%s2] sm:$0x77]
        %v3672 = vlaneseq
        %v3673 = vshrl.u32 %v3672, 7
        %v3674 = vsub.s32 0, %v3673
        %v3675 = vrot.slane %v3670, %v3674
        %v3676 = vlaneseq
        %v3677 = vshrl.u32 %v3676, 7
        %v3678 = vsub.s32 4, %v3677
        %v3679 = vrot.slane %v3670, %v3678
        %v3682 = vlaneseq
        %v3683 = vshrl.u32 %v3682, 7
        %v3684 = vsub.s32 0, %v3683
        %v3685 = vrot.slane %v3675, %v3684
        %v3686 = vlaneseq
        %v3687 = vshrl.u32 %v3686, 7
        %v3688 = vsub.s32 0, %v3687
        %v3689 = vrot.slane %v3679, %v3688
        %v3690 = vmul.f32 %v332, %v3685
        %v3691 = vmul.f32 %v332, %v3689
        %v3692 = vmul.f32 %v337, %v3685
        %v3693 = vmul.f32 %v337, %v3689
        %v3694 = vmul.f32 %v342, %v3685
        %v3695 = vmul.f32 %v342, %v3689
        %v3696 = vmul.f32 %v347, %v3685
        %v3697 = vmul.f32 %v347, %v3689
        %v3698 = vmul.f32 %v352, %v3685
        %v3699 = vmul.f32 %v352, %v3689
        %v3700 = vmul.f32 %v357, %v3685
        %v3701 = vmul.f32 %v357, %v3689
        %v3702 = vmul.f32 %v362, %v3685
        %v3703 = vmul.f32 %v362, %v3689
        %v3704 = vmul.f32 %v367, %v3685
        %v3705 = vmul.f32 %v367, %v3689
        %v3706 = vmul.f32 %v372, %v3685
        %v3707 = vmul.f32 %v372, %v3689
        %v3708 = vmul.f32 %v377, %v3685
        %v3709 = vmul.f32 %v377, %v3689
        %v3710 = vmul.f32 %v382, %v3685
        %v3711 = vmul.f32 %v382, %v3689
        %v3712 = vmul.f32 %v387, %v3685
        %v3713 = vmul.f32 %v387, %v3689
        %v3714 = vmul.f32 %v392, %v3685
        %v3715 = vmul.f32 %v392, %v3689
        %v3716 = vmul.f32 %v397, %v3685
        %v3717 = vmul.f32 %v397, %v3689
        %v3718 = vmul.f32 %v402, %v3685
        %v3719 = vmul.f32 %v402, %v3689
        %v3720 = vmul.f32 %v407, %v3685
        %v3721 = vmul.f32 %v407, %v3689
        %v3722 = vmul.f32 %v412, %v3685
        %v3723 = vmul.f32 %v412, %v3689
        %v3724 = vmul.f32 %v417, %v3685
        %v3725 = vmul.f32 %v417, %v3689
        %v3726 = vmul.f32 %v422, %v3685
        %v3727 = vmul.f32 %v422, %v3689
        %v3728 = vmul.f32 %v427, %v3685
        %v3729 = vmul.f32 %v427, %v3689
        %v3730 = vmul.f32 %v432, %v3685
        %v3731 = vmul.f32 %v432, %v3689
        %v3732 = vmul.f32 %v437, %v3685
        %v3733 = vmul.f32 %v437, %v3689
        %v3734 = vmul.f32 %v442, %v3685
        %v3735 = vmul.f32 %v442, %v3689
        %v3736 = vmul.f32 %v447, %v3685
        %v3737 = vmul.f32 %v447, %v3689
        %v3738 = vmul.f32 %v452, %v3685
        %v3739 = vmul.f32 %v452, %v3689
        %v3740 = vmul.f32 %v457, %v3685
        %v3741 = vmul.f32 %v457, %v3689
        %v3742 = vmul.f32 %v462, %v3685
        %v3743 = vmul.f32 %v462, %v3689
        %v3744 = vmul.f32 %v467, %v3685
        %v3745 = vmul.f32 %v467, %v3689
        %v3746 = vmul.f32 %v472, %v3685
        %v3747 = vmul.f32 %v472, %v3689
        %v3748 = vmul.f32 %v477, %v3685
        %v3749 = vmul.f32 %v477, %v3689
        %v3750 = vmul.f32 %v482, %v3685
        %v3751 = vmul.f32 %v482, %v3689
        %v3752 = vmul.f32 %v487, %v3685
        %v3753 = vmul.f32 %v487, %v3689
        %v3754 = vlaneseq
        %v3755 = vshrl.u32 %v3754, 7
        %v3756 = vsub.s32 1, %v3755
        %v3757 = vrot.slane %v3670, %v3756
        %v3758 = vlaneseq
        %v3759 = vshrl.u32 %v3758, 7
        %v3760 = vsub.s32 5, %v3759
        %v3761 = vrot.slane %v3670, %v3760
        %v3764 = vlaneseq
        %v3765 = vshrl.u32 %v3764, 7
        %v3766 = vsub.s32 1, %v3765
        %v3767 = vrot.slane %v3757, %v3766
        %v3768 = vlaneseq
        %v3769 = vshrl.u32 %v3768, 7
        %v3770 = vsub.s32 1, %v3769
        %v3771 = vrot.slane %v3761, %v3770
        %v3772 = vmul.f32 %v574, %v3767
        %v3773 = vmul.f32 %v574, %v3771
        %v3774 = vmul.f32 %v578, %v3767
        %v3775 = vmul.f32 %v578, %v3771
        %v3776 = vmul.f32 %v582, %v3767
        %v3777 = vmul.f32 %v582, %v3771
        %v3778 = vmul.f32 %v586, %v3767
        %v3779 = vmul.f32 %v586, %v3771
        %v3780 = vmul.f32 %v590, %v3767
        %v3781 = vmul.f32 %v590, %v3771
        %v3782 = vmul.f32 %v594, %v3767
        %v3783 = vmul.f32 %v594, %v3771
        %v3784 = vmul.f32 %v598, %v3767
        %v3785 = vmul.f32 %v598, %v3771
        %v3786 = vmul.f32 %v602, %v3767
        %v3787 = vmul.f32 %v602, %v3771
        %v3788 = vmul.f32 %v606, %v3767
        %v3789 = vmul.f32 %v606, %v3771
        %v3790 = vmul.f32 %v610, %v3767
        %v3791 = vmul.f32 %v610, %v3771
        %v3792 = vmul.f32 %v614, %v3767
        %v3793 = vmul.f32 %v614, %v3771
        %v3794 = vmul.f32 %v618, %v3767
        %v3795 = vmul.f32 %v618, %v3771
        %v3796 = vmul.f32 %v622, %v3767
        %v3797 = vmul.f32 %v622, %v3771
        %v3798 = vmul.f32 %v626, %v3767
        %v3799 = vmul.f32 %v626, %v3771
        %v3800 = vmul.f32 %v630, %v3767
        %v3801 = vmul.f32 %v630, %v3771
        %v3802 = vmul.f32 %v634, %v3767
        %v3803 = vmul.f32 %v634, %v3771
        %v3804 = vmul.f32 %v638, %v3767
        %v3805 = vmul.f32 %v638, %v3771
        %v3806 = vmul.f32 %v642, %v3767
        %v3807 = vmul.f32 %v642, %v3771
        %v3808 = vmul.f32 %v646, %v3767
        %v3809 = vmul.f32 %v646, %v3771
        %v3810 = vmul.f32 %v650, %v3767
        %v3811 = vmul.f32 %v650, %v3771
        %v3812 = vmul.f32 %v654, %v3767
        %v3813 = vmul.f32 %v654, %v3771
        %v3814 = vmul.f32 %v658, %v3767
        %v3815 = vmul.f32 %v658, %v3771
        %v3816 = vmul.f32 %v662, %v3767
        %v3817 = vmul.f32 %v662, %v3771
        %v3818 = vmul.f32 %v666, %v3767
        %v3819 = vmul.f32 %v666, %v3771
        %v3820 = vmul.f32 %v670, %v3767
        %v3821 = vmul.f32 %v670, %v3771
        %v3822 = vmul.f32 %v674, %v3767
        %v3823 = vmul.f32 %v674, %v3771
        %v3824 = vmul.f32 %v678, %v3767
        %v3825 = vmul.f32 %v678, %v3771
        %v3826 = vmul.f32 %v682, %v3767
        %v3827 = vmul.f32 %v682, %v3771
        %v3828 = vmul.f32 %v686, %v3767
        %v3829 = vmul.f32 %v686, %v3771
        %v3830 = vmul.f32 %v690, %v3767
        %v3831 = vmul.f32 %v690, %v3771
        %v3832 = vmul.f32 %v694, %v3767
        %v3833 = vmul.f32 %v694, %v3771
        %v3834 = vmul.f32 %v698, %v3767
        %v3835 = vmul.f32 %v698, %v3771
        %v3836 = vadd.f32 %v3690, %v3772
        %v3837 = vadd.f32 %v3691, %v3773
        %v3838 = vadd.f32 %v3692, %v3774
        %v3839 = vadd.f32 %v3693, %v3775
        %v3840 = vadd.f32 %v3694, %v3776
        %v3841 = vadd.f32 %v3695, %v3777
        %v3842 = vadd.f32 %v3696, %v3778
        %v3843 = vadd.f32 %v3697, %v3779
        %v3844 = vadd.f32 %v3698, %v3780
        %v3845 = vadd.f32 %v3699, %v3781
        %v3846 = vadd.f32 %v3700, %v3782
        %v3847 = vadd.f32 %v3701, %v3783
        %v3848 = vadd.f32 %v3702, %v3784
        %v3849 = vadd.f32 %v3703, %v3785
        %v3850 = vadd.f32 %v3704, %v3786
        %v3851 = vadd.f32 %v3705, %v3787
        %v3852 = vadd.f32 %v3706, %v3788
        %v3853 = vadd.f32 %v3707, %v3789
        %v3854 = vadd.f32 %v3708, %v3790
        %v3855 = vadd.f32 %v3709, %v3791
        %v3856 = vadd.f32 %v3710, %v3792
        %v3857 = vadd.f32 %v3711, %v3793
        %v3858 = vadd.f32 %v3712, %v3794
        %v3859 = vadd.f32 %v3713, %v3795
        %v3860 = vadd.f32 %v3714, %v3796
        %v3861 = vadd.f32 %v3715, %v3797
        %v3862 = vadd.f32 %v3716, %v3798
        %v3863 = vadd.f32 %v3717, %v3799
        %v3864 = vadd.f32 %v3718, %v3800
        %v3865 = vadd.f32 %v3719, %v3801
        %v3866 = vadd.f32 %v3720, %v3802
        %v3867 = vadd.f32 %v3721, %v3803
        %v3868 = vadd.f32 %v3722, %v3804
        %v3869 = vadd.f32 %v3723, %v3805
        %v3870 = vadd.f32 %v3724, %v3806
        %v3871 = vadd.f32 %v3725, %v3807
        %v3872 = vadd.f32 %v3726, %v3808
        %v3873 = vadd.f32 %v3727, %v3809
        %v3874 = vadd.f32 %v3728, %v3810
        %v3875 = vadd.f32 %v3729, %v3811
        %v3876 = vadd.f32 %v3730, %v3812
        %v3877 = vadd.f32 %v3731, %v3813
        %v3878 = vadd.f32 %v3732, %v3814
        %v3879 = vadd.f32 %v3733, %v3815
        %v3880 = vadd.f32 %v3734, %v3816
        %v3881 = vadd.f32 %v3735, %v3817
        %v3882 = vadd.f32 %v3736, %v3818
        %v3883 = vadd.f32 %v3737, %v3819
        %v3884 = vadd.f32 %v3738, %v3820
        %v3885 = vadd.f32 %v3739, %v3821
        %v3886 = vadd.f32 %v3740, %v3822
        %v3887 = vadd.f32 %v3741, %v3823
        %v3888 = vadd.f32 %v3742, %v3824
        %v3889 = vadd.f32 %v3743, %v3825
        %v3890 = vadd.f32 %v3744, %v3826
        %v3891 = vadd.f32 %v3745, %v3827
        %v3892 = vadd.f32 %v3746, %v3828
        %v3893 = vadd.f32 %v3747, %v3829
        %v3894 = vadd.f32 %v3748, %v3830
        %v3895 = vadd.f32 %v3749, %v3831
        %v3896 = vadd.f32 %v3750, %v3832
        %v3897 = vadd.f32 %v3751, %v3833
        %v3898 = vadd.f32 %v3752, %v3834
        %v3899 = vadd.f32 %v3753, %v3835
        %v3900 = vlaneseq
        %v3901 = vshrl.u32 %v3900, 7
        %v3902 = vsub.s32 2, %v3901
        %v3903 = vrot.slane %v3670, %v3902
        %v3904 = vlaneseq
        %v3905 = vshrl.u32 %v3904, 7
        %v3906 = vsub.s32 6, %v3905
        %v3907 = vrot.slane %v3670, %v3906
        %v3910 = vlaneseq
        %v3911 = vshrl.u32 %v3910, 7
        %v3912 = vsub.s32 2, %v3911
        %v3913 = vrot.slane %v3903, %v3912
        %v3914 = vlaneseq
        %v3915 = vshrl.u32 %v3914, 7
        %v3916 = vsub.s32 2, %v3915
        %v3917 = vrot.slane %v3907, %v3916
        %v3918 = vmul.f32 %v848, %v3913
        %v3919 = vmul.f32 %v848, %v3917
        %v3920 = vmul.f32 %v852, %v3913
        %v3921 = vmul.f32 %v852, %v3917
        %v3922 = vmul.f32 %v856, %v3913
        %v3923 = vmul.f32 %v856, %v3917
        %v3924 = vmul.f32 %v860, %v3913
        %v3925 = vmul.f32 %v860, %v3917
        %v3926 = vmul.f32 %v864, %v3913
        %v3927 = vmul.f32 %v864, %v3917
        %v3928 = vmul.f32 %v868, %v3913
        %v3929 = vmul.f32 %v868, %v3917
        %v3930 = vmul.f32 %v872, %v3913
        %v3931 = vmul.f32 %v872, %v3917
        %v3932 = vmul.f32 %v876, %v3913
        %v3933 = vmul.f32 %v876, %v3917
        %v3934 = vmul.f32 %v880, %v3913
        %v3935 = vmul.f32 %v880, %v3917
        %v3936 = vmul.f32 %v884, %v3913
        %v3937 = vmul.f32 %v884, %v3917
        %v3938 = vmul.f32 %v888, %v3913
        %v3939 = vmul.f32 %v888, %v3917
        %v3940 = vmul.f32 %v892, %v3913
        %v3941 = vmul.f32 %v892, %v3917
        %v3942 = vmul.f32 %v896, %v3913
        %v3943 = vmul.f32 %v896, %v3917
        %v3944 = vmul.f32 %v900, %v3913
        %v3945 = vmul.f32 %v900, %v3917
        %v3946 = vmul.f32 %v904, %v3913
        %v3947 = vmul.f32 %v904, %v3917
        %v3948 = vmul.f32 %v908, %v3913
        %v3949 = vmul.f32 %v908, %v3917
        %v3950 = vmul.f32 %v912, %v3913
        %v3951 = vmul.f32 %v912, %v3917
        %v3952 = vmul.f32 %v916, %v3913
        %v3953 = vmul.f32 %v916, %v3917
        %v3954 = vmul.f32 %v920, %v3913
        %v3955 = vmul.f32 %v920, %v3917
        %v3956 = vmul.f32 %v924, %v3913
        %v3957 = vmul.f32 %v924, %v3917
        %v3958 = vmul.f32 %v928, %v3913
        %v3959 = vmul.f32 %v928, %v3917
        %v3960 = vmul.f32 %v932, %v3913
        %v3961 = vmul.f32 %v932, %v3917
        %v3962 = vmul.f32 %v936, %v3913
        %v3963 = vmul.f32 %v936, %v3917
        %v3964 = vmul.f32 %v940, %v3913
        %v3965 = vmul.f32 %v940, %v3917
        %v3966 = vmul.f32 %v944, %v3913
        %v3967 = vmul.f32 %v944, %v3917
        %v3968 = vmul.f32 %v948, %v3913
        %v3969 = vmul.f32 %v948, %v3917
        %v3970 = vmul.f32 %v952, %v3913
        %v3971 = vmul.f32 %v952, %v3917
        %v3972 = vmul.f32 %v956, %v3913
        %v3973 = vmul.f32 %v956, %v3917
        %v3974 = vmul.f32 %v960, %v3913
        %v3975 = vmul.f32 %v960, %v3917
        %v3976 = vmul.f32 %v964, %v3913
        %v3977 = vmul.f32 %v964, %v3917
        %v3978 = vmul.f32 %v968, %v3913
        %v3979 = vmul.f32 %v968, %v3917
        %v3980 = vmul.f32 %v972, %v3913
        %v3981 = vmul.f32 %v972, %v3917
        %v3982 = vadd.f32 %v3836, %v3918
        %v3983 = vadd.f32 %v3837, %v3919
        %v3984 = vadd.f32 %v3838, %v3920
        %v3985 = vadd.f32 %v3839, %v3921
        %v3986 = vadd.f32 %v3840, %v3922
        %v3987 = vadd.f32 %v3841, %v3923
        %v3988 = vadd.f32 %v3842, %v3924
        %v3989 = vadd.f32 %v3843, %v3925
        %v3990 = vadd.f32 %v3844, %v3926
        %v3991 = vadd.f32 %v3845, %v3927
        %v3992 = vadd.f32 %v3846, %v3928
        %v3993 = vadd.f32 %v3847, %v3929
        %v3994 = vadd.f32 %v3848, %v3930
        %v3995 = vadd.f32 %v3849, %v3931
        %v3996 = vadd.f32 %v3850, %v3932
        %v3997 = vadd.f32 %v3851, %v3933
        %v3998 = vadd.f32 %v3852, %v3934
        %v3999 = vadd.f32 %v3853, %v3935
        %v4000 = vadd.f32 %v3854, %v3936
        %v4001 = vadd.f32 %v3855, %v3937
        %v4002 = vadd.f32 %v3856, %v3938
        %v4003 = vadd.f32 %v3857, %v3939
        %v4004 = vadd.f32 %v3858, %v3940
        %v4005 = vadd.f32 %v3859, %v3941
        %v4006 = vadd.f32 %v3860, %v3942
        %v4007 = vadd.f32 %v3861, %v3943
        %v4008 = vadd.f32 %v3862, %v3944
        %v4009 = vadd.f32 %v3863, %v3945
        %v4010 = vadd.f32 %v3864, %v3946
        %v4011 = vadd.f32 %v3865, %v3947
        %v4012 = vadd.f32 %v3866, %v3948
        %v4013 = vadd.f32 %v3867, %v3949
        %v4014 = vadd.f32 %v3868, %v3950
        %v4015 = vadd.f32 %v3869, %v3951
        %v4016 = vadd.f32 %v3870, %v3952
        %v4017 = vadd.f32 %v3871, %v3953
        %v4018 = vadd.f32 %v3872, %v3954
        %v4019 = vadd.f32 %v3873, %v3955
        %v4020 = vadd.f32 %v3874, %v3956
        %v4021 = vadd.f32 %v3875, %v3957
        %v4022 = vadd.f32 %v3876, %v3958
        %v4023 = vadd.f32 %v3877, %v3959
        %v4024 = vadd.f32 %v3878, %v3960
        %v4025 = vadd.f32 %v3879, %v3961
        %v4026 = vadd.f32 %v3880, %v3962
        %v4027 = vadd.f32 %v3881, %v3963
        %v4028 = vadd.f32 %v3882, %v3964
        %v4029 = vadd.f32 %v3883, %v3965
        %v4030 = vadd.f32 %v3884, %v3966
        %v4031 = vadd.f32 %v3885, %v3967
        %v4032 = vadd.f32 %v3886, %v3968
        %v4033 = vadd.f32 %v3887, %v3969
        %v4034 = vadd.f32 %v3888, %v3970
        %v4035 = vadd.f32 %v3889, %v3971
        %v4036 = vadd.f32 %v3890, %v3972
        %v4037 = vadd.f32 %v3891, %v3973
        %v4038 = vadd.f32 %v3892, %v3974
        %v4039 = vadd.f32 %v3893, %v3975
        %v4040 = vadd.f32 %v3894, %v3976
        %v4041 = vadd.f32 %v3895, %v3977
        %v4042 = vadd.f32 %v3896, %v3978
        %v4043 = vadd.f32 %v3897, %v3979
        %v4044 = vadd.f32 %v3898, %v3980
        %v4045 = vadd.f32 %v3899, %v3981
        %v4046 = vadd.f32 %v3512, %v3982
        %v4047 = vadd.f32 %v3514, %v3983
        %v4048 = vadd.f32 %v3516, %v3984
        %v4049 = vadd.f32 %v3518, %v3985
        %v4050 = vadd.f32 %v3522, %v3986
        %v4051 = vadd.f32 %v3524, %v3987
        %v4052 = vadd.f32 %v3526, %v3988
        %v4053 = vadd.f32 %v3528, %v3989
        %v4054 = vadd.f32 %v3532, %v3990
        %v4055 = vadd.f32 %v3534, %v3991
        %v4056 = vadd.f32 %v3536, %v3992
        %v4057 = vadd.f32 %v3538, %v3993
        %v4058 = vadd.f32 %v3542, %v3994
        %v4059 = vadd.f32 %v3544, %v3995
        %v4060 = vadd.f32 %v3546, %v3996
        %v4061 = vadd.f32 %v3548, %v3997
        %v4062 = vadd.f32 %v3552, %v3998
        %v4063 = vadd.f32 %v3554, %v3999
        %v4064 = vadd.f32 %v3556, %v4000
        %v4065 = vadd.f32 %v3558, %v4001
        %v4066 = vadd.f32 %v3562, %v4002
        %v4067 = vadd.f32 %v3564, %v4003
        %v4068 = vadd.f32 %v3566, %v4004
        %v4069 = vadd.f32 %v3568, %v4005
        %v4070 = vadd.f32 %v3572, %v4006
        %v4071 = vadd.f32 %v3574, %v4007
        %v4072 = vadd.f32 %v3576, %v4008
        %v4073 = vadd.f32 %v3578, %v4009
        %v4074 = vadd.f32 %v3582, %v4010
        %v4075 = vadd.f32 %v3584, %v4011
        %v4076 = vadd.f32 %v3586, %v4012
        %v4077 = vadd.f32 %v3588, %v4013
        %v4078 = vadd.f32 %v3592, %v4014
        %v4079 = vadd.f32 %v3594, %v4015
        %v4080 = vadd.f32 %v3596, %v4016
        %v4081 = vadd.f32 %v3598, %v4017
        %v4082 = vadd.f32 %v3602, %v4018
        %v4083 = vadd.f32 %v3604, %v4019
        %v4084 = vadd.f32 %v3606, %v4020
        %v4085 = vadd.f32 %v3608, %v4021
        %v4086 = vadd.f32 %v3612, %v4022
        %v4087 = vadd.f32 %v3614, %v4023
        %v4088 = vadd.f32 %v3616, %v4024
        %v4089 = vadd.f32 %v3618, %v4025
        %v4090 = vadd.f32 %v3622, %v4026
        %v4091 = vadd.f32 %v3624, %v4027
        %v4092 = vadd.f32 %v3626, %v4028
        %v4093 = vadd.f32 %v3628, %v4029
        %v4094 = vadd.f32 %v3632, %v4030
        %v4095 = vadd.f32 %v3634, %v4031
        %v4096 = vadd.f32 %v3636, %v4032
        %v4097 = vadd.f32 %v3638, %v4033
        %v4098 = vadd.f32 %v3642, %v4034
        %v4099 = vadd.f32 %v3644, %v4035
        %v4100 = vadd.f32 %v3646, %v4036
        %v4101 = vadd.f32 %v3648, %v4037
        %v4102 = vadd.f32 %v3652, %v4038
        %v4103 = vadd.f32 %v3654, %v4039
        %v4104 = vadd.f32 %v3656, %v4040
        %v4105 = vadd.f32 %v3658, %v4041
        %v4106 = vadd.f32 %v3662, %v4042
        %v4107 = vadd.f32 %v3664, %v4043
        %v4108 = vadd.f32 %v3666, %v4044
        %v4109 = vadd.f32 %v3668, %v4045
        %v4110 = vmax.f32 %v4046, 0.0
        %v4111 = vmax.f32 %v4047, 0.0
        %v4112 = vmax.f32 %v4048, 0.0
        %v4113 = vmax.f32 %v4049, 0.0
        %v4114 = vmax.f32 %v4050, 0.0
        %v4115 = vmax.f32 %v4051, 0.0
        %v4116 = vmax.f32 %v4052, 0.0
        %v4117 = vmax.f32 %v4053, 0.0
        %v4118 = vmax.f32 %v4054, 0.0
        %v4119 = vmax.f32 %v4055, 0.0
        %v4120 = vmax.f32 %v4056, 0.0
        %v4121 = vmax.f32 %v4057, 0.0
        %v4122 = vmax.f32 %v4058, 0.0
        %v4123 = vmax.f32 %v4059, 0.0
        %v4124 = vmax.f32 %v4060, 0.0
        %v4125 = vmax.f32 %v4061, 0.0
        %v4126 = vmax.f32 %v4062, 0.0
        %v4127 = vmax.f32 %v4063, 0.0
        %v4128 = vmax.f32 %v4064, 0.0
        %v4129 = vmax.f32 %v4065, 0.0
        %v4130 = vmax.f32 %v4066, 0.0
        %v4131 = vmax.f32 %v4067, 0.0
        %v4132 = vmax.f32 %v4068, 0.0
        %v4133 = vmax.f32 %v4069, 0.0
        %v4134 = vmax.f32 %v4070, 0.0
        %v4135 = vmax.f32 %v4071, 0.0
        %v4136 = vmax.f32 %v4072, 0.0
        %v4137 = vmax.f32 %v4073, 0.0
        %v4138 = vmax.f32 %v4074, 0.0
        %v4139 = vmax.f32 %v4075, 0.0
        %v4140 = vmax.f32 %v4076, 0.0
        %v4141 = vmax.f32 %v4077, 0.0
        %v4142 = vmax.f32 %v4078, 0.0
        %v4143 = vmax.f32 %v4079, 0.0
        %v4144 = vmax.f32 %v4080, 0.0
        %v4145 = vmax.f32 %v4081, 0.0
        %v4146 = vmax.f32 %v4082, 0.0
        %v4147 = vmax.f32 %v4083, 0.0
        %v4148 = vmax.f32 %v4084, 0.0
        %v4149 = vmax.f32 %v4085, 0.0
        %v4150 = vmax.f32 %v4086, 0.0
        %v4151 = vmax.f32 %v4087, 0.0
        %v4152 = vmax.f32 %v4088, 0.0
        %v4153 = vmax.f32 %v4089, 0.0
        %v4154 = vmax.f32 %v4090, 0.0
        %v4155 = vmax.f32 %v4091, 0.0
        %v4156 = vmax.f32 %v4092, 0.0
        %v4157 = vmax.f32 %v4093, 0.0
        %v4158 = vmax.f32 %v4094, 0.0
        %v4159 = vmax.f32 %v4095, 0.0
        %v4160 = vmax.f32 %v4096, 0.0
        %v4161 = vmax.f32 %v4097, 0.0
        %v4162 = vmax.f32 %v4098, 0.0
        %v4163 = vmax.f32 %v4099, 0.0
        %v4164 = vmax.f32 %v4100, 0.0
        %v4165 = vmax.f32 %v4101, 0.0
        %v4166 = vmax.f32 %v4102, 0.0
        %v4167 = vmax.f32 %v4103, 0.0
        %v4168 = vmax.f32 %v4104, 0.0
        %v4169 = vmax.f32 %v4105, 0.0
        %v4170 = vmax.f32 %v4106, 0.0
        %v4171 = vmax.f32 %v4107, 0.0
        %v4172 = vmax.f32 %v4108, 0.0
        %v4173 = vmax.f32 %v4109, 0.0
        %v4174 = vpack.c.bf16 %v4112, %v4110
        %v4175 = vpack.c.bf16 %v4113, %v4111
        %v4176 = vpack.c.bf16 %v4116, %v4114
        %v4177 = vpack.c.bf16 %v4117, %v4115
        %v4178 = vpack.c.bf16 %v4120, %v4118
        %v4179 = vpack.c.bf16 %v4121, %v4119
        %v4180 = vpack.c.bf16 %v4124, %v4122
        %v4181 = vpack.c.bf16 %v4125, %v4123
        %v4182 = vpack.c.bf16 %v4128, %v4126
        %v4183 = vpack.c.bf16 %v4129, %v4127
        %v4184 = vpack.c.bf16 %v4132, %v4130
        %v4185 = vpack.c.bf16 %v4133, %v4131
        %v4186 = vpack.c.bf16 %v4136, %v4134
        %v4187 = vpack.c.bf16 %v4137, %v4135
        %v4188 = vpack.c.bf16 %v4140, %v4138
        %v4189 = vpack.c.bf16 %v4141, %v4139
        %v4190 = vpack.c.bf16 %v4144, %v4142
        %v4191 = vpack.c.bf16 %v4145, %v4143
        %v4192 = vpack.c.bf16 %v4148, %v4146
        %v4193 = vpack.c.bf16 %v4149, %v4147
        %v4194 = vpack.c.bf16 %v4152, %v4150
        %v4195 = vpack.c.bf16 %v4153, %v4151
        %v4196 = vpack.c.bf16 %v4156, %v4154
        %v4197 = vpack.c.bf16 %v4157, %v4155
        %v4198 = vpack.c.bf16 %v4160, %v4158
        %v4199 = vpack.c.bf16 %v4161, %v4159
        %v4200 = vpack.c.bf16 %v4164, %v4162
        %v4201 = vpack.c.bf16 %v4165, %v4163
        %v4202 = vpack.c.bf16 %v4168, %v4166
        %v4203 = vpack.c.bf16 %v4169, %v4167
        %v4204 = vpack.c.bf16 %v4172, %v4170
        %v4205 = vpack.c.bf16 %v4173, %v4171
        %s4206 = scalar_lea.vmem [#allocation2], 1280
        %v4207 = vld [vmem:[%s4206] sm:$0xff]
        %v4208 = vld [vmem:[%s4206 + $0x8] sm:$0xff]
        %v4209 = vld [vmem:[%s4206 + $0x10] sm:$0xff]
        %v4210 = vld [vmem:[%s4206 + $0x18] sm:$0xff]
        %v4211 = vld [vmem:[%s4206 + $0x20] sm:$0xff]
        %v4212 = vld [vmem:[%s4206 + $0x28] sm:$0xff]
        %v4213 = vld [vmem:[%s4206 + $0x30] sm:$0xff]
        %v4214 = vld [vmem:[%s4206 + $0x38] sm:$0xff]
        %v4215 = vld [vmem:[%s4206 + $0x40] sm:$0xff]
        %v4216 = vld [vmem:[%s4206 + $0x48] sm:$0xff]
        %v4217 = vld [vmem:[%s4206 + $0x50] sm:$0xff]
        %v4218 = vld [vmem:[%s4206 + $0x58] sm:$0xff]
        %v4219 = vld [vmem:[%s4206 + $0x60] sm:$0xff]
        %v4220 = vld [vmem:[%s4206 + $0x68] sm:$0xff]
        %v4221 = vld [vmem:[%s4206 + $0x70] sm:$0xff]
        %v4222 = vld [vmem:[%s4206 + $0x78] sm:$0xff]
        %v4223 = vld [vmem:[%s4206 + $0x80] sm:$0xff]
        %v4224 = vld [vmem:[%s4206 + $0x88] sm:$0xff]
        %v4225 = vld [vmem:[%s4206 + $0x90] sm:$0xff]
        %v4226 = vld [vmem:[%s4206 + $0x98] sm:$0xff]
        %v4227 = vld [vmem:[%s4206 + $0xa0] sm:$0xff]
        %v4228 = vld [vmem:[%s4206 + $0xa8] sm:$0xff]
        %v4229 = vld [vmem:[%s4206 + $0xb0] sm:$0xff]
        %v4230 = vld [vmem:[%s4206 + $0xb8] sm:$0xff]
        %v4231 = vld [vmem:[%s4206 + $0xc0] sm:$0xff]
        %v4232 = vld [vmem:[%s4206 + $0xc8] sm:$0xff]
        %v4233 = vld [vmem:[%s4206 + $0xd0] sm:$0xff]
        %v4234 = vld [vmem:[%s4206 + $0xd8] sm:$0xff]
        %v4235 = vld [vmem:[%s4206 + $0xe0] sm:$0xff]
        %v4236 = vld [vmem:[%s4206 + $0xe8] sm:$0xff]
        %v4237 = vld [vmem:[%s4206 + $0xf0] sm:$0xff]
        %v4238 = vld [vmem:[%s4206 + $0xf8] sm:$0xff]
        %s4239 = scalar_lea.vmem %s4, 6
        %v4240 = vld [vmem:[%s4239] ss:$8 sm:$0x3]
        %v4242 = vlaneseq
        %v4243 = vshrl.u32 %v4242, 7
        %v4244 = vsub.s32 0, %v4243
        %v4245 = vrot.slane %v4240, %v4244
        %v4246 = vlaneseq
        %v4247 = vshrl.u32 %v4246, 7
        %v4248 = vsub.s32 1, %v4247
        %v4249 = vrot.slane %v4240, %v4248
        %v4284 = vunpack.c.l.b16 %v4207
        %v4285 = vunpack.c.h.b16 %v4207
        %v4286 = vunpack.c.l.b16 %v4208
        %v4287 = vunpack.c.h.b16 %v4208
        %v4288 = vunpack.c.l.b16 %v4209
        %v4289 = vunpack.c.h.b16 %v4209
        %v4290 = vunpack.c.l.b16 %v4210
        %v4291 = vunpack.c.h.b16 %v4210
        %v4292 = vunpack.c.l.b16 %v4211
        %v4293 = vunpack.c.h.b16 %v4211
        %v4294 = vunpack.c.l.b16 %v4212
        %v4295 = vunpack.c.h.b16 %v4212
        %v4296 = vunpack.c.l.b16 %v4213
        %v4297 = vunpack.c.h.b16 %v4213
        %v4298 = vunpack.c.l.b16 %v4214
        %v4299 = vunpack.c.h.b16 %v4214
        %v4300 = vunpack.c.l.b16 %v4215
        %v4301 = vunpack.c.h.b16 %v4215
        %v4302 = vunpack.c.l.b16 %v4216
        %v4303 = vunpack.c.h.b16 %v4216
        %v4304 = vunpack.c.l.b16 %v4217
        %v4305 = vunpack.c.h.b16 %v4217
        %v4306 = vunpack.c.l.b16 %v4218
        %v4307 = vunpack.c.h.b16 %v4218
        %v4308 = vunpack.c.l.b16 %v4219
        %v4309 = vunpack.c.h.b16 %v4219
        %v4310 = vunpack.c.l.b16 %v4220
        %v4311 = vunpack.c.h.b16 %v4220
        %v4312 = vunpack.c.l.b16 %v4221
        %v4313 = vunpack.c.h.b16 %v4221
        %v4314 = vunpack.c.l.b16 %v4222
        %v4315 = vunpack.c.h.b16 %v4222
        %v4316 = vunpack.c.l.b16 %v4223
        %v4317 = vunpack.c.h.b16 %v4223
        %v4318 = vunpack.c.l.b16 %v4224
        %v4319 = vunpack.c.h.b16 %v4224
        %v4320 = vunpack.c.l.b16 %v4225
        %v4321 = vunpack.c.h.b16 %v4225
        %v4322 = vunpack.c.l.b16 %v4226
        %v4323 = vunpack.c.h.b16 %v4226
        %v4324 = vunpack.c.l.b16 %v4227
        %v4325 = vunpack.c.h.b16 %v4227
        %v4326 = vunpack.c.l.b16 %v4228
        %v4327 = vunpack.c.h.b16 %v4228
        %v4328 = vunpack.c.l.b16 %v4229
        %v4329 = vunpack.c.h.b16 %v4229
        %v4330 = vunpack.c.l.b16 %v4230
        %v4331 = vunpack.c.h.b16 %v4230
        %v4332 = vunpack.c.l.b16 %v4231
        %v4333 = vunpack.c.h.b16 %v4231
        %v4334 = vunpack.c.l.b16 %v4232
        %v4335 = vunpack.c.h.b16 %v4232
        %v4336 = vunpack.c.l.b16 %v4233
        %v4337 = vunpack.c.h.b16 %v4233
        %v4338 = vunpack.c.l.b16 %v4234
        %v4339 = vunpack.c.h.b16 %v4234
        %v4340 = vunpack.c.l.b16 %v4235
        %v4341 = vunpack.c.h.b16 %v4235
        %v4342 = vunpack.c.l.b16 %v4236
        %v4343 = vunpack.c.h.b16 %v4236
        %v4344 = vunpack.c.l.b16 %v4237
        %v4345 = vunpack.c.h.b16 %v4237
        %v4346 = vunpack.c.l.b16 %v4238
        %v4347 = vunpack.c.h.b16 %v4238
        %v4348 = vpack.c.b16 %v4286, %v4284
        %v4349 = vpack.c.b16 %v4287, %v4285
        %v4350 = vpack.c.b16 %v4290, %v4288
        %v4351 = vpack.c.b16 %v4291, %v4289
        %v4352 = vpack.c.b16 %v4294, %v4292
        %v4353 = vpack.c.b16 %v4295, %v4293
        %v4354 = vpack.c.b16 %v4298, %v4296
        %v4355 = vpack.c.b16 %v4299, %v4297
        %v4356 = vpack.c.b16 %v4302, %v4300
        %v4357 = vpack.c.b16 %v4303, %v4301
        %v4358 = vpack.c.b16 %v4306, %v4304
        %v4359 = vpack.c.b16 %v4307, %v4305
        %v4360 = vpack.c.b16 %v4310, %v4308
        %v4361 = vpack.c.b16 %v4311, %v4309
        %v4362 = vpack.c.b16 %v4314, %v4312
        %v4363 = vpack.c.b16 %v4315, %v4313
        %v4364 = vpack.c.b16 %v4318, %v4316
        %v4365 = vpack.c.b16 %v4319, %v4317
        %v4366 = vpack.c.b16 %v4322, %v4320
        %v4367 = vpack.c.b16 %v4323, %v4321
        %v4368 = vpack.c.b16 %v4326, %v4324
        %v4369 = vpack.c.b16 %v4327, %v4325
        %v4370 = vpack.c.b16 %v4330, %v4328
        %v4371 = vpack.c.b16 %v4331, %v4329
        %v4372 = vpack.c.b16 %v4334, %v4332
        %v4373 = vpack.c.b16 %v4335, %v4333
        %v4374 = vpack.c.b16 %v4338, %v4336
        %v4375 = vpack.c.b16 %v4339, %v4337
        %v4376 = vpack.c.b16 %v4342, %v4340
        %v4377 = vpack.c.b16 %v4343, %v4341
        %v4378 = vpack.c.b16 %v4346, %v4344
        %v4379 = vpack.c.b16 %v4347, %v4345
        %4412 = vmatprep.subr.bf16.mxu0 %v4363
        %4413 = vmatpush1.bf16.msra.mxu0 %v4362
        %4414 = vmatprep.subr.bf16.mxu0 %v4361
        %4415 = vmatpush1.bf16.msra.mxu0 %v4360
        %4416 = vmatprep.subr.bf16.mxu0 %v4359
        %4417 = vmatpush1.bf16.msra.mxu0 %v4358
        %4418 = vmatprep.subr.bf16.mxu0 %v4357
        %4419 = vmatpush1.bf16.msra.mxu0 %v4356
        %4420 = vmatprep.subr.bf16.mxu0 %v4355
        %4421 = vmatpush1.bf16.msra.mxu0 %v4354
        %4422 = vmatprep.subr.bf16.mxu0 %v4353
        %4423 = vmatpush1.bf16.msra.mxu0 %v4352
        %4424 = vmatprep.subr.bf16.mxu0 %v4351
        %4425 = vmatpush1.bf16.msra.mxu0 %v4350
        %4426 = vmatprep.subr.bf16.mxu0 %v4349
        %4427 = vmatpush1.bf16.msra.mxu0 %v4348
        %4428 = vmatprep.subr.bf16.mxu0 %v4379
        %4429 = vmatpush2.bf16.msra.mxu0 %v4378
        %4430 = vmatprep.subr.bf16.mxu0 %v4377
        %4431 = vmatpush2.bf16.msra.mxu0 %v4376
        %4432 = vmatprep.subr.bf16.mxu0 %v4375
        %4433 = vmatpush2.bf16.msra.mxu0 %v4374
        %4434 = vmatprep.subr.bf16.mxu0 %v4373
        %4435 = vmatpush2.bf16.msra.mxu0 %v4372
        %4436 = vmatprep.subr.bf16.mxu0 %v4371
        %4437 = vmatpush2.bf16.msra.mxu0 %v4370
        %4438 = vmatprep.subr.bf16.mxu0 %v4369
        %4439 = vmatpush2.bf16.msra.mxu0 %v4368
        %4440 = vmatprep.subr.bf16.mxu0 %v4367
        %4441 = vmatpush2.bf16.msra.mxu0 %v4366
        %4442 = vmatprep.subr.bf16.mxu0 %v4365
        %4443 = vmatpush2.bf16.msra.mxu0 %v4364
        %4444 = vmatprep.mubr.bf16.mxu0 %v4175
        %4445 = vmatmul.mubr.bf16.gmra.mxu0 %v4174
        %v4446 = vpop.f32.mrf.mxu0
        %v4447 = vadd.f32 %v4245, %v4446
        %v4448 = vpop.f32.mrf.mxu0
        %v4449 = vadd.f32 %v4249, %v4448
        %v4450 = vpop.f32.mrf.mxu0
        %v4451 = vadd.f32 %v4245, %v4450
        %v4452 = vpop.f32.mrf.mxu0
        %v4453 = vadd.f32 %v4249, %v4452
        %4454 = vmatprep.mubr.bf16.mxu0 %v4177
        %4455 = vmatmul.mubr.bf16.gmra.mxu0 %v4176
        %v4456 = vpop.f32.mrf.mxu0
        %v4457 = vadd.f32 %v4245, %v4456
        %v4458 = vpop.f32.mrf.mxu0
        %v4459 = vadd.f32 %v4249, %v4458
        %v4460 = vpop.f32.mrf.mxu0
        %v4461 = vadd.f32 %v4245, %v4460
        %v4462 = vpop.f32.mrf.mxu0
        %v4463 = vadd.f32 %v4249, %v4462
        %4464 = vmatprep.mubr.bf16.mxu0 %v4179
        %4465 = vmatmul.mubr.bf16.gmra.mxu0 %v4178
        %v4466 = vpop.f32.mrf.mxu0
        %v4467 = vadd.f32 %v4245, %v4466
        %v4468 = vpop.f32.mrf.mxu0
        %v4469 = vadd.f32 %v4249, %v4468
        %v4470 = vpop.f32.mrf.mxu0
        %v4471 = vadd.f32 %v4245, %v4470
        %v4472 = vpop.f32.mrf.mxu0
        %v4473 = vadd.f32 %v4249, %v4472
        %4474 = vmatprep.mubr.bf16.mxu0 %v4181
        %4475 = vmatmul.mubr.bf16.gmra.mxu0 %v4180
        %v4476 = vpop.f32.mrf.mxu0
        %v4477 = vadd.f32 %v4245, %v4476
        %v4478 = vpop.f32.mrf.mxu0
        %v4479 = vadd.f32 %v4249, %v4478
        %v4480 = vpop.f32.mrf.mxu0
        %v4481 = vadd.f32 %v4245, %v4480
        %v4482 = vpop.f32.mrf.mxu0
        %v4483 = vadd.f32 %v4249, %v4482
        %4484 = vmatprep.mubr.bf16.mxu0 %v4183
        %4485 = vmatmul.mubr.bf16.gmra.mxu0 %v4182
        %v4486 = vpop.f32.mrf.mxu0
        %v4487 = vadd.f32 %v4245, %v4486
        %v4488 = vpop.f32.mrf.mxu0
        %v4489 = vadd.f32 %v4249, %v4488
        %v4490 = vpop.f32.mrf.mxu0
        %v4491 = vadd.f32 %v4245, %v4490
        %v4492 = vpop.f32.mrf.mxu0
        %v4493 = vadd.f32 %v4249, %v4492
        %4494 = vmatprep.mubr.bf16.mxu0 %v4185
        %4495 = vmatmul.mubr.bf16.gmra.mxu0 %v4184
        %v4496 = vpop.f32.mrf.mxu0
        %v4497 = vadd.f32 %v4245, %v4496
        %v4498 = vpop.f32.mrf.mxu0
        %v4499 = vadd.f32 %v4249, %v4498
        %v4500 = vpop.f32.mrf.mxu0
        %v4501 = vadd.f32 %v4245, %v4500
        %v4502 = vpop.f32.mrf.mxu0
        %v4503 = vadd.f32 %v4249, %v4502
        %4504 = vmatprep.mubr.bf16.mxu0 %v4187
        %4505 = vmatmul.mubr.bf16.gmra.mxu0 %v4186
        %v4506 = vpop.f32.mrf.mxu0
        %v4507 = vadd.f32 %v4245, %v4506
        %v4508 = vpop.f32.mrf.mxu0
        %v4509 = vadd.f32 %v4249, %v4508
        %v4510 = vpop.f32.mrf.mxu0
        %v4511 = vadd.f32 %v4245, %v4510
        %v4512 = vpop.f32.mrf.mxu0
        %v4513 = vadd.f32 %v4249, %v4512
        %4514 = vmatprep.mubr.bf16.mxu0 %v4189
        %4515 = vmatmul.mubr.bf16.gmra.mxu0 %v4188
        %v4516 = vpop.f32.mrf.mxu0
        %v4517 = vadd.f32 %v4245, %v4516
        %v4518 = vpop.f32.mrf.mxu0
        %v4519 = vadd.f32 %v4249, %v4518
        %v4520 = vpop.f32.mrf.mxu0
        %v4521 = vadd.f32 %v4245, %v4520
        %v4522 = vpop.f32.mrf.mxu0
        %v4523 = vadd.f32 %v4249, %v4522
        %4524 = vmatprep.mubr.bf16.mxu0 %v4191
        %4525 = vmatmul.mubr.bf16.gmra.mxu0 %v4190
        %v4526 = vpop.f32.mrf.mxu0
        %v4527 = vadd.f32 %v4245, %v4526
        %v4528 = vpop.f32.mrf.mxu0
        %v4529 = vadd.f32 %v4249, %v4528
        %v4530 = vpop.f32.mrf.mxu0
        %v4531 = vadd.f32 %v4245, %v4530
        %v4532 = vpop.f32.mrf.mxu0
        %v4533 = vadd.f32 %v4249, %v4532
        %4534 = vmatprep.mubr.bf16.mxu0 %v4193
        %4535 = vmatmul.mubr.bf16.gmra.mxu0 %v4192
        %v4536 = vpop.f32.mrf.mxu0
        %v4537 = vadd.f32 %v4245, %v4536
        %v4538 = vpop.f32.mrf.mxu0
        %v4539 = vadd.f32 %v4249, %v4538
        %v4540 = vpop.f32.mrf.mxu0
        %v4541 = vadd.f32 %v4245, %v4540
        %v4542 = vpop.f32.mrf.mxu0
        %v4543 = vadd.f32 %v4249, %v4542
        %4544 = vmatprep.mubr.bf16.mxu0 %v4195
        %4545 = vmatmul.mubr.bf16.gmra.mxu0 %v4194
        %v4546 = vpop.f32.mrf.mxu0
        %v4547 = vadd.f32 %v4245, %v4546
        %v4548 = vpop.f32.mrf.mxu0
        %v4549 = vadd.f32 %v4249, %v4548
        %v4550 = vpop.f32.mrf.mxu0
        %v4551 = vadd.f32 %v4245, %v4550
        %v4552 = vpop.f32.mrf.mxu0
        %v4553 = vadd.f32 %v4249, %v4552
        %4554 = vmatprep.mubr.bf16.mxu0 %v4197
        %4555 = vmatmul.mubr.bf16.gmra.mxu0 %v4196
        %v4556 = vpop.f32.mrf.mxu0
        %v4557 = vadd.f32 %v4245, %v4556
        %v4558 = vpop.f32.mrf.mxu0
        %v4559 = vadd.f32 %v4249, %v4558
        %v4560 = vpop.f32.mrf.mxu0
        %v4561 = vadd.f32 %v4245, %v4560
        %v4562 = vpop.f32.mrf.mxu0
        %v4563 = vadd.f32 %v4249, %v4562
        %4564 = vmatprep.mubr.bf16.mxu0 %v4199
        %4565 = vmatmul.mubr.bf16.gmra.mxu0 %v4198
        %v4566 = vpop.f32.mrf.mxu0
        %v4567 = vadd.f32 %v4245, %v4566
        %v4568 = vpop.f32.mrf.mxu0
        %v4569 = vadd.f32 %v4249, %v4568
        %v4570 = vpop.f32.mrf.mxu0
        %v4571 = vadd.f32 %v4245, %v4570
        %v4572 = vpop.f32.mrf.mxu0
        %v4573 = vadd.f32 %v4249, %v4572
        %4574 = vmatprep.mubr.bf16.mxu0 %v4201
        %4575 = vmatmul.mubr.bf16.gmra.mxu0 %v4200
        %v4576 = vpop.f32.mrf.mxu0
        %v4577 = vadd.f32 %v4245, %v4576
        %v4578 = vpop.f32.mrf.mxu0
        %v4579 = vadd.f32 %v4249, %v4578
        %v4580 = vpop.f32.mrf.mxu0
        %v4581 = vadd.f32 %v4245, %v4580
        %v4582 = vpop.f32.mrf.mxu0
        %v4583 = vadd.f32 %v4249, %v4582
        %4584 = vmatprep.mubr.bf16.mxu0 %v4203
        %4585 = vmatmul.mubr.bf16.gmra.mxu0 %v4202
        %v4586 = vpop.f32.mrf.mxu0
        %v4587 = vadd.f32 %v4245, %v4586
        %v4588 = vpop.f32.mrf.mxu0
        %v4589 = vadd.f32 %v4249, %v4588
        %v4590 = vpop.f32.mrf.mxu0
        %v4591 = vadd.f32 %v4245, %v4590
        %v4592 = vpop.f32.mrf.mxu0
        %v4593 = vadd.f32 %v4249, %v4592
        %4594 = vmatprep.mubr.bf16.mxu0 %v4205
        %4595 = vmatmul.mubr.bf16.gmra.mxu0 %v4204
        %v4596 = vpop.f32.mrf.mxu0
        %v4597 = vadd.f32 %v4245, %v4596
        %v4598 = vpop.f32.mrf.mxu0
        %v4599 = vadd.f32 %v4249, %v4598
        %v4600 = vpop.f32.mrf.mxu0
        %v4601 = vadd.f32 %v4245, %v4600
        %v4602 = vpop.f32.mrf.mxu0
        %v4603 = vadd.f32 %v4249, %v4602
        %4604 = vdwg.mxu0
        %v4605 = vmax.f32 %v4447, 0.0
        %v4606 = vmax.f32 %v4449, 0.0
        %v4607 = vmax.f32 %v4451, 0.0
        %v4608 = vmax.f32 %v4453, 0.0
        %v4609 = vmax.f32 %v4457, 0.0
        %v4610 = vmax.f32 %v4459, 0.0
        %v4611 = vmax.f32 %v4461, 0.0
        %v4612 = vmax.f32 %v4463, 0.0
        %v4613 = vmax.f32 %v4467, 0.0
        %v4614 = vmax.f32 %v4469, 0.0
        %v4615 = vmax.f32 %v4471, 0.0
        %v4616 = vmax.f32 %v4473, 0.0
        %v4617 = vmax.f32 %v4477, 0.0
        %v4618 = vmax.f32 %v4479, 0.0
        %v4619 = vmax.f32 %v4481, 0.0
        %v4620 = vmax.f32 %v4483, 0.0
        %v4621 = vmax.f32 %v4487, 0.0
        %v4622 = vmax.f32 %v4489, 0.0
        %v4623 = vmax.f32 %v4491, 0.0
        %v4624 = vmax.f32 %v4493, 0.0
        %v4625 = vmax.f32 %v4497, 0.0
        %v4626 = vmax.f32 %v4499, 0.0
        %v4627 = vmax.f32 %v4501, 0.0
        %v4628 = vmax.f32 %v4503, 0.0
        %v4629 = vmax.f32 %v4507, 0.0
        %v4630 = vmax.f32 %v4509, 0.0
        %v4631 = vmax.f32 %v4511, 0.0
        %v4632 = vmax.f32 %v4513, 0.0
        %v4633 = vmax.f32 %v4517, 0.0
        %v4634 = vmax.f32 %v4519, 0.0
        %v4635 = vmax.f32 %v4521, 0.0
        %v4636 = vmax.f32 %v4523, 0.0
        %v4637 = vmax.f32 %v4527, 0.0
        %v4638 = vmax.f32 %v4529, 0.0
        %v4639 = vmax.f32 %v4531, 0.0
        %v4640 = vmax.f32 %v4533, 0.0
        %v4641 = vmax.f32 %v4537, 0.0
        %v4642 = vmax.f32 %v4539, 0.0
        %v4643 = vmax.f32 %v4541, 0.0
        %v4644 = vmax.f32 %v4543, 0.0
        %v4645 = vmax.f32 %v4547, 0.0
        %v4646 = vmax.f32 %v4549, 0.0
        %v4647 = vmax.f32 %v4551, 0.0
        %v4648 = vmax.f32 %v4553, 0.0
        %v4649 = vmax.f32 %v4557, 0.0
        %v4650 = vmax.f32 %v4559, 0.0
        %v4651 = vmax.f32 %v4561, 0.0
        %v4652 = vmax.f32 %v4563, 0.0
        %v4653 = vmax.f32 %v4567, 0.0
        %v4654 = vmax.f32 %v4569, 0.0
        %v4655 = vmax.f32 %v4571, 0.0
        %v4656 = vmax.f32 %v4573, 0.0
        %v4657 = vmax.f32 %v4577, 0.0
        %v4658 = vmax.f32 %v4579, 0.0
        %v4659 = vmax.f32 %v4581, 0.0
        %v4660 = vmax.f32 %v4583, 0.0
        %v4661 = vmax.f32 %v4587, 0.0
        %v4662 = vmax.f32 %v4589, 0.0
        %v4663 = vmax.f32 %v4591, 0.0
        %v4664 = vmax.f32 %v4593, 0.0
        %v4665 = vmax.f32 %v4597, 0.0
        %v4666 = vmax.f32 %v4599, 0.0
        %v4667 = vmax.f32 %v4601, 0.0
        %v4668 = vmax.f32 %v4603, 0.0
        %v4669 = vpack.c.bf16 %v4607, %v4605
        %v4670 = vpack.c.bf16 %v4608, %v4606
        %v4671 = vpack.c.bf16 %v4611, %v4609
        %v4672 = vpack.c.bf16 %v4612, %v4610
        %v4673 = vpack.c.bf16 %v4615, %v4613
        %v4674 = vpack.c.bf16 %v4616, %v4614
        %v4675 = vpack.c.bf16 %v4619, %v4617
        %v4676 = vpack.c.bf16 %v4620, %v4618
        %v4677 = vpack.c.bf16 %v4623, %v4621
        %v4678 = vpack.c.bf16 %v4624, %v4622
        %v4679 = vpack.c.bf16 %v4627, %v4625
        %v4680 = vpack.c.bf16 %v4628, %v4626
        %v4681 = vpack.c.bf16 %v4631, %v4629
        %v4682 = vpack.c.bf16 %v4632, %v4630
        %v4683 = vpack.c.bf16 %v4635, %v4633
        %v4684 = vpack.c.bf16 %v4636, %v4634
        %v4685 = vpack.c.bf16 %v4639, %v4637
        %v4686 = vpack.c.bf16 %v4640, %v4638
        %v4687 = vpack.c.bf16 %v4643, %v4641
        %v4688 = vpack.c.bf16 %v4644, %v4642
        %v4689 = vpack.c.bf16 %v4647, %v4645
        %v4690 = vpack.c.bf16 %v4648, %v4646
        %v4691 = vpack.c.bf16 %v4651, %v4649
        %v4692 = vpack.c.bf16 %v4652, %v4650
        %v4693 = vpack.c.bf16 %v4655, %v4653
        %v4694 = vpack.c.bf16 %v4656, %v4654
        %v4695 = vpack.c.bf16 %v4659, %v4657
        %v4696 = vpack.c.bf16 %v4660, %v4658
        %v4697 = vpack.c.bf16 %v4663, %v4661
        %v4698 = vpack.c.bf16 %v4664, %v4662
        %v4699 = vpack.c.bf16 %v4667, %v4665
        %v4700 = vpack.c.bf16 %v4668, %v4666
        %s4701 = scalar_lea.vmem [#allocation2], 1536
        %v4702 = vld [vmem:[%s4701] sm:$0xff]
        %v4703 = vld [vmem:[%s4701 + $0x8] sm:$0xff]
        %v4704 = vld [vmem:[%s4701 + $0x10] sm:$0xff]
        %v4705 = vld [vmem:[%s4701 + $0x18] sm:$0xff]
        %v4706 = vld [vmem:[%s4701 + $0x20] sm:$0xff]
        %v4707 = vld [vmem:[%s4701 + $0x28] sm:$0xff]
        %v4708 = vld [vmem:[%s4701 + $0x30] sm:$0xff]
        %v4709 = vld [vmem:[%s4701 + $0x38] sm:$0xff]
        %v4710 = vld [vmem:[%s4701 + $0x40] sm:$0xff]
        %v4711 = vld [vmem:[%s4701 + $0x48] sm:$0xff]
        %v4712 = vld [vmem:[%s4701 + $0x50] sm:$0xff]
        %v4713 = vld [vmem:[%s4701 + $0x58] sm:$0xff]
        %v4714 = vld [vmem:[%s4701 + $0x60] sm:$0xff]
        %v4715 = vld [vmem:[%s4701 + $0x68] sm:$0xff]
        %v4716 = vld [vmem:[%s4701 + $0x70] sm:$0xff]
        %v4717 = vld [vmem:[%s4701 + $0x78] sm:$0xff]
        %v4718 = vld [vmem:[%s4701 + $0x80] sm:$0xff]
        %v4719 = vld [vmem:[%s4701 + $0x88] sm:$0xff]
        %v4720 = vld [vmem:[%s4701 + $0x90] sm:$0xff]
        %v4721 = vld [vmem:[%s4701 + $0x98] sm:$0xff]
        %v4722 = vld [vmem:[%s4701 + $0xa0] sm:$0xff]
        %v4723 = vld [vmem:[%s4701 + $0xa8] sm:$0xff]
        %v4724 = vld [vmem:[%s4701 + $0xb0] sm:$0xff]
        %v4725 = vld [vmem:[%s4701 + $0xb8] sm:$0xff]
        %v4726 = vld [vmem:[%s4701 + $0xc0] sm:$0xff]
        %v4727 = vld [vmem:[%s4701 + $0xc8] sm:$0xff]
        %v4728 = vld [vmem:[%s4701 + $0xd0] sm:$0xff]
        %v4729 = vld [vmem:[%s4701 + $0xd8] sm:$0xff]
        %v4730 = vld [vmem:[%s4701 + $0xe0] sm:$0xff]
        %v4731 = vld [vmem:[%s4701 + $0xe8] sm:$0xff]
        %v4732 = vld [vmem:[%s4701 + $0xf0] sm:$0xff]
        %v4733 = vld [vmem:[%s4701 + $0xf8] sm:$0xff]
        %s4734 = scalar_lea.vmem %s4, 7
        %v4735 = vld [vmem:[%s4734] ss:$8 sm:$0x3]
        %v4737 = vlaneseq
        %v4738 = vshrl.u32 %v4737, 7
        %v4739 = vsub.s32 0, %v4738
        %v4740 = vrot.slane %v4735, %v4739
        %v4741 = vlaneseq
        %v4742 = vshrl.u32 %v4741, 7
        %v4743 = vsub.s32 1, %v4742
        %v4744 = vrot.slane %v4735, %v4743
        %v4779 = vunpack.c.l.b16 %v4702
        %v4780 = vunpack.c.h.b16 %v4702
        %v4781 = vunpack.c.l.b16 %v4703
        %v4782 = vunpack.c.h.b16 %v4703
        %v4783 = vunpack.c.l.b16 %v4704
        %v4784 = vunpack.c.h.b16 %v4704
        %v4785 = vunpack.c.l.b16 %v4705
        %v4786 = vunpack.c.h.b16 %v4705
        %v4787 = vunpack.c.l.b16 %v4706
        %v4788 = vunpack.c.h.b16 %v4706
        %v4789 = vunpack.c.l.b16 %v4707
        %v4790 = vunpack.c.h.b16 %v4707
        %v4791 = vunpack.c.l.b16 %v4708
        %v4792 = vunpack.c.h.b16 %v4708
        %v4793 = vunpack.c.l.b16 %v4709
        %v4794 = vunpack.c.h.b16 %v4709
        %v4795 = vunpack.c.l.b16 %v4710
        %v4796 = vunpack.c.h.b16 %v4710
        %v4797 = vunpack.c.l.b16 %v4711
        %v4798 = vunpack.c.h.b16 %v4711
        %v4799 = vunpack.c.l.b16 %v4712
        %v4800 = vunpack.c.h.b16 %v4712
        %v4801 = vunpack.c.l.b16 %v4713
        %v4802 = vunpack.c.h.b16 %v4713
        %v4803 = vunpack.c.l.b16 %v4714
        %v4804 = vunpack.c.h.b16 %v4714
        %v4805 = vunpack.c.l.b16 %v4715
        %v4806 = vunpack.c.h.b16 %v4715
        %v4807 = vunpack.c.l.b16 %v4716
        %v4808 = vunpack.c.h.b16 %v4716
        %v4809 = vunpack.c.l.b16 %v4717
        %v4810 = vunpack.c.h.b16 %v4717
        %v4811 = vunpack.c.l.b16 %v4718
        %v4812 = vunpack.c.h.b16 %v4718
        %v4813 = vunpack.c.l.b16 %v4719
        %v4814 = vunpack.c.h.b16 %v4719
        %v4815 = vunpack.c.l.b16 %v4720
        %v4816 = vunpack.c.h.b16 %v4720
        %v4817 = vunpack.c.l.b16 %v4721
        %v4818 = vunpack.c.h.b16 %v4721
        %v4819 = vunpack.c.l.b16 %v4722
        %v4820 = vunpack.c.h.b16 %v4722
        %v4821 = vunpack.c.l.b16 %v4723
        %v4822 = vunpack.c.h.b16 %v4723
        %v4823 = vunpack.c.l.b16 %v4724
        %v4824 = vunpack.c.h.b16 %v4724
        %v4825 = vunpack.c.l.b16 %v4725
        %v4826 = vunpack.c.h.b16 %v4725
        %v4827 = vunpack.c.l.b16 %v4726
        %v4828 = vunpack.c.h.b16 %v4726
        %v4829 = vunpack.c.l.b16 %v4727
        %v4830 = vunpack.c.h.b16 %v4727
        %v4831 = vunpack.c.l.b16 %v4728
        %v4832 = vunpack.c.h.b16 %v4728
        %v4833 = vunpack.c.l.b16 %v4729
        %v4834 = vunpack.c.h.b16 %v4729
        %v4835 = vunpack.c.l.b16 %v4730
        %v4836 = vunpack.c.h.b16 %v4730
        %v4837 = vunpack.c.l.b16 %v4731
        %v4838 = vunpack.c.h.b16 %v4731
        %v4839 = vunpack.c.l.b16 %v4732
        %v4840 = vunpack.c.h.b16 %v4732
        %v4841 = vunpack.c.l.b16 %v4733
        %v4842 = vunpack.c.h.b16 %v4733
        %v4843 = vpack.c.b16 %v4781, %v4779
        %v4844 = vpack.c.b16 %v4782, %v4780
        %v4845 = vpack.c.b16 %v4785, %v4783
        %v4846 = vpack.c.b16 %v4786, %v4784
        %v4847 = vpack.c.b16 %v4789, %v4787
        %v4848 = vpack.c.b16 %v4790, %v4788
        %v4849 = vpack.c.b16 %v4793, %v4791
        %v4850 = vpack.c.b16 %v4794, %v4792
        %v4851 = vpack.c.b16 %v4797, %v4795
        %v4852 = vpack.c.b16 %v4798, %v4796
        %v4853 = vpack.c.b16 %v4801, %v4799
        %v4854 = vpack.c.b16 %v4802, %v4800
        %v4855 = vpack.c.b16 %v4805, %v4803
        %v4856 = vpack.c.b16 %v4806, %v4804
        %v4857 = vpack.c.b16 %v4809, %v4807
        %v4858 = vpack.c.b16 %v4810, %v4808
        %v4859 = vpack.c.b16 %v4813, %v4811
        %v4860 = vpack.c.b16 %v4814, %v4812
        %v4861 = vpack.c.b16 %v4817, %v4815
        %v4862 = vpack.c.b16 %v4818, %v4816
        %v4863 = vpack.c.b16 %v4821, %v4819
        %v4864 = vpack.c.b16 %v4822, %v4820
        %v4865 = vpack.c.b16 %v4825, %v4823
        %v4866 = vpack.c.b16 %v4826, %v4824
        %v4867 = vpack.c.b16 %v4829, %v4827
        %v4868 = vpack.c.b16 %v4830, %v4828
        %v4869 = vpack.c.b16 %v4833, %v4831
        %v4870 = vpack.c.b16 %v4834, %v4832
        %v4871 = vpack.c.b16 %v4837, %v4835
        %v4872 = vpack.c.b16 %v4838, %v4836
        %v4873 = vpack.c.b16 %v4841, %v4839
        %v4874 = vpack.c.b16 %v4842, %v4840
        %4907 = vmatprep.subr.bf16.mxu0 %v4858
        %4908 = vmatpush1.bf16.msra.mxu0 %v4857
        %4909 = vmatprep.subr.bf16.mxu0 %v4856
        %4910 = vmatpush1.bf16.msra.mxu0 %v4855
        %4911 = vmatprep.subr.bf16.mxu0 %v4854
        %4912 = vmatpush1.bf16.msra.mxu0 %v4853
        %4913 = vmatprep.subr.bf16.mxu0 %v4852
        %4914 = vmatpush1.bf16.msra.mxu0 %v4851
        %4915 = vmatprep.subr.bf16.mxu0 %v4850
        %4916 = vmatpush1.bf16.msra.mxu0 %v4849
        %4917 = vmatprep.subr.bf16.mxu0 %v4848
        %4918 = vmatpush1.bf16.msra.mxu0 %v4847
        %4919 = vmatprep.subr.bf16.mxu0 %v4846
        %4920 = vmatpush1.bf16.msra.mxu0 %v4845
        %4921 = vmatprep.subr.bf16.mxu0 %v4844
        %4922 = vmatpush1.bf16.msra.mxu0 %v4843
        %4923 = vmatprep.subr.bf16.mxu0 %v4874
        %4924 = vmatpush2.bf16.msra.mxu0 %v4873
        %4925 = vmatprep.subr.bf16.mxu0 %v4872
        %4926 = vmatpush2.bf16.msra.mxu0 %v4871
        %4927 = vmatprep.subr.bf16.mxu0 %v4870
        %4928 = vmatpush2.bf16.msra.mxu0 %v4869
        %4929 = vmatprep.subr.bf16.mxu0 %v4868
        %4930 = vmatpush2.bf16.msra.mxu0 %v4867
        %4931 = vmatprep.subr.bf16.mxu0 %v4866
        %4932 = vmatpush2.bf16.msra.mxu0 %v4865
        %4933 = vmatprep.subr.bf16.mxu0 %v4864
        %4934 = vmatpush2.bf16.msra.mxu0 %v4863
        %4935 = vmatprep.subr.bf16.mxu0 %v4862
        %4936 = vmatpush2.bf16.msra.mxu0 %v4861
        %4937 = vmatprep.subr.bf16.mxu0 %v4860
        %4938 = vmatpush2.bf16.msra.mxu0 %v4859
        %4939 = vmatprep.mubr.bf16.mxu0 %v4670
        %4940 = vmatmul.mubr.bf16.gmra.mxu0 %v4669
        %v4941 = vpop.f32.mrf.mxu0
        %v4942 = vadd.f32 %v4740, %v4941
        %v4943 = vpop.f32.mrf.mxu0
        %v4944 = vadd.f32 %v4744, %v4943
        %v4945 = vpop.f32.mrf.mxu0
        %v4946 = vadd.f32 %v4740, %v4945
        %v4947 = vpop.f32.mrf.mxu0
        %v4948 = vadd.f32 %v4744, %v4947
        %4949 = vmatprep.mubr.bf16.mxu0 %v4672
        %4950 = vmatmul.mubr.bf16.gmra.mxu0 %v4671
        %v4951 = vpop.f32.mrf.mxu0
        %v4952 = vadd.f32 %v4740, %v4951
        %v4953 = vpop.f32.mrf.mxu0
        %v4954 = vadd.f32 %v4744, %v4953
        %v4955 = vpop.f32.mrf.mxu0
        %v4956 = vadd.f32 %v4740, %v4955
        %v4957 = vpop.f32.mrf.mxu0
        %v4958 = vadd.f32 %v4744, %v4957
        %4959 = vmatprep.mubr.bf16.mxu0 %v4674
        %4960 = vmatmul.mubr.bf16.gmra.mxu0 %v4673
        %v4961 = vpop.f32.mrf.mxu0
        %v4962 = vadd.f32 %v4740, %v4961
        %v4963 = vpop.f32.mrf.mxu0
        %v4964 = vadd.f32 %v4744, %v4963
        %v4965 = vpop.f32.mrf.mxu0
        %v4966 = vadd.f32 %v4740, %v4965
        %v4967 = vpop.f32.mrf.mxu0
        %v4968 = vadd.f32 %v4744, %v4967
        %4969 = vmatprep.mubr.bf16.mxu0 %v4676
        %4970 = vmatmul.mubr.bf16.gmra.mxu0 %v4675
        %v4971 = vpop.f32.mrf.mxu0
        %v4972 = vadd.f32 %v4740, %v4971
        %v4973 = vpop.f32.mrf.mxu0
        %v4974 = vadd.f32 %v4744, %v4973
        %v4975 = vpop.f32.mrf.mxu0
        %v4976 = vadd.f32 %v4740, %v4975
        %v4977 = vpop.f32.mrf.mxu0
        %v4978 = vadd.f32 %v4744, %v4977
        %4979 = vmatprep.mubr.bf16.mxu0 %v4678
        %4980 = vmatmul.mubr.bf16.gmra.mxu0 %v4677
        %v4981 = vpop.f32.mrf.mxu0
        %v4982 = vadd.f32 %v4740, %v4981
        %v4983 = vpop.f32.mrf.mxu0
        %v4984 = vadd.f32 %v4744, %v4983
        %v4985 = vpop.f32.mrf.mxu0
        %v4986 = vadd.f32 %v4740, %v4985
        %v4987 = vpop.f32.mrf.mxu0
        %v4988 = vadd.f32 %v4744, %v4987
        %4989 = vmatprep.mubr.bf16.mxu0 %v4680
        %4990 = vmatmul.mubr.bf16.gmra.mxu0 %v4679
        %v4991 = vpop.f32.mrf.mxu0
        %v4992 = vadd.f32 %v4740, %v4991
        %v4993 = vpop.f32.mrf.mxu0
        %v4994 = vadd.f32 %v4744, %v4993
        %v4995 = vpop.f32.mrf.mxu0
        %v4996 = vadd.f32 %v4740, %v4995
        %v4997 = vpop.f32.mrf.mxu0
        %v4998 = vadd.f32 %v4744, %v4997
        %4999 = vmatprep.mubr.bf16.mxu0 %v4682
        %5000 = vmatmul.mubr.bf16.gmra.mxu0 %v4681
        %v5001 = vpop.f32.mrf.mxu0
        %v5002 = vadd.f32 %v4740, %v5001
        %v5003 = vpop.f32.mrf.mxu0
        %v5004 = vadd.f32 %v4744, %v5003
        %v5005 = vpop.f32.mrf.mxu0
        %v5006 = vadd.f32 %v4740, %v5005
        %v5007 = vpop.f32.mrf.mxu0
        %v5008 = vadd.f32 %v4744, %v5007
        %5009 = vmatprep.mubr.bf16.mxu0 %v4684
        %5010 = vmatmul.mubr.bf16.gmra.mxu0 %v4683
        %v5011 = vpop.f32.mrf.mxu0
        %v5012 = vadd.f32 %v4740, %v5011
        %v5013 = vpop.f32.mrf.mxu0
        %v5014 = vadd.f32 %v4744, %v5013
        %v5015 = vpop.f32.mrf.mxu0
        %v5016 = vadd.f32 %v4740, %v5015
        %v5017 = vpop.f32.mrf.mxu0
        %v5018 = vadd.f32 %v4744, %v5017
        %5019 = vmatprep.mubr.bf16.mxu0 %v4686
        %5020 = vmatmul.mubr.bf16.gmra.mxu0 %v4685
        %v5021 = vpop.f32.mrf.mxu0
        %v5022 = vadd.f32 %v4740, %v5021
        %v5023 = vpop.f32.mrf.mxu0
        %v5024 = vadd.f32 %v4744, %v5023
        %v5025 = vpop.f32.mrf.mxu0
        %v5026 = vadd.f32 %v4740, %v5025
        %v5027 = vpop.f32.mrf.mxu0
        %v5028 = vadd.f32 %v4744, %v5027
        %5029 = vmatprep.mubr.bf16.mxu0 %v4688
        %5030 = vmatmul.mubr.bf16.gmra.mxu0 %v4687
        %v5031 = vpop.f32.mrf.mxu0
        %v5032 = vadd.f32 %v4740, %v5031
        %v5033 = vpop.f32.mrf.mxu0
        %v5034 = vadd.f32 %v4744, %v5033
        %v5035 = vpop.f32.mrf.mxu0
        %v5036 = vadd.f32 %v4740, %v5035
        %v5037 = vpop.f32.mrf.mxu0
        %v5038 = vadd.f32 %v4744, %v5037
        %5039 = vmatprep.mubr.bf16.mxu0 %v4690
        %5040 = vmatmul.mubr.bf16.gmra.mxu0 %v4689
        %v5041 = vpop.f32.mrf.mxu0
        %v5042 = vadd.f32 %v4740, %v5041
        %v5043 = vpop.f32.mrf.mxu0
        %v5044 = vadd.f32 %v4744, %v5043
        %v5045 = vpop.f32.mrf.mxu0
        %v5046 = vadd.f32 %v4740, %v5045
        %v5047 = vpop.f32.mrf.mxu0
        %v5048 = vadd.f32 %v4744, %v5047
        %5049 = vmatprep.mubr.bf16.mxu0 %v4692
        %5050 = vmatmul.mubr.bf16.gmra.mxu0 %v4691
        %v5051 = vpop.f32.mrf.mxu0
        %v5052 = vadd.f32 %v4740, %v5051
        %v5053 = vpop.f32.mrf.mxu0
        %v5054 = vadd.f32 %v4744, %v5053
        %v5055 = vpop.f32.mrf.mxu0
        %v5056 = vadd.f32 %v4740, %v5055
        %v5057 = vpop.f32.mrf.mxu0
        %v5058 = vadd.f32 %v4744, %v5057
        %5059 = vmatprep.mubr.bf16.mxu0 %v4694
        %5060 = vmatmul.mubr.bf16.gmra.mxu0 %v4693
        %v5061 = vpop.f32.mrf.mxu0
        %v5062 = vadd.f32 %v4740, %v5061
        %v5063 = vpop.f32.mrf.mxu0
        %v5064 = vadd.f32 %v4744, %v5063
        %v5065 = vpop.f32.mrf.mxu0
        %v5066 = vadd.f32 %v4740, %v5065
        %v5067 = vpop.f32.mrf.mxu0
        %v5068 = vadd.f32 %v4744, %v5067
        %5069 = vmatprep.mubr.bf16.mxu0 %v4696
        %5070 = vmatmul.mubr.bf16.gmra.mxu0 %v4695
        %v5071 = vpop.f32.mrf.mxu0
        %v5072 = vadd.f32 %v4740, %v5071
        %v5073 = vpop.f32.mrf.mxu0
        %v5074 = vadd.f32 %v4744, %v5073
        %v5075 = vpop.f32.mrf.mxu0
        %v5076 = vadd.f32 %v4740, %v5075
        %v5077 = vpop.f32.mrf.mxu0
        %v5078 = vadd.f32 %v4744, %v5077
        %5079 = vmatprep.mubr.bf16.mxu0 %v4698
        %5080 = vmatmul.mubr.bf16.gmra.mxu0 %v4697
        %v5081 = vpop.f32.mrf.mxu0
        %v5082 = vadd.f32 %v4740, %v5081
        %v5083 = vpop.f32.mrf.mxu0
        %v5084 = vadd.f32 %v4744, %v5083
        %v5085 = vpop.f32.mrf.mxu0
        %v5086 = vadd.f32 %v4740, %v5085
        %v5087 = vpop.f32.mrf.mxu0
        %v5088 = vadd.f32 %v4744, %v5087
        %5089 = vmatprep.mubr.bf16.mxu0 %v4700
        %5090 = vmatmul.mubr.bf16.gmra.mxu0 %v4699
        %v5091 = vpop.f32.mrf.mxu0
        %v5092 = vadd.f32 %v4740, %v5091
        %v5093 = vpop.f32.mrf.mxu0
        %v5094 = vadd.f32 %v4744, %v5093
        %v5095 = vpop.f32.mrf.mxu0
        %v5096 = vadd.f32 %v4740, %v5095
        %v5097 = vpop.f32.mrf.mxu0
        %v5098 = vadd.f32 %v4744, %v5097
        %5099 = vdwg.mxu0
        %v5100 = vmax.f32 %v4942, 0.0
        %v5101 = vmax.f32 %v4944, 0.0
        %v5102 = vmax.f32 %v4946, 0.0
        %v5103 = vmax.f32 %v4948, 0.0
        %v5104 = vmax.f32 %v4952, 0.0
        %v5105 = vmax.f32 %v4954, 0.0
        %v5106 = vmax.f32 %v4956, 0.0
        %v5107 = vmax.f32 %v4958, 0.0
        %v5108 = vmax.f32 %v4962, 0.0
        %v5109 = vmax.f32 %v4964, 0.0
        %v5110 = vmax.f32 %v4966, 0.0
        %v5111 = vmax.f32 %v4968, 0.0
        %v5112 = vmax.f32 %v4972, 0.0
        %v5113 = vmax.f32 %v4974, 0.0
        %v5114 = vmax.f32 %v4976, 0.0
        %v5115 = vmax.f32 %v4978, 0.0
        %v5116 = vmax.f32 %v4982, 0.0
        %v5117 = vmax.f32 %v4984, 0.0
        %v5118 = vmax.f32 %v4986, 0.0
        %v5119 = vmax.f32 %v4988, 0.0
        %v5120 = vmax.f32 %v4992, 0.0
        %v5121 = vmax.f32 %v4994, 0.0
        %v5122 = vmax.f32 %v4996, 0.0
        %v5123 = vmax.f32 %v4998, 0.0
        %v5124 = vmax.f32 %v5002, 0.0
        %v5125 = vmax.f32 %v5004, 0.0
        %v5126 = vmax.f32 %v5006, 0.0
        %v5127 = vmax.f32 %v5008, 0.0
        %v5128 = vmax.f32 %v5012, 0.0
        %v5129 = vmax.f32 %v5014, 0.0
        %v5130 = vmax.f32 %v5016, 0.0
        %v5131 = vmax.f32 %v5018, 0.0
        %v5132 = vmax.f32 %v5022, 0.0
        %v5133 = vmax.f32 %v5024, 0.0
        %v5134 = vmax.f32 %v5026, 0.0
        %v5135 = vmax.f32 %v5028, 0.0
        %v5136 = vmax.f32 %v5032, 0.0
        %v5137 = vmax.f32 %v5034, 0.0
        %v5138 = vmax.f32 %v5036, 0.0
        %v5139 = vmax.f32 %v5038, 0.0
        %v5140 = vmax.f32 %v5042, 0.0
        %v5141 = vmax.f32 %v5044, 0.0
        %v5142 = vmax.f32 %v5046, 0.0
        %v5143 = vmax.f32 %v5048, 0.0
        %v5144 = vmax.f32 %v5052, 0.0
        %v5145 = vmax.f32 %v5054, 0.0
        %v5146 = vmax.f32 %v5056, 0.0
        %v5147 = vmax.f32 %v5058, 0.0
        %v5148 = vmax.f32 %v5062, 0.0
        %v5149 = vmax.f32 %v5064, 0.0
        %v5150 = vmax.f32 %v5066, 0.0
        %v5151 = vmax.f32 %v5068, 0.0
        %v5152 = vmax.f32 %v5072, 0.0
        %v5153 = vmax.f32 %v5074, 0.0
        %v5154 = vmax.f32 %v5076, 0.0
        %v5155 = vmax.f32 %v5078, 0.0
        %v5156 = vmax.f32 %v5082, 0.0
        %v5157 = vmax.f32 %v5084, 0.0
        %v5158 = vmax.f32 %v5086, 0.0
        %v5159 = vmax.f32 %v5088, 0.0
        %v5160 = vmax.f32 %v5092, 0.0
        %v5161 = vmax.f32 %v5094, 0.0
        %v5162 = vmax.f32 %v5096, 0.0
        %v5163 = vmax.f32 %v5098, 0.0
        %v5164 = vpack.c.bf16 %v5102, %v5100
        %v5165 = vpack.c.bf16 %v5103, %v5101
        %v5166 = vpack.c.bf16 %v5106, %v5104
        %v5167 = vpack.c.bf16 %v5107, %v5105
        %v5168 = vpack.c.bf16 %v5110, %v5108
        %v5169 = vpack.c.bf16 %v5111, %v5109
        %v5170 = vpack.c.bf16 %v5114, %v5112
        %v5171 = vpack.c.bf16 %v5115, %v5113
        %v5172 = vpack.c.bf16 %v5118, %v5116
        %v5173 = vpack.c.bf16 %v5119, %v5117
        %v5174 = vpack.c.bf16 %v5122, %v5120
        %v5175 = vpack.c.bf16 %v5123, %v5121
        %v5176 = vpack.c.bf16 %v5126, %v5124
        %v5177 = vpack.c.bf16 %v5127, %v5125
        %v5178 = vpack.c.bf16 %v5130, %v5128
        %v5179 = vpack.c.bf16 %v5131, %v5129
        %v5180 = vpack.c.bf16 %v5134, %v5132
        %v5181 = vpack.c.bf16 %v5135, %v5133
        %v5182 = vpack.c.bf16 %v5138, %v5136
        %v5183 = vpack.c.bf16 %v5139, %v5137
        %v5184 = vpack.c.bf16 %v5142, %v5140
        %v5185 = vpack.c.bf16 %v5143, %v5141
        %v5186 = vpack.c.bf16 %v5146, %v5144
        %v5187 = vpack.c.bf16 %v5147, %v5145
        %v5188 = vpack.c.bf16 %v5150, %v5148
        %v5189 = vpack.c.bf16 %v5151, %v5149
        %v5190 = vpack.c.bf16 %v5154, %v5152
        %v5191 = vpack.c.bf16 %v5155, %v5153
        %v5192 = vpack.c.bf16 %v5158, %v5156
        %v5193 = vpack.c.bf16 %v5159, %v5157
        %v5194 = vpack.c.bf16 %v5162, %v5160
        %v5195 = vpack.c.bf16 %v5163, %v5161
        %v5196 = vld [vmem:[%s5] sm:$0xf]
        %v5197 = vld [vmem:[%s5 + $0x4] sm:$0xf]
        %v5198 = vld [vmem:[%s5 + $0x8] sm:$0xf]
        %v5199 = vld [vmem:[%s5 + $0xc] sm:$0xf]
        %v5200 = vld [vmem:[%s5 + $0x10] sm:$0xf]
        %v5201 = vld [vmem:[%s5 + $0x14] sm:$0xf]
        %v5202 = vld [vmem:[%s5 + $0x18] sm:$0xf]
        %v5203 = vld [vmem:[%s5 + $0x1c] sm:$0xf]
        %v5204 = vld [vmem:[%s5 + $0x20] sm:$0xf]
        %v5205 = vld [vmem:[%s5 + $0x24] sm:$0xf]
        %v5206 = vld [vmem:[%s5 + $0x28] sm:$0xf]
        %v5207 = vld [vmem:[%s5 + $0x2c] sm:$0xf]
        %v5208 = vld [vmem:[%s5 + $0x30] sm:$0xf]
        %v5209 = vld [vmem:[%s5 + $0x34] sm:$0xf]
        %v5210 = vld [vmem:[%s5 + $0x38] sm:$0xf]
        %v5211 = vld [vmem:[%s5 + $0x3c] sm:$0xf]
        %v5212 = vld [vmem:[%s5 + $0x40] sm:$0xf]
        %v5213 = vld [vmem:[%s5 + $0x44] sm:$0xf]
        %v5214 = vld [vmem:[%s5 + $0x48] sm:$0xf]
        %v5215 = vld [vmem:[%s5 + $0x4c] sm:$0xf]
        %v5216 = vld [vmem:[%s5 + $0x50] sm:$0xf]
        %v5217 = vld [vmem:[%s5 + $0x54] sm:$0xf]
        %v5218 = vld [vmem:[%s5 + $0x58] sm:$0xf]
        %v5219 = vld [vmem:[%s5 + $0x5c] sm:$0xf]
        %v5220 = vld [vmem:[%s5 + $0x60] sm:$0xf]
        %v5221 = vld [vmem:[%s5 + $0x64] sm:$0xf]
        %v5222 = vld [vmem:[%s5 + $0x68] sm:$0xf]
        %v5223 = vld [vmem:[%s5 + $0x6c] sm:$0xf]
        %v5224 = vld [vmem:[%s5 + $0x70] sm:$0xf]
        %v5225 = vld [vmem:[%s5 + $0x74] sm:$0xf]
        %v5226 = vld [vmem:[%s5 + $0x78] sm:$0xf]
        %v5227 = vld [vmem:[%s5 + $0x7c] sm:$0xf]
        %v5228 = vld [vmem:[%s6] sm:$0x1]
        %v5230 = vlaneseq
        %v5231 = vshrl.u32 %v5230, 7
        %v5232 = vsub.s32 0, %v5231
        %v5233 = vrot.slane %v5228, %v5232
        %v5267 = vunpack.c.l.b16 %v5196
        %v5268 = vunpack.c.l.b16 %v5197
        %v5269 = vunpack.c.l.b16 %v5198
        %v5270 = vunpack.c.l.b16 %v5199
        %v5271 = vunpack.c.l.b16 %v5200
        %v5272 = vunpack.c.l.b16 %v5201
        %v5273 = vunpack.c.l.b16 %v5202
        %v5274 = vunpack.c.l.b16 %v5203
        %v5275 = vunpack.c.l.b16 %v5204
        %v5276 = vunpack.c.l.b16 %v5205
        %v5277 = vunpack.c.l.b16 %v5206
        %v5278 = vunpack.c.l.b16 %v5207
        %v5279 = vunpack.c.l.b16 %v5208
        %v5280 = vunpack.c.l.b16 %v5209
        %v5281 = vunpack.c.l.b16 %v5210
        %v5282 = vunpack.c.l.b16 %v5211
        %v5283 = vunpack.c.l.b16 %v5212
        %v5284 = vunpack.c.l.b16 %v5213
        %v5285 = vunpack.c.l.b16 %v5214
        %v5286 = vunpack.c.l.b16 %v5215
        %v5287 = vunpack.c.l.b16 %v5216
        %v5288 = vunpack.c.l.b16 %v5217
        %v5289 = vunpack.c.l.b16 %v5218
        %v5290 = vunpack.c.l.b16 %v5219
        %v5291 = vunpack.c.l.b16 %v5220
        %v5292 = vunpack.c.l.b16 %v5221
        %v5293 = vunpack.c.l.b16 %v5222
        %v5294 = vunpack.c.l.b16 %v5223
        %v5295 = vunpack.c.l.b16 %v5224
        %v5296 = vunpack.c.l.b16 %v5225
        %v5297 = vunpack.c.l.b16 %v5226
        %v5298 = vunpack.c.l.b16 %v5227
        %v5299 = vpack.c.b16 %v5268, %v5267
        %v5300 = vpack.c.b16 %v5270, %v5269
        %v5301 = vpack.c.b16 %v5272, %v5271
        %v5302 = vpack.c.b16 %v5274, %v5273
        %v5303 = vpack.c.b16 %v5276, %v5275
        %v5304 = vpack.c.b16 %v5278, %v5277
        %v5305 = vpack.c.b16 %v5280, %v5279
        %v5306 = vpack.c.b16 %v5282, %v5281
        %v5307 = vpack.c.b16 %v5284, %v5283
        %v5308 = vpack.c.b16 %v5286, %v5285
        %v5309 = vpack.c.b16 %v5288, %v5287
        %v5310 = vpack.c.b16 %v5290, %v5289
        %v5311 = vpack.c.b16 %v5292, %v5291
        %v5312 = vpack.c.b16 %v5294, %v5293
        %v5313 = vpack.c.b16 %v5296, %v5295
        %v5314 = vpack.c.b16 %v5298, %v5297
        %5331 = vmatprep.subr.bf16.mxu0 0
        %5332 = vmatpush1.bf16.msra.mxu0 %v5306
        %5333 = vmatprep.subr.bf16.mxu0 0
        %5334 = vmatpush1.bf16.msra.mxu0 %v5305
        %5335 = vmatprep.subr.bf16.mxu0 0
        %5336 = vmatpush1.bf16.msra.mxu0 %v5304
        %5337 = vmatprep.subr.bf16.mxu0 0
        %5338 = vmatpush1.bf16.msra.mxu0 %v5303
        %5339 = vmatprep.subr.bf16.mxu0 0
        %5340 = vmatpush1.bf16.msra.mxu0 %v5302
        %5341 = vmatprep.subr.bf16.mxu0 0
        %5342 = vmatpush1.bf16.msra.mxu0 %v5301
        %5343 = vmatprep.subr.bf16.mxu0 0
        %5344 = vmatpush1.bf16.msra.mxu0 %v5300
        %5345 = vmatprep.subr.bf16.mxu0 0
        %5346 = vmatpush1.bf16.msra.mxu0 %v5299
        %5347 = vmatprep.subr.bf16.mxu0 0
        %5348 = vmatpush2.bf16.msra.mxu0 %v5314
        %5349 = vmatprep.subr.bf16.mxu0 0
        %5350 = vmatpush2.bf16.msra.mxu0 %v5313
        %5351 = vmatprep.subr.bf16.mxu0 0
        %5352 = vmatpush2.bf16.msra.mxu0 %v5312
        %5353 = vmatprep.subr.bf16.mxu0 0
        %5354 = vmatpush2.bf16.msra.mxu0 %v5311
        %5355 = vmatprep.subr.bf16.mxu0 0
        %5356 = vmatpush2.bf16.msra.mxu0 %v5310
        %5357 = vmatprep.subr.bf16.mxu0 0
        %5358 = vmatpush2.bf16.msra.mxu0 %v5309
        %5359 = vmatprep.subr.bf16.mxu0 0
        %5360 = vmatpush2.bf16.msra.mxu0 %v5308
        %5361 = vmatprep.subr.bf16.mxu0 0
        %5362 = vmatpush2.bf16.msra.mxu0 %v5307
        %5363 = vmatprep.mubr.bf16.mxu0 %v5165
        %5364 = vmatmul.mubr.bf16.gmra.mxu0 %v5164
        %v5365 = vpop.f32.mrf.mxu0
        %v5366 = vadd.f32 %v5233, %v5365
        %v5367 = vpop.f32.mrf.mxu0
        %v5368 = vpop.f32.mrf.mxu0
        %v5369 = vadd.f32 %v5233, %v5368
        %v5370 = vpop.f32.mrf.mxu0
        %5371 = vmatprep.mubr.bf16.mxu0 %v5167
        %5372 = vmatmul.mubr.bf16.gmra.mxu0 %v5166
        %v5373 = vpop.f32.mrf.mxu0
        %v5374 = vadd.f32 %v5233, %v5373
        %v5375 = vpop.f32.mrf.mxu0
        %v5376 = vpop.f32.mrf.mxu0
        %v5377 = vadd.f32 %v5233, %v5376
        %v5378 = vpop.f32.mrf.mxu0
        %5379 = vmatprep.mubr.bf16.mxu0 %v5169
        %5380 = vmatmul.mubr.bf16.gmra.mxu0 %v5168
        %v5381 = vpop.f32.mrf.mxu0
        %v5382 = vadd.f32 %v5233, %v5381
        %v5383 = vpop.f32.mrf.mxu0
        %v5384 = vpop.f32.mrf.mxu0
        %v5385 = vadd.f32 %v5233, %v5384
        %v5386 = vpop.f32.mrf.mxu0
        %5387 = vmatprep.mubr.bf16.mxu0 %v5171
        %5388 = vmatmul.mubr.bf16.gmra.mxu0 %v5170
        %v5389 = vpop.f32.mrf.mxu0
        %v5390 = vadd.f32 %v5233, %v5389
        %v5391 = vpop.f32.mrf.mxu0
        %v5392 = vpop.f32.mrf.mxu0
        %v5393 = vadd.f32 %v5233, %v5392
        %v5394 = vpop.f32.mrf.mxu0
        %5395 = vmatprep.mubr.bf16.mxu0 %v5173
        %5396 = vmatmul.mubr.bf16.gmra.mxu0 %v5172
        %v5397 = vpop.f32.mrf.mxu0
        %v5398 = vadd.f32 %v5233, %v5397
        %v5399 = vpop.f32.mrf.mxu0
        %v5400 = vpop.f32.mrf.mxu0
        %v5401 = vadd.f32 %v5233, %v5400
        %v5402 = vpop.f32.mrf.mxu0
        %5403 = vmatprep.mubr.bf16.mxu0 %v5175
        %5404 = vmatmul.mubr.bf16.gmra.mxu0 %v5174
        %v5405 = vpop.f32.mrf.mxu0
        %v5406 = vadd.f32 %v5233, %v5405
        %v5407 = vpop.f32.mrf.mxu0
        %v5408 = vpop.f32.mrf.mxu0
        %v5409 = vadd.f32 %v5233, %v5408
        %v5410 = vpop.f32.mrf.mxu0
        %5411 = vmatprep.mubr.bf16.mxu0 %v5177
        %5412 = vmatmul.mubr.bf16.gmra.mxu0 %v5176
        %v5413 = vpop.f32.mrf.mxu0
        %v5414 = vadd.f32 %v5233, %v5413
        %v5415 = vpop.f32.mrf.mxu0
        %v5416 = vpop.f32.mrf.mxu0
        %v5417 = vadd.f32 %v5233, %v5416
        %v5418 = vpop.f32.mrf.mxu0
        %5419 = vmatprep.mubr.bf16.mxu0 %v5179
        %5420 = vmatmul.mubr.bf16.gmra.mxu0 %v5178
        %v5421 = vpop.f32.mrf.mxu0
        %v5422 = vadd.f32 %v5233, %v5421
        %v5423 = vpop.f32.mrf.mxu0
        %v5424 = vpop.f32.mrf.mxu0
        %v5425 = vadd.f32 %v5233, %v5424
        %v5426 = vpop.f32.mrf.mxu0
        %5427 = vmatprep.mubr.bf16.mxu0 %v5181
        %5428 = vmatmul.mubr.bf16.gmra.mxu0 %v5180
        %v5429 = vpop.f32.mrf.mxu0
        %v5430 = vadd.f32 %v5233, %v5429
        %v5431 = vpop.f32.mrf.mxu0
        %v5432 = vpop.f32.mrf.mxu0
        %v5433 = vadd.f32 %v5233, %v5432
        %v5434 = vpop.f32.mrf.mxu0
        %5435 = vmatprep.mubr.bf16.mxu0 %v5183
        %5436 = vmatmul.mubr.bf16.gmra.mxu0 %v5182
        %v5437 = vpop.f32.mrf.mxu0
        %v5438 = vadd.f32 %v5233, %v5437
        %v5439 = vpop.f32.mrf.mxu0
        %v5440 = vpop.f32.mrf.mxu0
        %v5441 = vadd.f32 %v5233, %v5440
        %v5442 = vpop.f32.mrf.mxu0
        %5443 = vmatprep.mubr.bf16.mxu0 %v5185
        %5444 = vmatmul.mubr.bf16.gmra.mxu0 %v5184
        %v5445 = vpop.f32.mrf.mxu0
        %v5446 = vadd.f32 %v5233, %v5445
        %v5447 = vpop.f32.mrf.mxu0
        %v5448 = vpop.f32.mrf.mxu0
        %v5449 = vadd.f32 %v5233, %v5448
        %v5450 = vpop.f32.mrf.mxu0
        %5451 = vmatprep.mubr.bf16.mxu0 %v5187
        %5452 = vmatmul.mubr.bf16.gmra.mxu0 %v5186
        %v5453 = vpop.f32.mrf.mxu0
        %v5454 = vadd.f32 %v5233, %v5453
        %v5455 = vpop.f32.mrf.mxu0
        %v5456 = vpop.f32.mrf.mxu0
        %v5457 = vadd.f32 %v5233, %v5456
        %v5458 = vpop.f32.mrf.mxu0
        %5459 = vmatprep.mubr.bf16.mxu0 %v5189
        %5460 = vmatmul.mubr.bf16.gmra.mxu0 %v5188
        %v5461 = vpop.f32.mrf.mxu0
        %v5462 = vadd.f32 %v5233, %v5461
        %v5463 = vpop.f32.mrf.mxu0
        %v5464 = vpop.f32.mrf.mxu0
        %v5465 = vadd.f32 %v5233, %v5464
        %v5466 = vpop.f32.mrf.mxu0
        %5467 = vmatprep.mubr.bf16.mxu0 %v5191
        %5468 = vmatmul.mubr.bf16.gmra.mxu0 %v5190
        %v5469 = vpop.f32.mrf.mxu0
        %v5470 = vadd.f32 %v5233, %v5469
        %v5471 = vpop.f32.mrf.mxu0
        %v5472 = vpop.f32.mrf.mxu0
        %v5473 = vadd.f32 %v5233, %v5472
        %v5474 = vpop.f32.mrf.mxu0
        %5475 = vmatprep.mubr.bf16.mxu0 %v5193
        %5476 = vmatmul.mubr.bf16.gmra.mxu0 %v5192
        %v5477 = vpop.f32.mrf.mxu0
        %v5478 = vadd.f32 %v5233, %v5477
        %v5479 = vpop.f32.mrf.mxu0
        %v5480 = vpop.f32.mrf.mxu0
        %v5481 = vadd.f32 %v5233, %v5480
        %v5482 = vpop.f32.mrf.mxu0
        %5483 = vmatprep.mubr.bf16.mxu0 %v5195
        %5484 = vmatmul.mubr.bf16.gmra.mxu0 %v5194
        %v5485 = vpop.f32.mrf.mxu0
        %v5486 = vadd.f32 %v5233, %v5485
        %v5487 = vpop.f32.mrf.mxu0
        %v5488 = vpop.f32.mrf.mxu0
        %v5489 = vadd.f32 %v5233, %v5488
        %v5490 = vpop.f32.mrf.mxu0
        %5491 = vdwg.mxu0
        %v5492 = vpack.c.bf16 %v5369, %v5366
        %v5493 = vpack.c.bf16 %v5377, %v5374
        %v5494 = vpack.c.bf16 %v5385, %v5382
        %v5495 = vpack.c.bf16 %v5393, %v5390
        %v5496 = vpack.c.bf16 %v5401, %v5398
        %v5497 = vpack.c.bf16 %v5409, %v5406
        %v5498 = vpack.c.bf16 %v5417, %v5414
        %v5499 = vpack.c.bf16 %v5425, %v5422
        %v5500 = vpack.c.bf16 %v5433, %v5430
        %v5501 = vpack.c.bf16 %v5441, %v5438
        %v5502 = vpack.c.bf16 %v5449, %v5446
        %v5503 = vpack.c.bf16 %v5457, %v5454
        %v5504 = vpack.c.bf16 %v5465, %v5462
        %v5505 = vpack.c.bf16 %v5473, %v5470
        %v5506 = vpack.c.bf16 %v5481, %v5478
        %v5507 = vpack.c.bf16 %v5489, %v5486
        %v5524 = vunpack.c.l.b16 %v5492
        %v5525 = vunpack.c.h.b16 %v5492
        %v5526 = vunpack.c.l.b16 %v5493
        %v5527 = vunpack.c.h.b16 %v5493
        %v5528 = vunpack.c.l.b16 %v5494
        %v5529 = vunpack.c.h.b16 %v5494
        %v5530 = vunpack.c.l.b16 %v5495
        %v5531 = vunpack.c.h.b16 %v5495
        %v5532 = vunpack.c.l.b16 %v5496
        %v5533 = vunpack.c.h.b16 %v5496
        %v5534 = vunpack.c.l.b16 %v5497
        %v5535 = vunpack.c.h.b16 %v5497
        %v5536 = vunpack.c.l.b16 %v5498
        %v5537 = vunpack.c.h.b16 %v5498
        %v5538 = vunpack.c.l.b16 %v5499
        %v5539 = vunpack.c.h.b16 %v5499
        %v5540 = vunpack.c.l.b16 %v5500
        %v5541 = vunpack.c.h.b16 %v5500
        %v5542 = vunpack.c.l.b16 %v5501
        %v5543 = vunpack.c.h.b16 %v5501
        %v5544 = vunpack.c.l.b16 %v5502
        %v5545 = vunpack.c.h.b16 %v5502
        %v5546 = vunpack.c.l.b16 %v5503
        %v5547 = vunpack.c.h.b16 %v5503
        %v5548 = vunpack.c.l.b16 %v5504
        %v5549 = vunpack.c.h.b16 %v5504
        %v5550 = vunpack.c.l.b16 %v5505
        %v5551 = vunpack.c.h.b16 %v5505
        %v5552 = vunpack.c.l.b16 %v5506
        %v5553 = vunpack.c.h.b16 %v5506
        %v5554 = vunpack.c.l.b16 %v5507
        %v5555 = vunpack.c.h.b16 %v5507
        %v5556 = vpack.c.b16 %v5524, %v5524
        %v5557 = vpack.c.b16 %v5525, %v5525
        %v5558 = vpack.c.b16 %v5526, %v5526
        %v5559 = vpack.c.b16 %v5527, %v5527
        %v5560 = vpack.c.b16 %v5528, %v5528
        %v5561 = vpack.c.b16 %v5529, %v5529
        %v5562 = vpack.c.b16 %v5530, %v5530
        %v5563 = vpack.c.b16 %v5531, %v5531
        %v5564 = vpack.c.b16 %v5532, %v5532
        %v5565 = vpack.c.b16 %v5533, %v5533
        %v5566 = vpack.c.b16 %v5534, %v5534
        %v5567 = vpack.c.b16 %v5535, %v5535
        %v5568 = vpack.c.b16 %v5536, %v5536
        %v5569 = vpack.c.b16 %v5537, %v5537
        %v5570 = vpack.c.b16 %v5538, %v5538
        %v5571 = vpack.c.b16 %v5539, %v5539
        %v5572 = vpack.c.b16 %v5540, %v5540
        %v5573 = vpack.c.b16 %v5541, %v5541
        %v5574 = vpack.c.b16 %v5542, %v5542
        %v5575 = vpack.c.b16 %v5543, %v5543
        %v5576 = vpack.c.b16 %v5544, %v5544
        %v5577 = vpack.c.b16 %v5545, %v5545
        %v5578 = vpack.c.b16 %v5546, %v5546
        %v5579 = vpack.c.b16 %v5547, %v5547
        %v5580 = vpack.c.b16 %v5548, %v5548
        %v5581 = vpack.c.b16 %v5549, %v5549
        %v5582 = vpack.c.b16 %v5550, %v5550
        %v5583 = vpack.c.b16 %v5551, %v5551
        %v5584 = vpack.c.b16 %v5552, %v5552
        %v5585 = vpack.c.b16 %v5553, %v5553
        %v5586 = vpack.c.b16 %v5554, %v5554
        %v5587 = vpack.c.b16 %v5555, %v5555
        %5620 = vst [vmem:[%s287] sm:$0xf] %v5556
        %5621 = vst [vmem:[%s287 + $0x4] sm:$0xf] %v5557
        %5622 = vst [vmem:[%s287 + $0x8] sm:$0xf] %v5558
        %5623 = vst [vmem:[%s287 + $0xc] sm:$0xf] %v5559
        %5624 = vst [vmem:[%s287 + $0x10] sm:$0xf] %v5560
        %5625 = vst [vmem:[%s287 + $0x14] sm:$0xf] %v5561
        %5626 = vst [vmem:[%s287 + $0x18] sm:$0xf] %v5562
        %5627 = vst [vmem:[%s287 + $0x1c] sm:$0xf] %v5563
        %5628 = vst [vmem:[%s287 + $0x20] sm:$0xf] %v5564
        %5629 = vst [vmem:[%s287 + $0x24] sm:$0xf] %v5565
        %5630 = vst [vmem:[%s287 + $0x28] sm:$0xf] %v5566
        %5631 = vst [vmem:[%s287 + $0x2c] sm:$0xf] %v5567
        %5632 = vst [vmem:[%s287 + $0x30] sm:$0xf] %v5568
        %5633 = vst [vmem:[%s287 + $0x34] sm:$0xf] %v5569
        %5634 = vst [vmem:[%s287 + $0x38] sm:$0xf] %v5570
        %5635 = vst [vmem:[%s287 + $0x3c] sm:$0xf] %v5571
        %5636 = vst [vmem:[%s287 + $0x40] sm:$0xf] %v5572
        %5637 = vst [vmem:[%s287 + $0x44] sm:$0xf] %v5573
        %5638 = vst [vmem:[%s287 + $0x48] sm:$0xf] %v5574
        %5639 = vst [vmem:[%s287 + $0x4c] sm:$0xf] %v5575
        %5640 = vst [vmem:[%s287 + $0x50] sm:$0xf] %v5576
        %5641 = vst [vmem:[%s287 + $0x54] sm:$0xf] %v5577
        %5642 = vst [vmem:[%s287 + $0x58] sm:$0xf] %v5578
        %5643 = vst [vmem:[%s287 + $0x5c] sm:$0xf] %v5579
        %5644 = vst [vmem:[%s287 + $0x60] sm:$0xf] %v5580
        %5645 = vst [vmem:[%s287 + $0x64] sm:$0xf] %v5581
        %5646 = vst [vmem:[%s287 + $0x68] sm:$0xf] %v5582
        %5647 = vst [vmem:[%s287 + $0x6c] sm:$0xf] %v5583
        %5648 = vst [vmem:[%s287 + $0x70] sm:$0xf] %v5584
        %5649 = vst [vmem:[%s287 + $0x74] sm:$0xf] %v5585
        %5650 = vst [vmem:[%s287 + $0x78] sm:$0xf] %v5586
        %5651 = vst [vmem:[%s287 + $0x7c] sm:$0xf] %v5587
        %s5652 = sand.u32 %s182, 1
        %s5653 = scalar_lea.sflag [#allocation4], %s5652
        %s5654 = sand.u32 %s182, 1
        %s5655 = smul.addr %s5654, 128
        %s5656 = scalar_lea.vmem [#allocation5], %s5655
        // Predicated region
        $region53: #{tpu_custom_call.1} parent=47 // pred_check
          %p5657 = pneg %p192
        $region54: #{tpu_custom_call.1} parent=47 // pred_check_branch
          %5659 = sbr.rel (%p5657) target = $region56
        $region55: #{tpu_custom_call.1} parent=47 // pred_region
          %s5660 = smul.u32 32, %s22
          %s5662 = ssub.s32 2048, 2048
          %5663 = vsyncadd %s5653, %s5662
          %s5664 = smul.addr %s5660, 64
          %s5665 = scalar_lea.hbm %s7, %s5664
          %s5666 = sshll.u32 %s5656, 4
          %s5667 = int_to_ptr.vmem [resolvable:$true] %s5666
          %5672 = dma.vmem_to_hbm [thread:$0]  %s5667, 2048, %s5665, %s5653, 64, 64, 4
        $region56: #{tpu_custom_call.1} parent=47 // pred_fallthru
          _
      $region48: #{tpu_custom_call.1} parent=5 // pred_fallthru
        _
      %p5673 = scmp.le.s32.totalorder 2, %s17
      // Predicated region
      $region57: #{tpu_custom_call.1} parent=5 // pred_check
        %p5674 = pneg %p5673
      $region58: #{tpu_custom_call.1} parent=5 // pred_check_branch
        %5676 = sbr.rel (%p5674) target = $region60
      $region59: #{tpu_custom_call.1} parent=5 // pred_region
        %s5677 = ssub.s32 %s17, 2
        // Predicated region
        $region61: #{tpu_custom_call.1} parent=59 // pred_check
          %p5678 = pneg %p198
        $region62: #{tpu_custom_call.1} parent=59 // pred_check_branch
          %5680 = sbr.rel (%p5678) target = $region64
        $region63: #{tpu_custom_call.1} parent=59 // pred_region
          %s5681 = sand.u32 %s183, 1
          %s5682 = scalar_lea.sflag [#allocation4], %s5681
          %s5683 = sand.u32 %s183, 1
          %s5684 = smul.addr %s5683, 128
          %s5685 = scalar_lea.vmem [#allocation5], %s5684
          %5686 = dma.done %s5682, 2048
        $region64: #{tpu_custom_call.1} parent=59 // pred_fallthru
          _
      $region60: #{tpu_custom_call.1} parent=5 // pred_fallthru
        _
    $region6: #{tpu_custom_call.1} parent=1 // loop_footer
      %s21 = sadd.s32 1, %s17
    $region7: #{tpu_custom_call.1} parent=1 // loop_footer_branch
      %16 = sbr.rel target = $region3
    $region8: #{tpu_custom_call.1} parent=1 // loop_exit
      _
    %5687 = vsyncpa [#allocation3], 1
    %s5688 = scalar_lea.sflag [#allocation3], 1
    %5689 = vsyncpa %s5688, 1
    %5690 = vsyncpa [#allocation4], 1
    %s5691 = scalar_lea.sflag [#allocation4], 1
    %5692 = vsyncpa %s5691, 1

</llo_original>
